<compile_context>
chip_gen: v6e
topology: v6e:2x2x1
jax: 0.10.0
libtpu: 0.0.40
codegen_flags: <defaults>
</compile_context>

<pallas_src>
import functools
import math

import jax
import jax.numpy as jnp
import numpy as np
from jax.experimental import pallas as pl
from jax.experimental.pallas import tpu as pltpu

_LN_EPS = 1e-5  # torch nn.LayerNorm default


def _layer_norm(x, gamma, beta):
    mu = jnp.mean(x, axis=-1, keepdims=True)
    var = jnp.mean(jnp.square(x - mu), axis=-1, keepdims=True)
    return (x - mu) * jax.lax.rsqrt(var + _LN_EPS) * gamma + beta


def _encoder_layer_kernel(
    src_q_ref, src_kv_ref,
    wq_ref, bq_ref, wk_ref, bk_ref, wv_ref, bv_ref, wo_ref, bo_ref,
    ln1_g_ref, ln1_b_ref,
    w1_ref, b1_ref, w2_ref, b2_ref,
    ln2_g_ref, ln2_b_ref,
    out_ref,
    acc_ref,
    *, n_heads):
  """One (batch, q-tile) grid step of the fused EncoderLayer forward."""
  x_q = src_q_ref[0]      # (TQ, H)  query rows + residual path (native dtype)
  x_kv = src_kv_ref[0]    # (L,  H)  full sequence for K/V

  # ---- multi-head self-attention (scale pre-folded into wq/bq) -------------
  acc_ref[...] = jnp.zeros_like(acc_ref)
  for h in range(n_heads):                       # static unroll; no lane slicing
    qh = jnp.dot(x_q, wq_ref[h], preferred_element_type=jnp.float32) + bq_ref[h]   # (TQ, hd)
    kh = jnp.dot(x_kv, wk_ref[h], preferred_element_type=jnp.float32) + bk_ref[h]  # (L, hd)
    vh = jnp.dot(x_kv, wv_ref[h], preferred_element_type=jnp.float32) + bv_ref[h]  # (L, hd)

    # scores = qh @ kh^T via NT dot_general (no explicit transpose op)
    s = jax.lax.dot_general(qh, kh, (((1,), (1,)), ((), ())),
                            preferred_element_type=jnp.float32)     # (TQ, L)

    # numerically stable softmax; one reciprocal per row, broadcast multiply
    m = jnp.max(s, axis=-1, keepdims=True)
    p = jnp.exp(s - m)
    denom = jnp.sum(p, axis=-1, keepdims=True)
    attn = p * pl.reciprocal(denom, approx=False)
    # TODO(synk): dropout on the attention weights is identity (eval mode);
    # torch RNG cannot be reproduced in-kernel.

    ctx = jnp.dot(attn, vh, preferred_element_type=jnp.float32)     # (TQ, hd)
    # output projection accumulated per head (replaces concat + (H,H) matmul)
    acc_ref[...] += jnp.dot(ctx, wo_ref[h], preferred_element_type=jnp.float32)

  attn_out = acc_ref[...] + bo_ref[0]            # (TQ, H) f32

  # ---- residual + LayerNorm 1 ----------------------------------------------
  h1 = x_q.astype(jnp.float32) + attn_out
  h1 = _layer_norm(h1, ln1_g_ref[0], ln1_b_ref[0])

  # ---- position-wise feed-forward ------------------------------------------
  f = jnp.dot(h1, w1_ref[...], preferred_element_type=jnp.float32) + b1_ref[0]
  f = jnp.maximum(f, 0.0)
  f = jnp.dot(f, w2_ref[...], preferred_element_type=jnp.float32) + b2_ref[0]
  # TODO(synk): encoder dropouts are identity (eval mode).

  # ---- residual + LayerNorm 2 ----------------------------------------------
  h2 = _layer_norm(h1 + f, ln2_g_ref[0], ln2_b_ref[0])
  out_ref[0] = h2.astype(out_ref.dtype)


def _pick_q_tile(seq_len, cap=256):
  """Largest divisor of seq_len <= cap that keeps (8,128)-valid blocks."""
  tq = min(seq_len, cap)
  while seq_len % tq:
    tq -= 1
  if tq != seq_len and tq % 8:
    tq = seq_len
  return tq


def encoder_layer(src, params, *, n_heads, q_tile=None):
  """src: (B, L, H) -> (B, L, H), fused EncoderLayer forward (eval mode)."""
  B, L, H = src.shape
  assert H % n_heads == 0
  hd = H // n_heads
  pf = params["w1"].shape[0]
  inv_scale = 1.0 / math.sqrt(hd)

  # torch Linear stores (out, in); y = x @ W.T + b.  Split the *output*
  # features per head so the kernel indexes heads on the leading axis only.
  def split_out_heads(w):                       # (H, H) -> (nH, H, hd)
    return jnp.transpose(w.T.reshape(H, n_heads, hd), (1, 0, 2))

  wq3 = split_out_heads(params["wq"]) * inv_scale      # fold 1/sqrt(hd)
  bq3 = (params["bq"] * inv_scale).reshape(n_heads, 1, hd)
  wk3 = split_out_heads(params["wk"])
  bk3 = params["bk"].reshape(n_heads, 1, hd)
  wv3 = split_out_heads(params["wv"])
  bv3 = params["bv"].reshape(n_heads, 1, hd)
  wo3 = params["wo"].T.reshape(n_heads, hd, H)         # (nH, hd, H)
  bo = params["bo"].reshape(1, H)

  w1_t = params["w1"].T                                # (H, PF)
  b1 = params["b1"].reshape(1, pf)
  w2_t = params["w2"].T                                # (PF, H)
  b2 = params["b2"].reshape(1, H)
  g1 = params["ln1_g"].reshape(1, H)
  be1 = params["ln1_b"].reshape(1, H)
  g2 = params["ln2_g"].reshape(1, H)
  be2 = params["ln2_b"].reshape(1, H)

  tq = q_tile or _pick_q_tile(L)
  assert L % tq == 0
  nq = L // tq

  kernel = functools.partial(_encoder_layer_kernel, n_heads=n_heads)

  c2 = lambda b, qi: (0, 0)
  c3 = lambda b, qi: (0, 0, 0)
  in_specs = [
      pl.BlockSpec((1, tq, H), lambda b, qi: (b, qi, 0)),   # query / residual tile
      pl.BlockSpec((1, L, H), lambda b, qi: (b, 0, 0)),     # full sequence for K/V
      pl.BlockSpec((n_heads, H, hd), c3), pl.BlockSpec((n_heads, 1, hd), c3),  # fc_q
      pl.BlockSpec((n_heads, H, hd), c3), pl.BlockSpec((n_heads, 1, hd), c3),  # fc_k
      pl.BlockSpec((n_heads, H, hd), c3), pl.BlockSpec((n_heads, 1, hd), c3),  # fc_v
      pl.BlockSpec((n_heads, hd, H), c3), pl.BlockSpec((1, H), c2),            # fc_o
      pl.BlockSpec((1, H), c2), pl.BlockSpec((1, H), c2),                      # LN1
      pl.BlockSpec((H, pf), c2), pl.BlockSpec((1, pf), c2),                    # fc_1
      pl.BlockSpec((pf, H), c2), pl.BlockSpec((1, H), c2),                     # fc_2
      pl.BlockSpec((1, H), c2), pl.BlockSpec((1, H), c2),                      # LN2
  ]

  return pl.pallas_call(
      kernel,
      out_shape=jax.ShapeDtypeStruct((B, L, H), src.dtype),
      grid_spec=pltpu.PrefetchScalarGridSpec(
          num_scalar_prefetch=0,
          grid=(B, nq),
          in_specs=in_specs,
          out_specs=pl.BlockSpec((1, tq, H), lambda b, qi: (b, qi, 0)),
          scratch_shapes=[pltpu.VMEM((tq, H), jnp.float32)],   # ctx/out-proj accumulator
      ),
      compiler_params=pltpu.CompilerParams(
          dimension_semantics=("parallel", "parallel")),
  )(src, src,
    wq3, bq3, wk3, bk3, wv3, bv3, wo3, bo,
    g1, be1, w1_t, b1, w2_t, b2, g2, be2)


# ----------------------------- pure-JAX reference -----------------------------
def _reference(src, params, *, n_heads):
  B, L, H = src.shape
  hd = H // n_heads
  scale = math.sqrt(hd)

  def lin(x, w, b):
    return x @ w.T + b

  def ln(x, g, b):
    mu = x.mean(-1, keepdims=True)
    var = ((x - mu) ** 2).mean(-1, keepdims=True)
    return (x - mu) / jnp.sqrt(var + _LN_EPS) * g + b

  Q = lin(src, params["wq"], params["bq"]).reshape(B, L, n_heads, hd).transpose(0, 2, 1, 3)
  K = lin(src, params["wk"], params["bk"]).reshape(B, L, n_heads, hd).transpose(0, 2, 1, 3)
  V = lin(src, params["wv"], params["bv"]).reshape(B, L, n_heads, hd).transpose(0, 2, 1, 3)
  energy = jnp.einsum("bhqd,bhkd->bhqk", Q, K) / scale
  attn = jax.nn.softmax(energy, axis=-1)
  x = jnp.einsum("bhqk,bhkd->bhqd", attn, V).transpose(0, 2, 1, 3).reshape(B, L, H)
  x = lin(x, params["wo"], params["bo"])

  src1 = ln(src + x, params["ln1_g"], params["ln1_b"])
  f = jnp.maximum(lin(src1, params["w1"], params["b1"]), 0.0)
  f = lin(f, params["w2"], params["b2"])
  return ln(src1 + f, params["ln2_g"], params["ln2_b"])


def _init_params(key, hidden_dim, pf_dim):
  H, PF = hidden_dim, pf_dim
  ks = jax.random.split(key, 16)

  def u(k, shape, fan_in):
    bound = 1.0 / math.sqrt(fan_in)
    return jax.random.uniform(k, shape, jnp.float32, -bound, bound)

  return {
      "wq": u(ks[0], (H, H), H), "bq": u(ks[1], (H,), H),
      "wk": u(ks[2], (H, H), H), "bk": u(ks[3], (H,), H),
      "wv": u(ks[4], (H, H), H), "bv": u(ks[5], (H,), H),
      "wo": u(ks[6], (H, H), H), "bo": u(ks[7], (H,), H),
      "w1": u(ks[8], (PF, H), H), "b1": u(ks[9], (PF,), H),
      "w2": u(ks[10], (H, PF), PF), "b2": u(ks[11], (H,), PF),
      "ln1_g": 1.0 + 0.1 * jax.random.normal(ks[12], (H,), jnp.float32),
      "ln1_b": 0.1 * jax.random.normal(ks[13], (H,), jnp.float32),
      "ln2_g": 1.0 + 0.1 * jax.random.normal(ks[14], (H,), jnp.float32),
      "ln2_b": 0.1 * jax.random.normal(ks[15], (H,), jnp.float32),
  }


if __name__ == "__main__":
  B, L, H, NH, PF = 2, 8, 32, 4, 64

  root = jax.random.PRNGKey(0)
  kp, kx = jax.random.split(root)
  params = _init_params(kp, H, PF)
  src = jax.random.normal(kx, (B, L, H), jnp.float32)

  out = encoder_layer(src, params, n_heads=NH)
  jax.block_until_ready(out)

  ref = _reference(src, params, n_heads=NH)
  np.testing.assert_allclose(np.asarray(out), np.asarray(ref),
                             rtol=5e-4, atol=5e-4)
  print("KERNEL_OK")
</pallas_src>

<mosaic_0001>
module attributes {stable_mosaic.version = 11 : i64} {
  func.func @_encoder_layer_kernel(%arg0: i32, %arg1: i32, %arg2: memref<1x8x32xf32, #tpu.memory_space<vmem>>, %arg3: memref<1x8x32xf32, #tpu.memory_space<vmem>>, %arg4: memref<4x32x8xf32, #tpu.memory_space<vmem>>, %arg5: memref<4x1x8xf32, #tpu.memory_space<vmem>>, %arg6: memref<4x32x8xf32, #tpu.memory_space<vmem>>, %arg7: memref<4x1x8xf32, #tpu.memory_space<vmem>>, %arg8: memref<4x32x8xf32, #tpu.memory_space<vmem>>, %arg9: memref<4x1x8xf32, #tpu.memory_space<vmem>>, %arg10: memref<4x8x32xf32, #tpu.memory_space<vmem>>, %arg11: memref<1x32xf32, #tpu.memory_space<vmem>>, %arg12: memref<1x32xf32, #tpu.memory_space<vmem>>, %arg13: memref<1x32xf32, #tpu.memory_space<vmem>>, %arg14: memref<32x64xf32, #tpu.memory_space<vmem>>, %arg15: memref<1x64xf32, #tpu.memory_space<vmem>>, %arg16: memref<64x32xf32, #tpu.memory_space<vmem>>, %arg17: memref<1x32xf32, #tpu.memory_space<vmem>>, %arg18: memref<1x32xf32, #tpu.memory_space<vmem>>, %arg19: memref<1x32xf32, #tpu.memory_space<vmem>>, %arg20: memref<1x8x32xf32, #tpu.memory_space<vmem>>, %arg21: memref<8x32xf32, #tpu.memory_space<vmem>>) attributes {dimension_semantics = [#tpu.dimension_semantics<parallel>, #tpu.dimension_semantics<parallel>], iteration_bounds = array<i64: 2, 1>, scalar_prefetch = 0 : i64, scratch_operands = 1 : i64, tpu.core_type = #tpu.core_type<tc>, window_params = [{transform_indices = @transform_0, window_bounds = array<i64: 1, 8, 32>}, {transform_indices = @transform_1, window_bounds = array<i64: 1, 8, 32>}, {pipeline_mode = #tpu.pipeline_mode<synchronous>, transform_indices = @transform_2, window_bounds = array<i64: 4, 32, 8>}, {pipeline_mode = #tpu.pipeline_mode<synchronous>, transform_indices = @transform_3, window_bounds = array<i64: 4, 1, 8>}, {pipeline_mode = #tpu.pipeline_mode<synchronous>, transform_indices = @transform_4, window_bounds = array<i64: 4, 32, 8>}, {pipeline_mode = #tpu.pipeline_mode<synchronous>, transform_indices = @transform_5, window_bounds = array<i64: 4, 1, 8>}, {pipeline_mode = #tpu.pipeline_mode<synchronous>, transform_indices = @transform_6, window_bounds = array<i64: 4, 32, 8>}, {pipeline_mode = #tpu.pipeline_mode<synchronous>, transform_indices = @transform_7, window_bounds = array<i64: 4, 1, 8>}, {pipeline_mode = #tpu.pipeline_mode<synchronous>, transform_indices = @transform_8, window_bounds = array<i64: 4, 8, 32>}, {pipeline_mode = #tpu.pipeline_mode<synchronous>, transform_indices = @transform_9, window_bounds = array<i64: 1, 32>}, {pipeline_mode = #tpu.pipeline_mode<synchronous>, transform_indices = @transform_10, window_bounds = array<i64: 1, 32>}, {pipeline_mode = #tpu.pipeline_mode<synchronous>, transform_indices = @transform_11, window_bounds = array<i64: 1, 32>}, {pipeline_mode = #tpu.pipeline_mode<synchronous>, transform_indices = @transform_12, window_bounds = array<i64: 32, 64>}, {pipeline_mode = #tpu.pipeline_mode<synchronous>, transform_indices = @transform_13, window_bounds = array<i64: 1, 64>}, {pipeline_mode = #tpu.pipeline_mode<synchronous>, transform_indices = @transform_14, window_bounds = array<i64: 64, 32>}, {pipeline_mode = #tpu.pipeline_mode<synchronous>, transform_indices = @transform_15, window_bounds = array<i64: 1, 32>}, {pipeline_mode = #tpu.pipeline_mode<synchronous>, transform_indices = @transform_16, window_bounds = array<i64: 1, 32>}, {pipeline_mode = #tpu.pipeline_mode<synchronous>, transform_indices = @transform_17, window_bounds = array<i64: 1, 32>}, {transform_indices = @transform_18, window_bounds = array<i64: 1, 8, 32>}]} {
    %c0 = arith.constant 0 : index
    %c0_0 = arith.constant 0 : index
    %c0_1 = arith.constant 0 : index
    %0 = vector.load %arg2[%c0, %c0_0, %c0_1] : memref<1x8x32xf32, #tpu.memory_space<vmem>>, vector<1x8x32xf32>
    %1 = vector.shape_cast %0 : vector<1x8x32xf32> to vector<8x32xf32>
    %c0_2 = arith.constant 0 : index
    %c0_3 = arith.constant 0 : index
    %c0_4 = arith.constant 0 : index
    %2 = vector.load %arg3[%c0_2, %c0_3, %c0_4] : memref<1x8x32xf32, #tpu.memory_space<vmem>>, vector<1x8x32xf32>
    %3 = vector.shape_cast %2 : vector<1x8x32xf32> to vector<8x32xf32>
    %cst = arith.constant 0.000000e+00 : f32
    %4 = vector.broadcast %cst : f32 to vector<8x32xf32>
    %c0_5 = arith.constant 0 : index
    %c0_6 = arith.constant 0 : index
    %5 = vector.load %arg21[%c0_5, %c0_6] : memref<8x32xf32, #tpu.memory_space<vmem>>, vector<8x32xf32>
    tpu.vector_store %arg21[%c0_5, %c0_6], %4 {strides = array<i32>} : memref<8x32xf32, #tpu.memory_space<vmem>>, vector<8x32xf32>,
    %c0_7 = arith.constant 0 : index
    %c0_8 = arith.constant 0 : index
    %c0_9 = arith.constant 0 : index
    %6 = vector.load %arg4[%c0_7, %c0_8, %c0_9] : memref<4x32x8xf32, #tpu.memory_space<vmem>>, vector<1x32x8xf32>
    %7 = vector.shape_cast %6 : vector<1x32x8xf32> to vector<32x8xf32>
    %cst_10 = arith.constant dense<0.000000e+00> : vector<8x8xf32>
    %8 = tpu.matmul %1, %7, %cst_10 {dimension_numbers = #tpu.dot_dimension_numbers<[1], [0], [0], [1], [0, 0, 1, 1], [], []>} : vector<8x32xf32>, vector<32x8xf32>, vector<8x8xf32> -> vector<8x8xf32>
    %c0_11 = arith.constant 0 : index
    %c0_12 = arith.constant 0 : index
    %c0_13 = arith.constant 0 : index
    %9 = vector.load %arg5[%c0_11, %c0_12, %c0_13] : memref<4x1x8xf32, #tpu.memory_space<vmem>>, vector<1x1x8xf32>
    %10 = vector.shape_cast %9 : vector<1x1x8xf32> to vector<1x8xf32>
    %11 = vector.broadcast %10 : vector<1x8xf32> to vector<8x8xf32>
    %12 = arith.addf %8, %11 : vector<8x8xf32>
    %c0_14 = arith.constant 0 : index
    %c0_15 = arith.constant 0 : index
    %c0_16 = arith.constant 0 : index
    %13 = vector.load %arg6[%c0_14, %c0_15, %c0_16] : memref<4x32x8xf32, #tpu.memory_space<vmem>>, vector<1x32x8xf32>
    %14 = vector.shape_cast %13 : vector<1x32x8xf32> to vector<32x8xf32>
    %cst_17 = arith.constant dense<0.000000e+00> : vector<8x8xf32>
    %15 = tpu.matmul %3, %14, %cst_17 {dimension_numbers = #tpu.dot_dimension_numbers<[1], [0], [0], [1], [0, 0, 1, 1], [], []>} : vector<8x32xf32>, vector<32x8xf32>, vector<8x8xf32> -> vector<8x8xf32>
    %c0_18 = arith.constant 0 : index
    %c0_19 = arith.constant 0 : index
    %c0_20 = arith.constant 0 : index
    %16 = vector.load %arg7[%c0_18, %c0_19, %c0_20] : memref<4x1x8xf32, #tpu.memory_space<vmem>>, vector<1x1x8xf32>
    %17 = vector.shape_cast %16 : vector<1x1x8xf32> to vector<1x8xf32>
    %18 = vector.broadcast %17 : vector<1x8xf32> to vector<8x8xf32>
    %19 = arith.addf %15, %18 : vector<8x8xf32>
    %c0_21 = arith.constant 0 : index
    %c0_22 = arith.constant 0 : index
    %c0_23 = arith.constant 0 : index
    %20 = vector.load %arg8[%c0_21, %c0_22, %c0_23] : memref<4x32x8xf32, #tpu.memory_space<vmem>>, vector<1x32x8xf32>
    %21 = vector.shape_cast %20 : vector<1x32x8xf32> to vector<32x8xf32>
    %cst_24 = arith.constant dense<0.000000e+00> : vector<8x8xf32>
    %22 = tpu.matmul %3, %21, %cst_24 {dimension_numbers = #tpu.dot_dimension_numbers<[1], [0], [0], [1], [0, 0, 1, 1], [], []>} : vector<8x32xf32>, vector<32x8xf32>, vector<8x8xf32> -> vector<8x8xf32>
    %c0_25 = arith.constant 0 : index
    %c0_26 = arith.constant 0 : index
    %c0_27 = arith.constant 0 : index
    %23 = vector.load %arg9[%c0_25, %c0_26, %c0_27] : memref<4x1x8xf32, #tpu.memory_space<vmem>>, vector<1x1x8xf32>
    %24 = vector.shape_cast %23 : vector<1x1x8xf32> to vector<1x8xf32>
    %25 = vector.broadcast %24 : vector<1x8xf32> to vector<8x8xf32>
    %26 = arith.addf %22, %25 : vector<8x8xf32>
    %cst_28 = arith.constant dense<0.000000e+00> : vector<8x8xf32>
    %27 = tpu.matmul %12, %19, %cst_28 {dimension_numbers = #tpu.dot_dimension_numbers<[1], [1], [0], [0], [0, 0, 1, 0], [], []>} : vector<8x8xf32>, vector<8x8xf32>, vector<8x8xf32> -> vector<8x8xf32>
    %cst_29 = arith.constant dense<0xFF800000> : vector<8xf32>
    %28 = vector.multi_reduction <maximumf>, %27, %cst_29 [1] : vector<8x8xf32> to vector<8xf32>
    %29 = vector.shape_cast %28 : vector<8xf32> to vector<8x1xf32>
    %30 = vector.broadcast %29 : vector<8x1xf32> to vector<8x8xf32>
    %31 = arith.subf %27, %30 : vector<8x8xf32>
    %32 = math.exp %31 : vector<8x8xf32>
    %cst_30 = arith.constant dense<0.000000e+00> : vector<8xf32>
    %33 = vector.multi_reduction <add>, %32, %cst_30 [1] : vector<8x8xf32> to vector<8xf32>
    %34 = vector.shape_cast %33 : vector<8xf32> to vector<8x1xf32>
    %35 = tpu.reciprocal %34 : vector<8x1xf32> -> vector<8x1xf32>
    %36 = vector.broadcast %35 : vector<8x1xf32> to vector<8x8xf32>
    %37 = arith.mulf %32, %36 : vector<8x8xf32>
    %cst_31 = arith.constant dense<0.000000e+00> : vector<8x8xf32>
    %38 = tpu.matmul %37, %26, %cst_31 {dimension_numbers = #tpu.dot_dimension_numbers<[1], [0], [0], [1], [0, 0, 1, 1], [], []>} : vector<8x8xf32>, vector<8x8xf32>, vector<8x8xf32> -> vector<8x8xf32>
    %c0_32 = arith.constant 0 : index
    %c0_33 = arith.constant 0 : index
    %39 = vector.load %arg21[%c0_32, %c0_33] : memref<8x32xf32, #tpu.memory_space<vmem>>, vector<8x32xf32>
    %c0_34 = arith.constant 0 : index
    %c0_35 = arith.constant 0 : index
    %c0_36 = arith.constant 0 : index
    %40 = vector.load %arg10[%c0_34, %c0_35, %c0_36] : memref<4x8x32xf32, #tpu.memory_space<vmem>>, vector<1x8x32xf32>
    %41 = vector.shape_cast %40 : vector<1x8x32xf32> to vector<8x32xf32>
    %cst_37 = arith.constant dense<0.000000e+00> : vector<8x32xf32>
    %42 = tpu.matmul %38, %41, %cst_37 {dimension_numbers = #tpu.dot_dimension_numbers<[1], [0], [0], [1], [0, 0, 1, 1], [], []>} : vector<8x8xf32>, vector<8x32xf32>, vector<8x32xf32> -> vector<8x32xf32>
    %43 = arith.addf %39, %42 : vector<8x32xf32>
    %c0_38 = arith.constant 0 : index
    %c0_39 = arith.constant 0 : index
    %44 = vector.load %arg21[%c0_38, %c0_39] : memref<8x32xf32, #tpu.memory_space<vmem>>, vector<8x32xf32>
    tpu.vector_store %arg21[%c0_38, %c0_39], %43 {strides = array<i32>} : memref<8x32xf32, #tpu.memory_space<vmem>>, vector<8x32xf32>,
    %c1 = arith.constant 1 : index
    %c0_40 = arith.constant 0 : index
    %c0_41 = arith.constant 0 : index
    %45 = vector.load %arg4[%c1, %c0_40, %c0_41] : memref<4x32x8xf32, #tpu.memory_space<vmem>>, vector<1x32x8xf32>
    %46 = vector.shape_cast %45 : vector<1x32x8xf32> to vector<32x8xf32>
    %cst_42 = arith.constant dense<0.000000e+00> : vector<8x8xf32>
    %47 = tpu.matmul %1, %46, %cst_42 {dimension_numbers = #tpu.dot_dimension_numbers<[1], [0], [0], [1], [0, 0, 1, 1], [], []>} : vector<8x32xf32>, vector<32x8xf32>, vector<8x8xf32> -> vector<8x8xf32>
    %c1_43 = arith.constant 1 : index
    %c0_44 = arith.constant 0 : index
    %c0_45 = arith.constant 0 : index
    %48 = vector.load %arg5[%c1_43, %c0_44, %c0_45] : memref<4x1x8xf32, #tpu.memory_space<vmem>>, vector<1x1x8xf32>
    %49 = vector.shape_cast %48 : vector<1x1x8xf32> to vector<1x8xf32>
    %50 = vector.broadcast %49 : vector<1x8xf32> to vector<8x8xf32>
    %51 = arith.addf %47, %50 : vector<8x8xf32>
    %c1_46 = arith.constant 1 : index
    %c0_47 = arith.constant 0 : index
    %c0_48 = arith.constant 0 : index
    %52 = vector.load %arg6[%c1_46, %c0_47, %c0_48] : memref<4x32x8xf32, #tpu.memory_space<vmem>>, vector<1x32x8xf32>
    %53 = vector.shape_cast %52 : vector<1x32x8xf32> to vector<32x8xf32>
    %cst_49 = arith.constant dense<0.000000e+00> : vector<8x8xf32>
    %54 = tpu.matmul %3, %53, %cst_49 {dimension_numbers = #tpu.dot_dimension_numbers<[1], [0], [0], [1], [0, 0, 1, 1], [], []>} : vector<8x32xf32>, vector<32x8xf32>, vector<8x8xf32> -> vector<8x8xf32>
    %c1_50 = arith.constant 1 : index
    %c0_51 = arith.constant 0 : index
    %c0_52 = arith.constant 0 : index
    %55 = vector.load %arg7[%c1_50, %c0_51, %c0_52] : memref<4x1x8xf32, #tpu.memory_space<vmem>>, vector<1x1x8xf32>
    %56 = vector.shape_cast %55 : vector<1x1x8xf32> to vector<1x8xf32>
    %57 = vector.broadcast %56 : vector<1x8xf32> to vector<8x8xf32>
    %58 = arith.addf %54, %57 : vector<8x8xf32>
    %c1_53 = arith.constant 1 : index
    %c0_54 = arith.constant 0 : index
    %c0_55 = arith.constant 0 : index
    %59 = vector.load %arg8[%c1_53, %c0_54, %c0_55] : memref<4x32x8xf32, #tpu.memory_space<vmem>>, vector<1x32x8xf32>
    %60 = vector.shape_cast %59 : vector<1x32x8xf32> to vector<32x8xf32>
    %cst_56 = arith.constant dense<0.000000e+00> : vector<8x8xf32>
    %61 = tpu.matmul %3, %60, %cst_56 {dimension_numbers = #tpu.dot_dimension_numbers<[1], [0], [0], [1], [0, 0, 1, 1], [], []>} : vector<8x32xf32>, vector<32x8xf32>, vector<8x8xf32> -> vector<8x8xf32>
    %c1_57 = arith.constant 1 : index
    %c0_58 = arith.constant 0 : index
    %c0_59 = arith.constant 0 : index
    %62 = vector.load %arg9[%c1_57, %c0_58, %c0_59] : memref<4x1x8xf32, #tpu.memory_space<vmem>>, vector<1x1x8xf32>
    %63 = vector.shape_cast %62 : vector<1x1x8xf32> to vector<1x8xf32>
    %64 = vector.broadcast %63 : vector<1x8xf32> to vector<8x8xf32>
    %65 = arith.addf %61, %64 : vector<8x8xf32>
    %cst_60 = arith.constant dense<0.000000e+00> : vector<8x8xf32>
    %66 = tpu.matmul %51, %58, %cst_60 {dimension_numbers = #tpu.dot_dimension_numbers<[1], [1], [0], [0], [0, 0, 1, 0], [], []>} : vector<8x8xf32>, vector<8x8xf32>, vector<8x8xf32> -> vector<8x8xf32>
    %cst_61 = arith.constant dense<0xFF800000> : vector<8xf32>
    %67 = vector.multi_reduction <maximumf>, %66, %cst_61 [1] : vector<8x8xf32> to vector<8xf32>
    %68 = vector.shape_cast %67 : vector<8xf32> to vector<8x1xf32>
    %69 = vector.broadcast %68 : vector<8x1xf32> to vector<8x8xf32>
    %70 = arith.subf %66, %69 : vector<8x8xf32>
    %71 = math.exp %70 : vector<8x8xf32>
    %cst_62 = arith.constant dense<0.000000e+00> : vector<8xf32>
    %72 = vector.multi_reduction <add>, %71, %cst_62 [1] : vector<8x8xf32> to vector<8xf32>
    %73 = vector.shape_cast %72 : vector<8xf32> to vector<8x1xf32>
    %74 = tpu.reciprocal %73 : vector<8x1xf32> -> vector<8x1xf32>
    %75 = vector.broadcast %74 : vector<8x1xf32> to vector<8x8xf32>
    %76 = arith.mulf %71, %75 : vector<8x8xf32>
    %cst_63 = arith.constant dense<0.000000e+00> : vector<8x8xf32>
    %77 = tpu.matmul %76, %65, %cst_63 {dimension_numbers = #tpu.dot_dimension_numbers<[1], [0], [0], [1], [0, 0, 1, 1], [], []>} : vector<8x8xf32>, vector<8x8xf32>, vector<8x8xf32> -> vector<8x8xf32>
    %c0_64 = arith.constant 0 : index
    %c0_65 = arith.constant 0 : index
    %78 = vector.load %arg21[%c0_64, %c0_65] : memref<8x32xf32, #tpu.memory_space<vmem>>, vector<8x32xf32>
    %c1_66 = arith.constant 1 : index
    %c0_67 = arith.constant 0 : index
    %c0_68 = arith.constant 0 : index
    %79 = vector.load %arg10[%c1_66, %c0_67, %c0_68] : memref<4x8x32xf32, #tpu.memory_space<vmem>>, vector<1x8x32xf32>
    %80 = vector.shape_cast %79 : vector<1x8x32xf32> to vector<8x32xf32>
    %cst_69 = arith.constant dense<0.000000e+00> : vector<8x32xf32>
    %81 = tpu.matmul %77, %80, %cst_69 {dimension_numbers = #tpu.dot_dimension_numbers<[1], [0], [0], [1], [0, 0, 1, 1], [], []>} : vector<8x8xf32>, vector<8x32xf32>, vector<8x32xf32> -> vector<8x32xf32>
    %82 = arith.addf %78, %81 : vector<8x32xf32>
    %c0_70 = arith.constant 0 : index
    %c0_71 = arith.constant 0 : index
    %83 = vector.load %arg21[%c0_70, %c0_71] : memref<8x32xf32, #tpu.memory_space<vmem>>, vector<8x32xf32>
    tpu.vector_store %arg21[%c0_70, %c0_71], %82 {strides = array<i32>} : memref<8x32xf32, #tpu.memory_space<vmem>>, vector<8x32xf32>,
    %c2 = arith.constant 2 : index
    %c0_72 = arith.constant 0 : index
    %c0_73 = arith.constant 0 : index
    %84 = vector.load %arg4[%c2, %c0_72, %c0_73] : memref<4x32x8xf32, #tpu.memory_space<vmem>>, vector<1x32x8xf32>
    %85 = vector.shape_cast %84 : vector<1x32x8xf32> to vector<32x8xf32>
    %cst_74 = arith.constant dense<0.000000e+00> : vector<8x8xf32>
    %86 = tpu.matmul %1, %85, %cst_74 {dimension_numbers = #tpu.dot_dimension_numbers<[1], [0], [0], [1], [0, 0, 1, 1], [], []>} : vector<8x32xf32>, vector<32x8xf32>, vector<8x8xf32> -> vector<8x8xf32>
    %c2_75 = arith.constant 2 : index
    %c0_76 = arith.constant 0 : index
    %c0_77 = arith.constant 0 : index
    %87 = vector.load %arg5[%c2_75, %c0_76, %c0_77] : memref<4x1x8xf32, #tpu.memory_space<vmem>>, vector<1x1x8xf32>
    %88 = vector.shape_cast %87 : vector<1x1x8xf32> to vector<1x8xf32>
    %89 = vector.broadcast %88 : vector<1x8xf32> to vector<8x8xf32>
    %90 = arith.addf %86, %89 : vector<8x8xf32>
    %c2_78 = arith.constant 2 : index
    %c0_79 = arith.constant 0 : index
    %c0_80 = arith.constant 0 : index
    %91 = vector.load %arg6[%c2_78, %c0_79, %c0_80] : memref<4x32x8xf32, #tpu.memory_space<vmem>>, vector<1x32x8xf32>
    %92 = vector.shape_cast %91 : vector<1x32x8xf32> to vector<32x8xf32>
    %cst_81 = arith.constant dense<0.000000e+00> : vector<8x8xf32>
    %93 = tpu.matmul %3, %92, %cst_81 {dimension_numbers = #tpu.dot_dimension_numbers<[1], [0], [0], [1], [0, 0, 1, 1], [], []>} : vector<8x32xf32>, vector<32x8xf32>, vector<8x8xf32> -> vector<8x8xf32>
    %c2_82 = arith.constant 2 : index
    %c0_83 = arith.constant 0 : index
    %c0_84 = arith.constant 0 : index
    %94 = vector.load %arg7[%c2_82, %c0_83, %c0_84] : memref<4x1x8xf32, #tpu.memory_space<vmem>>, vector<1x1x8xf32>
    %95 = vector.shape_cast %94 : vector<1x1x8xf32> to vector<1x8xf32>
    %96 = vector.broadcast %95 : vector<1x8xf32> to vector<8x8xf32>
    %97 = arith.addf %93, %96 : vector<8x8xf32>
    %c2_85 = arith.constant 2 : index
    %c0_86 = arith.constant 0 : index
    %c0_87 = arith.constant 0 : index
    %98 = vector.load %arg8[%c2_85, %c0_86, %c0_87] : memref<4x32x8xf32, #tpu.memory_space<vmem>>, vector<1x32x8xf32>
    %99 = vector.shape_cast %98 : vector<1x32x8xf32> to vector<32x8xf32>
    %cst_88 = arith.constant dense<0.000000e+00> : vector<8x8xf32>
    %100 = tpu.matmul %3, %99, %cst_88 {dimension_numbers = #tpu.dot_dimension_numbers<[1], [0], [0], [1], [0, 0, 1, 1], [], []>} : vector<8x32xf32>, vector<32x8xf32>, vector<8x8xf32> -> vector<8x8xf32>
    %c2_89 = arith.constant 2 : index
    %c0_90 = arith.constant 0 : index
    %c0_91 = arith.constant 0 : index
    %101 = vector.load %arg9[%c2_89, %c0_90, %c0_91] : memref<4x1x8xf32, #tpu.memory_space<vmem>>, vector<1x1x8xf32>
    %102 = vector.shape_cast %101 : vector<1x1x8xf32> to vector<1x8xf32>
    %103 = vector.broadcast %102 : vector<1x8xf32> to vector<8x8xf32>
    %104 = arith.addf %100, %103 : vector<8x8xf32>
    %cst_92 = arith.constant dense<0.000000e+00> : vector<8x8xf32>
    %105 = tpu.matmul %90, %97, %cst_92 {dimension_numbers = #tpu.dot_dimension_numbers<[1], [1], [0], [0], [0, 0, 1, 0], [], []>} : vector<8x8xf32>, vector<8x8xf32>, vector<8x8xf32> -> vector<8x8xf32>
    %cst_93 = arith.constant dense<0xFF800000> : vector<8xf32>
    %106 = vector.multi_reduction <maximumf>, %105, %cst_93 [1] : vector<8x8xf32> to vector<8xf32>
    %107 = vector.shape_cast %106 : vector<8xf32> to vector<8x1xf32>
    %108 = vector.broadcast %107 : vector<8x1xf32> to vector<8x8xf32>
    %109 = arith.subf %105, %108 : vector<8x8xf32>
    %110 = math.exp %109 : vector<8x8xf32>
    %cst_94 = arith.constant dense<0.000000e+00> : vector<8xf32>
    %111 = vector.multi_reduction <add>, %110, %cst_94 [1] : vector<8x8xf32> to vector<8xf32>
    %112 = vector.shape_cast %111 : vector<8xf32> to vector<8x1xf32>
    %113 = tpu.reciprocal %112 : vector<8x1xf32> -> vector<8x1xf32>
    %114 = vector.broadcast %113 : vector<8x1xf32> to vector<8x8xf32>
    %115 = arith.mulf %110, %114 : vector<8x8xf32>
    %cst_95 = arith.constant dense<0.000000e+00> : vector<8x8xf32>
    %116 = tpu.matmul %115, %104, %cst_95 {dimension_numbers = #tpu.dot_dimension_numbers<[1], [0], [0], [1], [0, 0, 1, 1], [], []>} : vector<8x8xf32>, vector<8x8xf32>, vector<8x8xf32> -> vector<8x8xf32>
    %c0_96 = arith.constant 0 : index
    %c0_97 = arith.constant 0 : index
    %117 = vector.load %arg21[%c0_96, %c0_97] : memref<8x32xf32, #tpu.memory_space<vmem>>, vector<8x32xf32>
    %c2_98 = arith.constant 2 : index
    %c0_99 = arith.constant 0 : index
    %c0_100 = arith.constant 0 : index
    %118 = vector.load %arg10[%c2_98, %c0_99, %c0_100] : memref<4x8x32xf32, #tpu.memory_space<vmem>>, vector<1x8x32xf32>
    %119 = vector.shape_cast %118 : vector<1x8x32xf32> to vector<8x32xf32>
    %cst_101 = arith.constant dense<0.000000e+00> : vector<8x32xf32>
    %120 = tpu.matmul %116, %119, %cst_101 {dimension_numbers = #tpu.dot_dimension_numbers<[1], [0], [0], [1], [0, 0, 1, 1], [], []>} : vector<8x8xf32>, vector<8x32xf32>, vector<8x32xf32> -> vector<8x32xf32>
    %121 = arith.addf %117, %120 : vector<8x32xf32>
    %c0_102 = arith.constant 0 : index
    %c0_103 = arith.constant 0 : index
    %122 = vector.load %arg21[%c0_102, %c0_103] : memref<8x32xf32, #tpu.memory_space<vmem>>, vector<8x32xf32>
    tpu.vector_store %arg21[%c0_102, %c0_103], %121 {strides = array<i32>} : memref<8x32xf32, #tpu.memory_space<vmem>>, vector<8x32xf32>,
    %c3 = arith.constant 3 : index
    %c0_104 = arith.constant 0 : index
    %c0_105 = arith.constant 0 : index
    %123 = vector.load %arg4[%c3, %c0_104, %c0_105] : memref<4x32x8xf32, #tpu.memory_space<vmem>>, vector<1x32x8xf32>
    %124 = vector.shape_cast %123 : vector<1x32x8xf32> to vector<32x8xf32>
    %cst_106 = arith.constant dense<0.000000e+00> : vector<8x8xf32>
    %125 = tpu.matmul %1, %124, %cst_106 {dimension_numbers = #tpu.dot_dimension_numbers<[1], [0], [0], [1], [0, 0, 1, 1], [], []>} : vector<8x32xf32>, vector<32x8xf32>, vector<8x8xf32> -> vector<8x8xf32>
    %c3_107 = arith.constant 3 : index
    %c0_108 = arith.constant 0 : index
    %c0_109 = arith.constant 0 : index
    %126 = vector.load %arg5[%c3_107, %c0_108, %c0_109] : memref<4x1x8xf32, #tpu.memory_space<vmem>>, vector<1x1x8xf32>
    %127 = vector.shape_cast %126 : vector<1x1x8xf32> to vector<1x8xf32>
    %128 = vector.broadcast %127 : vector<1x8xf32> to vector<8x8xf32>
    %129 = arith.addf %125, %128 : vector<8x8xf32>
    %c3_110 = arith.constant 3 : index
    %c0_111 = arith.constant 0 : index
    %c0_112 = arith.constant 0 : index
    %130 = vector.load %arg6[%c3_110, %c0_111, %c0_112] : memref<4x32x8xf32, #tpu.memory_space<vmem>>, vector<1x32x8xf32>
    %131 = vector.shape_cast %130 : vector<1x32x8xf32> to vector<32x8xf32>
    %cst_113 = arith.constant dense<0.000000e+00> : vector<8x8xf32>
    %132 = tpu.matmul %3, %131, %cst_113 {dimension_numbers = #tpu.dot_dimension_numbers<[1], [0], [0], [1], [0, 0, 1, 1], [], []>} : vector<8x32xf32>, vector<32x8xf32>, vector<8x8xf32> -> vector<8x8xf32>
    %c3_114 = arith.constant 3 : index
    %c0_115 = arith.constant 0 : index
    %c0_116 = arith.constant 0 : index
    %133 = vector.load %arg7[%c3_114, %c0_115, %c0_116] : memref<4x1x8xf32, #tpu.memory_space<vmem>>, vector<1x1x8xf32>
    %134 = vector.shape_cast %133 : vector<1x1x8xf32> to vector<1x8xf32>
    %135 = vector.broadcast %134 : vector<1x8xf32> to vector<8x8xf32>
    %136 = arith.addf %132, %135 : vector<8x8xf32>
    %c3_117 = arith.constant 3 : index
    %c0_118 = arith.constant 0 : index
    %c0_119 = arith.constant 0 : index
    %137 = vector.load %arg8[%c3_117, %c0_118, %c0_119] : memref<4x32x8xf32, #tpu.memory_space<vmem>>, vector<1x32x8xf32>
    %138 = vector.shape_cast %137 : vector<1x32x8xf32> to vector<32x8xf32>
    %cst_120 = arith.constant dense<0.000000e+00> : vector<8x8xf32>
    %139 = tpu.matmul %3, %138, %cst_120 {dimension_numbers = #tpu.dot_dimension_numbers<[1], [0], [0], [1], [0, 0, 1, 1], [], []>} : vector<8x32xf32>, vector<32x8xf32>, vector<8x8xf32> -> vector<8x8xf32>
    %c3_121 = arith.constant 3 : index
    %c0_122 = arith.constant 0 : index
    %c0_123 = arith.constant 0 : index
    %140 = vector.load %arg9[%c3_121, %c0_122, %c0_123] : memref<4x1x8xf32, #tpu.memory_space<vmem>>, vector<1x1x8xf32>
    %141 = vector.shape_cast %140 : vector<1x1x8xf32> to vector<1x8xf32>
    %142 = vector.broadcast %141 : vector<1x8xf32> to vector<8x8xf32>
    %143 = arith.addf %139, %142 : vector<8x8xf32>
    %cst_124 = arith.constant dense<0.000000e+00> : vector<8x8xf32>
    %144 = tpu.matmul %129, %136, %cst_124 {dimension_numbers = #tpu.dot_dimension_numbers<[1], [1], [0], [0], [0, 0, 1, 0], [], []>} : vector<8x8xf32>, vector<8x8xf32>, vector<8x8xf32> -> vector<8x8xf32>
    %cst_125 = arith.constant dense<0xFF800000> : vector<8xf32>
    %145 = vector.multi_reduction <maximumf>, %144, %cst_125 [1] : vector<8x8xf32> to vector<8xf32>
    %146 = vector.shape_cast %145 : vector<8xf32> to vector<8x1xf32>
    %147 = vector.broadcast %146 : vector<8x1xf32> to vector<8x8xf32>
    %148 = arith.subf %144, %147 : vector<8x8xf32>
    %149 = math.exp %148 : vector<8x8xf32>
    %cst_126 = arith.constant dense<0.000000e+00> : vector<8xf32>
    %150 = vector.multi_reduction <add>, %149, %cst_126 [1] : vector<8x8xf32> to vector<8xf32>
    %151 = vector.shape_cast %150 : vector<8xf32> to vector<8x1xf32>
    %152 = tpu.reciprocal %151 : vector<8x1xf32> -> vector<8x1xf32>
    %153 = vector.broadcast %152 : vector<8x1xf32> to vector<8x8xf32>
    %154 = arith.mulf %149, %153 : vector<8x8xf32>
    %cst_127 = arith.constant dense<0.000000e+00> : vector<8x8xf32>
    %155 = tpu.matmul %154, %143, %cst_127 {dimension_numbers = #tpu.dot_dimension_numbers<[1], [0], [0], [1], [0, 0, 1, 1], [], []>} : vector<8x8xf32>, vector<8x8xf32>, vector<8x8xf32> -> vector<8x8xf32>
    %c0_128 = arith.constant 0 : index
    %c0_129 = arith.constant 0 : index
    %156 = vector.load %arg21[%c0_128, %c0_129] : memref<8x32xf32, #tpu.memory_space<vmem>>, vector<8x32xf32>
    %c3_130 = arith.constant 3 : index
    %c0_131 = arith.constant 0 : index
    %c0_132 = arith.constant 0 : index
    %157 = vector.load %arg10[%c3_130, %c0_131, %c0_132] : memref<4x8x32xf32, #tpu.memory_space<vmem>>, vector<1x8x32xf32>
    %158 = vector.shape_cast %157 : vector<1x8x32xf32> to vector<8x32xf32>
    %cst_133 = arith.constant dense<0.000000e+00> : vector<8x32xf32>
    %159 = tpu.matmul %155, %158, %cst_133 {dimension_numbers = #tpu.dot_dimension_numbers<[1], [0], [0], [1], [0, 0, 1, 1], [], []>} : vector<8x8xf32>, vector<8x32xf32>, vector<8x32xf32> -> vector<8x32xf32>
    %160 = arith.addf %156, %159 : vector<8x32xf32>
    %c0_134 = arith.constant 0 : index
    %c0_135 = arith.constant 0 : index
    %161 = vector.load %arg21[%c0_134, %c0_135] : memref<8x32xf32, #tpu.memory_space<vmem>>, vector<8x32xf32>
    tpu.vector_store %arg21[%c0_134, %c0_135], %160 {strides = array<i32>} : memref<8x32xf32, #tpu.memory_space<vmem>>, vector<8x32xf32>,
    %c0_136 = arith.constant 0 : index
    %c0_137 = arith.constant 0 : index
    %162 = vector.load %arg21[%c0_136, %c0_137] : memref<8x32xf32, #tpu.memory_space<vmem>>, vector<8x32xf32>
    %c0_138 = arith.constant 0 : index
    %c0_139 = arith.constant 0 : index
    %163 = vector.load %arg11[%c0_138, %c0_139] : memref<1x32xf32, #tpu.memory_space<vmem>>, vector<1x32xf32>
    %164 = vector.shape_cast %163 : vector<1x32xf32> to vector<32xf32>
    %165 = vector.shape_cast %164 : vector<32xf32> to vector<1x32xf32>
    %166 = vector.broadcast %165 : vector<1x32xf32> to vector<8x32xf32>
    %167 = arith.addf %162, %166 : vector<8x32xf32>
    %168 = arith.addf %1, %167 : vector<8x32xf32>
    %c0_140 = arith.constant 0 : index
    %c0_141 = arith.constant 0 : index
    %169 = vector.load %arg12[%c0_140, %c0_141] : memref<1x32xf32, #tpu.memory_space<vmem>>, vector<1x32xf32>
    %170 = vector.shape_cast %169 : vector<1x32xf32> to vector<32xf32>
    %c0_142 = arith.constant 0 : index
    %c0_143 = arith.constant 0 : index
    %171 = vector.load %arg13[%c0_142, %c0_143] : memref<1x32xf32, #tpu.memory_space<vmem>>, vector<1x32xf32>
    %172 = vector.shape_cast %171 : vector<1x32xf32> to vector<32xf32>
    %cst_144 = arith.constant dense<0.000000e+00> : vector<8xf32>
    %173 = vector.multi_reduction <add>, %168, %cst_144 [1] : vector<8x32xf32> to vector<8xf32>
    %174 = vector.shape_cast %173 : vector<8xf32> to vector<8x1xf32>
    %cst_145 = arith.constant 3.200000e+01 : f32
    %175 = vector.broadcast %cst_145 : f32 to vector<8x1xf32>
    %176 = arith.divf %174, %175 : vector<8x1xf32>
    %177 = vector.broadcast %176 : vector<8x1xf32> to vector<8x32xf32>
    %178 = arith.subf %168, %177 : vector<8x32xf32>
    %179 = arith.mulf %178, %178 : vector<8x32xf32>
    %cst_146 = arith.constant dense<0.000000e+00> : vector<8xf32>
    %180 = vector.multi_reduction <add>, %179, %cst_146 [1] : vector<8x32xf32> to vector<8xf32>
    %181 = vector.shape_cast %180 : vector<8xf32> to vector<8x1xf32>
    %cst_147 = arith.constant 3.200000e+01 : f32
    %182 = vector.broadcast %cst_147 : f32 to vector<8x1xf32>
    %183 = arith.divf %181, %182 : vector<8x1xf32>
    %184 = vector.broadcast %176 : vector<8x1xf32> to vector<8x32xf32>
    %185 = arith.subf %168, %184 : vector<8x32xf32>
    %cst_148 = arith.constant 9.99999974E-6 : f32
    %186 = vector.broadcast %cst_148 : f32 to vector<8x1xf32>
    %187 = arith.addf %183, %186 : vector<8x1xf32>
    %188 = math.rsqrt %187 : vector<8x1xf32>
    %189 = vector.broadcast %188 : vector<8x1xf32> to vector<8x32xf32>
    %190 = arith.mulf %185, %189 : vector<8x32xf32>
    %191 = vector.shape_cast %170 : vector<32xf32> to vector<1x32xf32>
    %192 = vector.broadcast %191 : vector<1x32xf32> to vector<8x32xf32>
    %193 = arith.mulf %190, %192 : vector<8x32xf32>
    %194 = vector.shape_cast %172 : vector<32xf32> to vector<1x32xf32>
    %195 = vector.broadcast %194 : vector<1x32xf32> to vector<8x32xf32>
    %196 = arith.addf %193, %195 : vector<8x32xf32>
    %c0_149 = arith.constant 0 : index
    %c0_150 = arith.constant 0 : index
    %197 = vector.load %arg14[%c0_149, %c0_150] : memref<32x64xf32, #tpu.memory_space<vmem>>, vector<32x64xf32>
    %cst_151 = arith.constant dense<0.000000e+00> : vector<8x64xf32>
    %198 = tpu.matmul %196, %197, %cst_151 {dimension_numbers = #tpu.dot_dimension_numbers<[1], [0], [0], [1], [0, 0, 1, 1], [], []>} : vector<8x32xf32>, vector<32x64xf32>, vector<8x64xf32> -> vector<8x64xf32>
    %c0_152 = arith.constant 0 : index
    %c0_153 = arith.constant 0 : index
    %199 = vector.load %arg15[%c0_152, %c0_153] : memref<1x64xf32, #tpu.memory_space<vmem>>, vector<1x64xf32>
    %200 = vector.shape_cast %199 : vector<1x64xf32> to vector<64xf32>
    %201 = vector.shape_cast %200 : vector<64xf32> to vector<1x64xf32>
    %202 = vector.broadcast %201 : vector<1x64xf32> to vector<8x64xf32>
    %203 = arith.addf %198, %202 : vector<8x64xf32>
    %cst_154 = arith.constant 0.000000e+00 : f32
    %204 = vector.broadcast %cst_154 : f32 to vector<8x64xf32>
    %205 = arith.maximumf %203, %204 : vector<8x64xf32>
    %c0_155 = arith.constant 0 : index
    %c0_156 = arith.constant 0 : index
    %206 = vector.load %arg16[%c0_155, %c0_156] : memref<64x32xf32, #tpu.memory_space<vmem>>, vector<64x32xf32>
    %cst_157 = arith.constant dense<0.000000e+00> : vector<8x32xf32>
    %207 = tpu.matmul %205, %206, %cst_157 {dimension_numbers = #tpu.dot_dimension_numbers<[1], [0], [0], [1], [0, 0, 1, 1], [], []>} : vector<8x64xf32>, vector<64x32xf32>, vector<8x32xf32> -> vector<8x32xf32>
    %c0_158 = arith.constant 0 : index
    %c0_159 = arith.constant 0 : index
    %208 = vector.load %arg17[%c0_158, %c0_159] : memref<1x32xf32, #tpu.memory_space<vmem>>, vector<1x32xf32>
    %209 = vector.shape_cast %208 : vector<1x32xf32> to vector<32xf32>
    %210 = vector.shape_cast %209 : vector<32xf32> to vector<1x32xf32>
    %211 = vector.broadcast %210 : vector<1x32xf32> to vector<8x32xf32>
    %212 = arith.addf %207, %211 : vector<8x32xf32>
    %213 = arith.addf %196, %212 : vector<8x32xf32>
    %c0_160 = arith.constant 0 : index
    %c0_161 = arith.constant 0 : index
    %214 = vector.load %arg18[%c0_160, %c0_161] : memref<1x32xf32, #tpu.memory_space<vmem>>, vector<1x32xf32>
    %215 = vector.shape_cast %214 : vector<1x32xf32> to vector<32xf32>
    %c0_162 = arith.constant 0 : index
    %c0_163 = arith.constant 0 : index
    %216 = vector.load %arg19[%c0_162, %c0_163] : memref<1x32xf32, #tpu.memory_space<vmem>>, vector<1x32xf32>
    %217 = vector.shape_cast %216 : vector<1x32xf32> to vector<32xf32>
    %cst_164 = arith.constant dense<0.000000e+00> : vector<8xf32>
    %218 = vector.multi_reduction <add>, %213, %cst_164 [1] : vector<8x32xf32> to vector<8xf32>
    %219 = vector.shape_cast %218 : vector<8xf32> to vector<8x1xf32>
    %cst_165 = arith.constant 3.200000e+01 : f32
    %220 = vector.broadcast %cst_165 : f32 to vector<8x1xf32>
    %221 = arith.divf %219, %220 : vector<8x1xf32>
    %222 = vector.broadcast %221 : vector<8x1xf32> to vector<8x32xf32>
    %223 = arith.subf %213, %222 : vector<8x32xf32>
    %224 = arith.mulf %223, %223 : vector<8x32xf32>
    %cst_166 = arith.constant dense<0.000000e+00> : vector<8xf32>
    %225 = vector.multi_reduction <add>, %224, %cst_166 [1] : vector<8x32xf32> to vector<8xf32>
    %226 = vector.shape_cast %225 : vector<8xf32> to vector<8x1xf32>
    %cst_167 = arith.constant 3.200000e+01 : f32
    %227 = vector.broadcast %cst_167 : f32 to vector<8x1xf32>
    %228 = arith.divf %226, %227 : vector<8x1xf32>
    %229 = vector.broadcast %221 : vector<8x1xf32> to vector<8x32xf32>
    %230 = arith.subf %213, %229 : vector<8x32xf32>
    %cst_168 = arith.constant 9.99999974E-6 : f32
    %231 = vector.broadcast %cst_168 : f32 to vector<8x1xf32>
    %232 = arith.addf %228, %231 : vector<8x1xf32>
    %233 = math.rsqrt %232 : vector<8x1xf32>
    %234 = vector.broadcast %233 : vector<8x1xf32> to vector<8x32xf32>
    %235 = arith.mulf %230, %234 : vector<8x32xf32>
    %236 = vector.shape_cast %215 : vector<32xf32> to vector<1x32xf32>
    %237 = vector.broadcast %236 : vector<1x32xf32> to vector<8x32xf32>
    %238 = arith.mulf %235, %237 : vector<8x32xf32>
    %239 = vector.shape_cast %217 : vector<32xf32> to vector<1x32xf32>
    %240 = vector.broadcast %239 : vector<1x32xf32> to vector<8x32xf32>
    %241 = arith.addf %238, %240 : vector<8x32xf32>
    %c0_169 = arith.constant 0 : index
    %c0_170 = arith.constant 0 : index
    %c0_171 = arith.constant 0 : index
    %242 = vector.load %arg20[%c0_169, %c0_170, %c0_171] : memref<1x8x32xf32, #tpu.memory_space<vmem>>, vector<1x8x32xf32>
    %243 = vector.shape_cast %242 : vector<1x8x32xf32> to vector<8x32xf32>
    %244 = vector.shape_cast %241 : vector<8x32xf32> to vector<1x8x32xf32>
    tpu.vector_store %arg20[%c0_169, %c0_170, %c0_171], %244 {strides = array<i32>} : memref<1x8x32xf32, #tpu.memory_space<vmem>>, vector<1x8x32xf32>,
    return
  }
  func.func @transform_0(%arg0: i32, %arg1: i32) -> (i32, i32, i32) {
    %c0_i32 = arith.constant 0 : i32
    %c0_i32_0 = arith.constant 0 : i32
    return %arg0, %arg1, %c0_i32 : i32, i32, i32
  }
  func.func @transform_1(%arg0: i32, %arg1: i32) -> (i32, i32, i32) {
    %c0_i32 = arith.constant 0 : i32
    %c0_i32_0 = arith.constant 0 : i32
    %c0_i32_1 = arith.constant 0 : i32
    return %arg0, %c0_i32, %c0_i32_0 : i32, i32, i32
  }
  func.func @transform_2(%arg0: i32, %arg1: i32) -> (i32, i32, i32) {
    %c0_i32 = arith.constant 0 : i32
    %c0_i32_0 = arith.constant 0 : i32
    %c0_i32_1 = arith.constant 0 : i32
    %c0_i32_2 = arith.constant 0 : i32
    return %c0_i32, %c0_i32_0, %c0_i32_1 : i32, i32, i32
  }
  func.func @transform_3(%arg0: i32, %arg1: i32) -> (i32, i32, i32) {
    %c0_i32 = arith.constant 0 : i32
    %c0_i32_0 = arith.constant 0 : i32
    %c0_i32_1 = arith.constant 0 : i32
    %c0_i32_2 = arith.constant 0 : i32
    return %c0_i32, %c0_i32_0, %c0_i32_1 : i32, i32, i32
  }
  func.func @transform_4(%arg0: i32, %arg1: i32) -> (i32, i32, i32) {
    %c0_i32 = arith.constant 0 : i32
    %c0_i32_0 = arith.constant 0 : i32
    %c0_i32_1 = arith.constant 0 : i32
    %c0_i32_2 = arith.constant 0 : i32
    return %c0_i32, %c0_i32_0, %c0_i32_1 : i32, i32, i32
  }
  func.func @transform_5(%arg0: i32, %arg1: i32) -> (i32, i32, i32) {
    %c0_i32 = arith.constant 0 : i32
    %c0_i32_0 = arith.constant 0 : i32
    %c0_i32_1 = arith.constant 0 : i32
    %c0_i32_2 = arith.constant 0 : i32
    return %c0_i32, %c0_i32_0, %c0_i32_1 : i32, i32, i32
  }
  func.func @transform_6(%arg0: i32, %arg1: i32) -> (i32, i32, i32) {
    %c0_i32 = arith.constant 0 : i32
    %c0_i32_0 = arith.constant 0 : i32
    %c0_i32_1 = arith.constant 0 : i32
    %c0_i32_2 = arith.constant 0 : i32
    return %c0_i32, %c0_i32_0, %c0_i32_1 : i32, i32, i32
  }
  func.func @transform_7(%arg0: i32, %arg1: i32) -> (i32, i32, i32) {
    %c0_i32 = arith.constant 0 : i32
    %c0_i32_0 = arith.constant 0 : i32
    %c0_i32_1 = arith.constant 0 : i32
    %c0_i32_2 = arith.constant 0 : i32
    return %c0_i32, %c0_i32_0, %c0_i32_1 : i32, i32, i32
  }
  func.func @transform_8(%arg0: i32, %arg1: i32) -> (i32, i32, i32) {
    %c0_i32 = arith.constant 0 : i32
    %c0_i32_0 = arith.constant 0 : i32
    %c0_i32_1 = arith.constant 0 : i32
    %c0_i32_2 = arith.constant 0 : i32
    return %c0_i32, %c0_i32_0, %c0_i32_1 : i32, i32, i32
  }
  func.func @transform_9(%arg0: i32, %arg1: i32) -> (i32, i32) {
    %c0_i32 = arith.constant 0 : i32
    %c0_i32_0 = arith.constant 0 : i32
    %c0_i32_1 = arith.constant 0 : i32
    return %c0_i32, %c0_i32_0 : i32, i32
  }
  func.func @transform_10(%arg0: i32, %arg1: i32) -> (i32, i32) {
    %c0_i32 = arith.constant 0 : i32
    %c0_i32_0 = arith.constant 0 : i32
    %c0_i32_1 = arith.constant 0 : i32
    return %c0_i32, %c0_i32_0 : i32, i32
  }
  func.func @transform_11(%arg0: i32, %arg1: i32) -> (i32, i32) {
    %c0_i32 = arith.constant 0 : i32
    %c0_i32_0 = arith.constant 0 : i32
    %c0_i32_1 = arith.constant 0 : i32
    return %c0_i32, %c0_i32_0 : i32, i32
  }
  func.func @transform_12(%arg0: i32, %arg1: i32) -> (i32, i32) {
    %c0_i32 = arith.constant 0 : i32
    %c0_i32_0 = arith.constant 0 : i32
    %c0_i32_1 = arith.constant 0 : i32
    return %c0_i32, %c0_i32_0 : i32, i32
  }
  func.func @transform_13(%arg0: i32, %arg1: i32) -> (i32, i32) {
    %c0_i32 = arith.constant 0 : i32
    %c0_i32_0 = arith.constant 0 : i32
    %c0_i32_1 = arith.constant 0 : i32
    return %c0_i32, %c0_i32_0 : i32, i32
  }
  func.func @transform_14(%arg0: i32, %arg1: i32) -> (i32, i32) {
    %c0_i32 = arith.constant 0 : i32
    %c0_i32_0 = arith.constant 0 : i32
    %c0_i32_1 = arith.constant 0 : i32
    return %c0_i32, %c0_i32_0 : i32, i32
  }
  func.func @transform_15(%arg0: i32, %arg1: i32) -> (i32, i32) {
    %c0_i32 = arith.constant 0 : i32
    %c0_i32_0 = arith.constant 0 : i32
    %c0_i32_1 = arith.constant 0 : i32
    return %c0_i32, %c0_i32_0 : i32, i32
  }
  func.func @transform_16(%arg0: i32, %arg1: i32) -> (i32, i32) {
    %c0_i32 = arith.constant 0 : i32
    %c0_i32_0 = arith.constant 0 : i32
    %c0_i32_1 = arith.constant 0 : i32
    return %c0_i32, %c0_i32_0 : i32, i32
  }
  func.func @transform_17(%arg0: i32, %arg1: i32) -> (i32, i32) {
    %c0_i32 = arith.constant 0 : i32
    %c0_i32_0 = arith.constant 0 : i32
    %c0_i32_1 = arith.constant 0 : i32
    return %c0_i32, %c0_i32_0 : i32, i32
  }
  func.func @transform_18(%arg0: i32, %arg1: i32) -> (i32, i32, i32) {
    %c0_i32 = arith.constant 0 : i32
    %c0_i32_0 = arith.constant 0 : i32
    return %arg0, %arg1, %c0_i32 : i32, i32, i32
  }
}

</mosaic_0001>

<llo_original>
// kernel: tpu_custom_call.1
$region0: #{tpu_custom_call.1}
  #allocation0 [shape = 'u32[]', space=smem, size = 0x4, offset = 0x4, fixed_abs, tag = 'smem constant byte address 0x4 - core index']
  #allocation1 [shape = 'u32[144,128]{1,0:T(1,128)}', space=vmem, size = 0x12000, scoped, tag = 'internal scratch']
  #allocation2 [shape = 'f32[8,32]{1,0:T(8,128)}', space=vmem, size = 0x1000, scoped, tag = 'scratch operand']
  %s0 = inlined_call_operand.vmem [shape: f32[2,8,32], index: 0, kind: input, shape index: {}]
  %s1 = inlined_call_operand.vmem [shape: f32[2,8,32], index: 1, kind: input, shape index: {}]
  %s2 = inlined_call_operand.vmem [shape: f32[4,32,8], index: 2, kind: input, shape index: {}]
  %s3 = inlined_call_operand.vmem [shape: f32[4,1,8], index: 3, kind: input, shape index: {}]
  %s4 = inlined_call_operand.vmem [shape: f32[4,32,8], index: 4, kind: input, shape index: {}]
  %s5 = inlined_call_operand.vmem [shape: f32[4,1,8], index: 5, kind: input, shape index: {}]
  %s6 = inlined_call_operand.vmem [shape: f32[4,32,8], index: 6, kind: input, shape index: {}]
  %s7 = inlined_call_operand.vmem [shape: f32[4,1,8], index: 7, kind: input, shape index: {}]
  %s8 = inlined_call_operand.vmem [shape: f32[4,8,32], index: 8, kind: input, shape index: {}]
  %s9 = inlined_call_operand.vmem [shape: f32[1,32], index: 9, kind: input, shape index: {}]
  %s10 = inlined_call_operand.vmem [shape: f32[1,32], index: 10, kind: input, shape index: {}]
  %s11 = inlined_call_operand.vmem [shape: f32[1,32], index: 11, kind: input, shape index: {}]
  %s12 = inlined_call_operand.vmem [shape: f32[32,64], index: 12, kind: input, shape index: {}]
  %s13 = inlined_call_operand.vmem [shape: f32[1,64], index: 13, kind: input, shape index: {}]
  %s14 = inlined_call_operand.vmem [shape: f32[64,32], index: 14, kind: input, shape index: {}]
  %s15 = inlined_call_operand.vmem [shape: f32[1,32], index: 15, kind: input, shape index: {}]
  %s16 = inlined_call_operand.vmem [shape: f32[1,32], index: 16, kind: input, shape index: {}]
  %s17 = inlined_call_operand.vmem [shape: f32[1,32], index: 17, kind: input, shape index: {}]
  %s18 = inlined_call_operand.hbm [shape: f32[2,8,32], index: 18, kind: output, shape index: {}]
  %s19 = sld [smem:[#allocation0]]
  $region105: #{tpu_custom_call.1} parent=0
    _
  %s21 = ssub.s32 1, %s19
  %s22 = scalar_select 0, %s21, %s19
  $region1: #{tpu_custom_call.1} parent=0
    #allocation3 [shape = 'u8[8192]{0}', space=vmem, size = 0x2000, scoped, tag = 'output window, operand 0']
    #allocation4 [shape = 's32[2]{0}', space=sflag, size = 0x8, scoped, tag = 'scoped memory for tpu_custom_call.1']
    %23 = vsyncpa [#allocation4], 0
    %s24 = scalar_lea.sflag [#allocation4], 1
    %25 = vsyncpa %s24, 0
    loop: start=0, step=1, limit=4
    $region2: #{tpu_custom_call.1} parent=1 // loop_pre_header
      _
    $region3: #{tpu_custom_call.1} parent=1 // loop_header
      %s27 = sphi 0, %s31
      %p28 = scmp.ge.s32.totalorder %s27, 4
      %s34 = sphi 0, %s46
      %s35 = sphi 0, %s42
      %s36 = sphi 0, %s34
      %s37 = sphi 0, %s35
      %s38 = sphi 0, %s36
      %s39 = sphi 0, %s37
      %s51 = sphi 0, %s53
      %s54 = sphi 0, %s51
      %s55 = sphi 0, %s54
      %s71 = sphi 0, %s55
      %s77 = sphi 0, %s79
      %s80 = sphi 0, %s77
      %s81 = sphi 0, %s80
      %s97 = sphi 0, %s81
      %s101 = sphi 0, %s101
      %s103 = sphi 0, %s101
      %s104 = sphi 0, %s103
      %s118 = sphi 0, %s104
      %s122 = sphi 0, %s122
      %s124 = sphi 0, %s122
      %s125 = sphi 0, %s124
      %s139 = sphi 0, %s125
      %s143 = sphi 0, %s143
      %s145 = sphi 0, %s143
      %s146 = sphi 0, %s145
      %s160 = sphi 0, %s146
      %s164 = sphi 0, %s164
      %s166 = sphi 0, %s164
      %s167 = sphi 0, %s166
      %s181 = sphi 0, %s167
      %s185 = sphi 0, %s185
      %s187 = sphi 0, %s185
      %s188 = sphi 0, %s187
      %s202 = sphi 0, %s188
      %s206 = sphi 0, %s206
      %s208 = sphi 0, %s206
      %s209 = sphi 0, %s208
      %s223 = sphi 0, %s209
      %s227 = sphi 0, %s227
      %s229 = sphi 0, %s227
      %s230 = sphi 0, %s229
      %s244 = sphi 0, %s230
      %s248 = sphi 0, %s248
      %s250 = sphi 0, %s248
      %s251 = sphi 0, %s250
      %s265 = sphi 0, %s251
      %s269 = sphi 0, %s269
      %s271 = sphi 0, %s269
      %s272 = sphi 0, %s271
      %s286 = sphi 0, %s272
      %s290 = sphi 0, %s290
      %s292 = sphi 0, %s290
      %s293 = sphi 0, %s292
      %s307 = sphi 0, %s293
      %s311 = sphi 0, %s311
      %s313 = sphi 0, %s311
      %s314 = sphi 0, %s313
      %s328 = sphi 0, %s314
      %s332 = sphi 0, %s332
      %s334 = sphi 0, %s332
      %s335 = sphi 0, %s334
      %s349 = sphi 0, %s335
      %s353 = sphi 0, %s353
      %s355 = sphi 0, %s353
      %s356 = sphi 0, %s355
      %s370 = sphi 0, %s356
      %s374 = sphi 0, %s374
      %s376 = sphi 0, %s374
      %s377 = sphi 0, %s376
      %s391 = sphi 0, %s377
      %s395 = sphi 0, %s395
      %s397 = sphi 0, %s395
      %s398 = sphi 0, %s397
      %s412 = sphi 0, %s398
      %s416 = sphi 0, %s416
      %s418 = sphi 0, %s416
      %s419 = sphi 0, %s418
      %s433 = sphi 0, %s419
      %s441 = sphi 0, %s443
      %s444 = sphi 0, %s441
      %s445 = sphi 0, %s444
      %s461 = sphi 0, %s445
    $region4: #{tpu_custom_call.1} parent=1 // loop_header_branch
      %30 = sbr.rel (%p28) target = $region8
    $region5: #{tpu_custom_call.1} parent=1 // loop_body
      %s32 = ssub.s32 %s27, 1
      %s33 = ssub.s32 %s27, 2
      %s40 = sadd.s32 1, %s35
      %p41 = scmp.ge.s32.totalorder %s40, 1
      %s42 = scalar_select %p41, 0, %s40
      %s43 = sadd.s32 1, %s34
      %s44 = scalar_select %p41, %s43, %s34
      %p45 = scmp.ge.s32.totalorder %s44, 2
      %s46 = scalar_select %p45, 0, %s44
      %s47 = ssub.s32 %s34, %s46
      %s48 = ssub.s32 %s35, %s42
      %s49 = sor.u32 %s47, %s48
      %p50 = scmp.eq.s32.totalorder %s49, 0
      %s52 = sadd.s32 %s51, 1
      %s53 = scalar_select %p50, %s51, %s52
      %p56 = pneg %p50
      %p57 = scmp.eq.s32.totalorder %s27, 1
      %p58 = por %p56, %p57
      %p59 = scmp.ne.s32.totalorder %s51, %s54
      %p60 = scmp.eq.s32.totalorder %s27, 0
      %p61 = por %p59, %p60
      %p62 = scmp.ne.s32.totalorder %s51, %s54
      %p63 = scmp.eq.s32.totalorder %s32, 1
      %p64 = por %p62, %p63
      %p65 = scmp.ne.s32.totalorder %s54, %s55
      %p66 = scmp.eq.s32.totalorder %s32, 0
      %p67 = por %p65, %p66
      %p68 = scmp.ne.s32.totalorder %s54, %s55
      %p69 = scmp.eq.s32.totalorder %s33, 1
      %p70 = por %p68, %p69
      %p72 = scmp.ne.s32.totalorder %s55, %s71
      %p73 = scmp.eq.s32.totalorder %s33, 0
      %p74 = por %p72, %p73
      %s75 = ssub.s32 %s34, %s46
      %p76 = scmp.eq.s32.totalorder %s75, 0
      %s78 = sadd.s32 %s77, 1
      %s79 = scalar_select %p76, %s77, %s78
      %p82 = pneg %p76
      %p83 = scmp.eq.s32.totalorder %s27, 1
      %p84 = por %p82, %p83
      %p85 = scmp.ne.s32.totalorder %s77, %s80
      %p86 = scmp.eq.s32.totalorder %s27, 0
      %p87 = por %p85, %p86
      %p88 = scmp.ne.s32.totalorder %s77, %s80
      %p89 = scmp.eq.s32.totalorder %s32, 1
      %p90 = por %p88, %p89
      %p91 = scmp.ne.s32.totalorder %s80, %s81
      %p92 = scmp.eq.s32.totalorder %s32, 0
      %p93 = por %p91, %p92
      %p94 = scmp.ne.s32.totalorder %s80, %s81
      %p95 = scmp.eq.s32.totalorder %s33, 1
      %p96 = por %p94, %p95
      %p98 = scmp.ne.s32.totalorder %s81, %s97
      %p99 = scmp.eq.s32.totalorder %s33, 0
      %p100 = por %p98, %p99
      %s102 = sadd.s32 %s101, 1
      %p105 = scmp.eq.s32.totalorder %s27, 1
      %p106 = scmp.ne.s32.totalorder %s101, %s103
      %p107 = scmp.eq.s32.totalorder %s27, 0
      %p108 = por %p106, %p107
      %p109 = scmp.ne.s32.totalorder %s101, %s103
      %p110 = scmp.eq.s32.totalorder %s32, 1
      %p111 = por %p109, %p110
      %p112 = scmp.ne.s32.totalorder %s103, %s104
      %p113 = scmp.eq.s32.totalorder %s32, 0
      %p114 = por %p112, %p113
      %p115 = scmp.ne.s32.totalorder %s103, %s104
      %p116 = scmp.eq.s32.totalorder %s33, 1
      %p117 = por %p115, %p116
      %p119 = scmp.ne.s32.totalorder %s104, %s118
      %p120 = scmp.eq.s32.totalorder %s33, 0
      %p121 = por %p119, %p120
      %s123 = sadd.s32 %s122, 1
      %p126 = scmp.eq.s32.totalorder %s27, 1
      %p127 = scmp.ne.s32.totalorder %s122, %s124
      %p128 = scmp.eq.s32.totalorder %s27, 0
      %p129 = por %p127, %p128
      %p130 = scmp.ne.s32.totalorder %s122, %s124
      %p131 = scmp.eq.s32.totalorder %s32, 1
      %p132 = por %p130, %p131
      %p133 = scmp.ne.s32.totalorder %s124, %s125
      %p134 = scmp.eq.s32.totalorder %s32, 0
      %p135 = por %p133, %p134
      %p136 = scmp.ne.s32.totalorder %s124, %s125
      %p137 = scmp.eq.s32.totalorder %s33, 1
      %p138 = por %p136, %p137
      %p140 = scmp.ne.s32.totalorder %s125, %s139
      %p141 = scmp.eq.s32.totalorder %s33, 0
      %p142 = por %p140, %p141
      %s144 = sadd.s32 %s143, 1
      %p147 = scmp.eq.s32.totalorder %s27, 1
      %p148 = scmp.ne.s32.totalorder %s143, %s145
      %p149 = scmp.eq.s32.totalorder %s27, 0
      %p150 = por %p148, %p149
      %p151 = scmp.ne.s32.totalorder %s143, %s145
      %p152 = scmp.eq.s32.totalorder %s32, 1
      %p153 = por %p151, %p152
      %p154 = scmp.ne.s32.totalorder %s145, %s146
      %p155 = scmp.eq.s32.totalorder %s32, 0
      %p156 = por %p154, %p155
      %p157 = scmp.ne.s32.totalorder %s145, %s146
      %p158 = scmp.eq.s32.totalorder %s33, 1
      %p159 = por %p157, %p158
      %p161 = scmp.ne.s32.totalorder %s146, %s160
      %p162 = scmp.eq.s32.totalorder %s33, 0
      %p163 = por %p161, %p162
      %s165 = sadd.s32 %s164, 1
      %p168 = scmp.eq.s32.totalorder %s27, 1
      %p169 = scmp.ne.s32.totalorder %s164, %s166
      %p170 = scmp.eq.s32.totalorder %s27, 0
      %p171 = por %p169, %p170
      %p172 = scmp.ne.s32.totalorder %s164, %s166
      %p173 = scmp.eq.s32.totalorder %s32, 1
      %p174 = por %p172, %p173
      %p175 = scmp.ne.s32.totalorder %s166, %s167
      %p176 = scmp.eq.s32.totalorder %s32, 0
      %p177 = por %p175, %p176
      %p178 = scmp.ne.s32.totalorder %s166, %s167
      %p179 = scmp.eq.s32.totalorder %s33, 1
      %p180 = por %p178, %p179
      %p182 = scmp.ne.s32.totalorder %s167, %s181
      %p183 = scmp.eq.s32.totalorder %s33, 0
      %p184 = por %p182, %p183
      %s186 = sadd.s32 %s185, 1
      %p189 = scmp.eq.s32.totalorder %s27, 1
      %p190 = scmp.ne.s32.totalorder %s185, %s187
      %p191 = scmp.eq.s32.totalorder %s27, 0
      %p192 = por %p190, %p191
      %p193 = scmp.ne.s32.totalorder %s185, %s187
      %p194 = scmp.eq.s32.totalorder %s32, 1
      %p195 = por %p193, %p194
      %p196 = scmp.ne.s32.totalorder %s187, %s188
      %p197 = scmp.eq.s32.totalorder %s32, 0
      %p198 = por %p196, %p197
      %p199 = scmp.ne.s32.totalorder %s187, %s188
      %p200 = scmp.eq.s32.totalorder %s33, 1
      %p201 = por %p199, %p200
      %p203 = scmp.ne.s32.totalorder %s188, %s202
      %p204 = scmp.eq.s32.totalorder %s33, 0
      %p205 = por %p203, %p204
      %s207 = sadd.s32 %s206, 1
      %p210 = scmp.eq.s32.totalorder %s27, 1
      %p211 = scmp.ne.s32.totalorder %s206, %s208
      %p212 = scmp.eq.s32.totalorder %s27, 0
      %p213 = por %p211, %p212
      %p214 = scmp.ne.s32.totalorder %s206, %s208
      %p215 = scmp.eq.s32.totalorder %s32, 1
      %p216 = por %p214, %p215
      %p217 = scmp.ne.s32.totalorder %s208, %s209
      %p218 = scmp.eq.s32.totalorder %s32, 0
      %p219 = por %p217, %p218
      %p220 = scmp.ne.s32.totalorder %s208, %s209
      %p221 = scmp.eq.s32.totalorder %s33, 1
      %p222 = por %p220, %p221
      %p224 = scmp.ne.s32.totalorder %s209, %s223
      %p225 = scmp.eq.s32.totalorder %s33, 0
      %p226 = por %p224, %p225
      %s228 = sadd.s32 %s227, 1
      %p231 = scmp.eq.s32.totalorder %s27, 1
      %p232 = scmp.ne.s32.totalorder %s227, %s229
      %p233 = scmp.eq.s32.totalorder %s27, 0
      %p234 = por %p232, %p233
      %p235 = scmp.ne.s32.totalorder %s227, %s229
      %p236 = scmp.eq.s32.totalorder %s32, 1
      %p237 = por %p235, %p236
      %p238 = scmp.ne.s32.totalorder %s229, %s230
      %p239 = scmp.eq.s32.totalorder %s32, 0
      %p240 = por %p238, %p239
      %p241 = scmp.ne.s32.totalorder %s229, %s230
      %p242 = scmp.eq.s32.totalorder %s33, 1
      %p243 = por %p241, %p242
      %p245 = scmp.ne.s32.totalorder %s230, %s244
      %p246 = scmp.eq.s32.totalorder %s33, 0
      %p247 = por %p245, %p246
      %s249 = sadd.s32 %s248, 1
      %p252 = scmp.eq.s32.totalorder %s27, 1
      %p253 = scmp.ne.s32.totalorder %s248, %s250
      %p254 = scmp.eq.s32.totalorder %s27, 0
      %p255 = por %p253, %p254
      %p256 = scmp.ne.s32.totalorder %s248, %s250
      %p257 = scmp.eq.s32.totalorder %s32, 1
      %p258 = por %p256, %p257
      %p259 = scmp.ne.s32.totalorder %s250, %s251
      %p260 = scmp.eq.s32.totalorder %s32, 0
      %p261 = por %p259, %p260
      %p262 = scmp.ne.s32.totalorder %s250, %s251
      %p263 = scmp.eq.s32.totalorder %s33, 1
      %p264 = por %p262, %p263
      %p266 = scmp.ne.s32.totalorder %s251, %s265
      %p267 = scmp.eq.s32.totalorder %s33, 0
      %p268 = por %p266, %p267
      %s270 = sadd.s32 %s269, 1
      %p273 = scmp.eq.s32.totalorder %s27, 1
      %p274 = scmp.ne.s32.totalorder %s269, %s271
      %p275 = scmp.eq.s32.totalorder %s27, 0
      %p276 = por %p274, %p275
      %p277 = scmp.ne.s32.totalorder %s269, %s271
      %p278 = scmp.eq.s32.totalorder %s32, 1
      %p279 = por %p277, %p278
      %p280 = scmp.ne.s32.totalorder %s271, %s272
      %p281 = scmp.eq.s32.totalorder %s32, 0
      %p282 = por %p280, %p281
      %p283 = scmp.ne.s32.totalorder %s271, %s272
      %p284 = scmp.eq.s32.totalorder %s33, 1
      %p285 = por %p283, %p284
      %p287 = scmp.ne.s32.totalorder %s272, %s286
      %p288 = scmp.eq.s32.totalorder %s33, 0
      %p289 = por %p287, %p288
      %s291 = sadd.s32 %s290, 1
      %p294 = scmp.eq.s32.totalorder %s27, 1
      %p295 = scmp.ne.s32.totalorder %s290, %s292
      %p296 = scmp.eq.s32.totalorder %s27, 0
      %p297 = por %p295, %p296
      %p298 = scmp.ne.s32.totalorder %s290, %s292
      %p299 = scmp.eq.s32.totalorder %s32, 1
      %p300 = por %p298, %p299
      %p301 = scmp.ne.s32.totalorder %s292, %s293
      %p302 = scmp.eq.s32.totalorder %s32, 0
      %p303 = por %p301, %p302
      %p304 = scmp.ne.s32.totalorder %s292, %s293
      %p305 = scmp.eq.s32.totalorder %s33, 1
      %p306 = por %p304, %p305
      %p308 = scmp.ne.s32.totalorder %s293, %s307
      %p309 = scmp.eq.s32.totalorder %s33, 0
      %p310 = por %p308, %p309
      %s312 = sadd.s32 %s311, 1
      %p315 = scmp.eq.s32.totalorder %s27, 1
      %p316 = scmp.ne.s32.totalorder %s311, %s313
      %p317 = scmp.eq.s32.totalorder %s27, 0
      %p318 = por %p316, %p317
      %p319 = scmp.ne.s32.totalorder %s311, %s313
      %p320 = scmp.eq.s32.totalorder %s32, 1
      %p321 = por %p319, %p320
      %p322 = scmp.ne.s32.totalorder %s313, %s314
      %p323 = scmp.eq.s32.totalorder %s32, 0
      %p324 = por %p322, %p323
      %p325 = scmp.ne.s32.totalorder %s313, %s314
      %p326 = scmp.eq.s32.totalorder %s33, 1
      %p327 = por %p325, %p326
      %p329 = scmp.ne.s32.totalorder %s314, %s328
      %p330 = scmp.eq.s32.totalorder %s33, 0
      %p331 = por %p329, %p330
      %s333 = sadd.s32 %s332, 1
      %p336 = scmp.eq.s32.totalorder %s27, 1
      %p337 = scmp.ne.s32.totalorder %s332, %s334
      %p338 = scmp.eq.s32.totalorder %s27, 0
      %p339 = por %p337, %p338
      %p340 = scmp.ne.s32.totalorder %s332, %s334
      %p341 = scmp.eq.s32.totalorder %s32, 1
      %p342 = por %p340, %p341
      %p343 = scmp.ne.s32.totalorder %s334, %s335
      %p344 = scmp.eq.s32.totalorder %s32, 0
      %p345 = por %p343, %p344
      %p346 = scmp.ne.s32.totalorder %s334, %s335
      %p347 = scmp.eq.s32.totalorder %s33, 1
      %p348 = por %p346, %p347
      %p350 = scmp.ne.s32.totalorder %s335, %s349
      %p351 = scmp.eq.s32.totalorder %s33, 0
      %p352 = por %p350, %p351
      %s354 = sadd.s32 %s353, 1
      %p357 = scmp.eq.s32.totalorder %s27, 1
      %p358 = scmp.ne.s32.totalorder %s353, %s355
      %p359 = scmp.eq.s32.totalorder %s27, 0
      %p360 = por %p358, %p359
      %p361 = scmp.ne.s32.totalorder %s353, %s355
      %p362 = scmp.eq.s32.totalorder %s32, 1
      %p363 = por %p361, %p362
      %p364 = scmp.ne.s32.totalorder %s355, %s356
      %p365 = scmp.eq.s32.totalorder %s32, 0
      %p366 = por %p364, %p365
      %p367 = scmp.ne.s32.totalorder %s355, %s356
      %p368 = scmp.eq.s32.totalorder %s33, 1
      %p369 = por %p367, %p368
      %p371 = scmp.ne.s32.totalorder %s356, %s370
      %p372 = scmp.eq.s32.totalorder %s33, 0
      %p373 = por %p371, %p372
      %s375 = sadd.s32 %s374, 1
      %p378 = scmp.eq.s32.totalorder %s27, 1
      %p379 = scmp.ne.s32.totalorder %s374, %s376
      %p380 = scmp.eq.s32.totalorder %s27, 0
      %p381 = por %p379, %p380
      %p382 = scmp.ne.s32.totalorder %s374, %s376
      %p383 = scmp.eq.s32.totalorder %s32, 1
      %p384 = por %p382, %p383
      %p385 = scmp.ne.s32.totalorder %s376, %s377
      %p386 = scmp.eq.s32.totalorder %s32, 0
      %p387 = por %p385, %p386
      %p388 = scmp.ne.s32.totalorder %s376, %s377
      %p389 = scmp.eq.s32.totalorder %s33, 1
      %p390 = por %p388, %p389
      %p392 = scmp.ne.s32.totalorder %s377, %s391
      %p393 = scmp.eq.s32.totalorder %s33, 0
      %p394 = por %p392, %p393
      %s396 = sadd.s32 %s395, 1
      %p399 = scmp.eq.s32.totalorder %s27, 1
      %p400 = scmp.ne.s32.totalorder %s395, %s397
      %p401 = scmp.eq.s32.totalorder %s27, 0
      %p402 = por %p400, %p401
      %p403 = scmp.ne.s32.totalorder %s395, %s397
      %p404 = scmp.eq.s32.totalorder %s32, 1
      %p405 = por %p403, %p404
      %p406 = scmp.ne.s32.totalorder %s397, %s398
      %p407 = scmp.eq.s32.totalorder %s32, 0
      %p408 = por %p406, %p407
      %p409 = scmp.ne.s32.totalorder %s397, %s398
      %p410 = scmp.eq.s32.totalorder %s33, 1
      %p411 = por %p409, %p410
      %p413 = scmp.ne.s32.totalorder %s398, %s412
      %p414 = scmp.eq.s32.totalorder %s33, 0
      %p415 = por %p413, %p414
      %s417 = sadd.s32 %s416, 1
      %p420 = scmp.eq.s32.totalorder %s27, 1
      %p421 = scmp.ne.s32.totalorder %s416, %s418
      %p422 = scmp.eq.s32.totalorder %s27, 0
      %p423 = por %p421, %p422
      %p424 = scmp.ne.s32.totalorder %s416, %s418
      %p425 = scmp.eq.s32.totalorder %s32, 1
      %p426 = por %p424, %p425
      %p427 = scmp.ne.s32.totalorder %s418, %s419
      %p428 = scmp.eq.s32.totalorder %s32, 0
      %p429 = por %p427, %p428
      %p430 = scmp.ne.s32.totalorder %s418, %s419
      %p431 = scmp.eq.s32.totalorder %s33, 1
      %p432 = por %p430, %p431
      %p434 = scmp.ne.s32.totalorder %s419, %s433
      %p435 = scmp.eq.s32.totalorder %s33, 0
      %p436 = por %p434, %p435
      %s437 = ssub.s32 %s34, %s46
      %s438 = ssub.s32 %s35, %s42
      %s439 = sor.u32 %s437, %s438
      %p440 = scmp.eq.s32.totalorder %s439, 0
      %s442 = sadd.s32 %s441, 1
      %s443 = scalar_select %p440, %s441, %s442
      %p446 = pneg %p440
      %p447 = scmp.eq.s32.totalorder %s27, 1
      %p448 = por %p446, %p447
      %p449 = scmp.ne.s32.totalorder %s441, %s444
      %p450 = scmp.eq.s32.totalorder %s27, 0
      %p451 = por %p449, %p450
      %p452 = scmp.ne.s32.totalorder %s441, %s444
      %p453 = scmp.eq.s32.totalorder %s32, 1
      %p454 = por %p452, %p453
      %p455 = scmp.ne.s32.totalorder %s444, %s445
      %p456 = scmp.eq.s32.totalorder %s32, 0
      %p457 = por %p455, %p456
      %p458 = scmp.ne.s32.totalorder %s444, %s445
      %p459 = scmp.eq.s32.totalorder %s33, 1
      %p460 = por %p458, %p459
      %p462 = scmp.ne.s32.totalorder %s445, %s461
      %p463 = scmp.eq.s32.totalorder %s33, 0
      %p464 = por %p462, %p463
      %p465 = scmp.le.s32.totalorder 1, %s27
      %p466 = scmp.lt.s32.totalorder %s27, 3
      %p467 = pnand %p465, %p466
      %p468 = pneg %p467
      // Predicated region
      $region9: #{tpu_custom_call.1} parent=5 // pred_check
        _
      $region10: #{tpu_custom_call.1} parent=5 // pred_check_branch
        %470 = sbr.rel (%p467) target = $region12
      $region11: #{tpu_custom_call.1} parent=5 // pred_region
        %s471 = ssub.s32 %s27, 1
        // Predicated region
        $region13: #{tpu_custom_call.1} parent=11 // pred_check
          %p472 = pneg %p114
        $region14: #{tpu_custom_call.1} parent=11 // pred_check_branch
          %474 = sbr.rel (%p472) target = $region16
        $region15: #{tpu_custom_call.1} parent=11 // pred_region
          _
        $region16: #{tpu_custom_call.1} parent=11 // pred_fallthru
          _
        // Predicated region
        $region17: #{tpu_custom_call.1} parent=11 // pred_check
          %p475 = pneg %p135
        $region18: #{tpu_custom_call.1} parent=11 // pred_check_branch
          %477 = sbr.rel (%p475) target = $region20
        $region19: #{tpu_custom_call.1} parent=11 // pred_region
          _
        $region20: #{tpu_custom_call.1} parent=11 // pred_fallthru
          _
        // Predicated region
        $region21: #{tpu_custom_call.1} parent=11 // pred_check
          %p478 = pneg %p156
        $region22: #{tpu_custom_call.1} parent=11 // pred_check_branch
          %480 = sbr.rel (%p478) target = $region24
        $region23: #{tpu_custom_call.1} parent=11 // pred_region
          _
        $region24: #{tpu_custom_call.1} parent=11 // pred_fallthru
          _
        // Predicated region
        $region25: #{tpu_custom_call.1} parent=11 // pred_check
          %p481 = pneg %p177
        $region26: #{tpu_custom_call.1} parent=11 // pred_check_branch
          %483 = sbr.rel (%p481) target = $region28
        $region27: #{tpu_custom_call.1} parent=11 // pred_region
          _
        $region28: #{tpu_custom_call.1} parent=11 // pred_fallthru
          _
        // Predicated region
        $region29: #{tpu_custom_call.1} parent=11 // pred_check
          %p484 = pneg %p198
        $region30: #{tpu_custom_call.1} parent=11 // pred_check_branch
          %486 = sbr.rel (%p484) target = $region32
        $region31: #{tpu_custom_call.1} parent=11 // pred_region
          _
        $region32: #{tpu_custom_call.1} parent=11 // pred_fallthru
          _
        // Predicated region
        $region33: #{tpu_custom_call.1} parent=11 // pred_check
          %p487 = pneg %p219
        $region34: #{tpu_custom_call.1} parent=11 // pred_check_branch
          %489 = sbr.rel (%p487) target = $region36
        $region35: #{tpu_custom_call.1} parent=11 // pred_region
          _
        $region36: #{tpu_custom_call.1} parent=11 // pred_fallthru
          _
        // Predicated region
        $region37: #{tpu_custom_call.1} parent=11 // pred_check
          %p490 = pneg %p240
        $region38: #{tpu_custom_call.1} parent=11 // pred_check_branch
          %492 = sbr.rel (%p490) target = $region40
        $region39: #{tpu_custom_call.1} parent=11 // pred_region
          _
        $region40: #{tpu_custom_call.1} parent=11 // pred_fallthru
          _
        // Predicated region
        $region41: #{tpu_custom_call.1} parent=11 // pred_check
          %p493 = pneg %p261
        $region42: #{tpu_custom_call.1} parent=11 // pred_check_branch
          %495 = sbr.rel (%p493) target = $region44
        $region43: #{tpu_custom_call.1} parent=11 // pred_region
          _
        $region44: #{tpu_custom_call.1} parent=11 // pred_fallthru
          _
        // Predicated region
        $region45: #{tpu_custom_call.1} parent=11 // pred_check
          %p496 = pneg %p282
        $region46: #{tpu_custom_call.1} parent=11 // pred_check_branch
          %498 = sbr.rel (%p496) target = $region48
        $region47: #{tpu_custom_call.1} parent=11 // pred_region
          _
        $region48: #{tpu_custom_call.1} parent=11 // pred_fallthru
          _
        // Predicated region
        $region49: #{tpu_custom_call.1} parent=11 // pred_check
          %p499 = pneg %p303
        $region50: #{tpu_custom_call.1} parent=11 // pred_check_branch
          %501 = sbr.rel (%p499) target = $region52
        $region51: #{tpu_custom_call.1} parent=11 // pred_region
          _
        $region52: #{tpu_custom_call.1} parent=11 // pred_fallthru
          _
        // Predicated region
        $region53: #{tpu_custom_call.1} parent=11 // pred_check
          %p502 = pneg %p324
        $region54: #{tpu_custom_call.1} parent=11 // pred_check_branch
          %504 = sbr.rel (%p502) target = $region56
        $region55: #{tpu_custom_call.1} parent=11 // pred_region
          _
        $region56: #{tpu_custom_call.1} parent=11 // pred_fallthru
          _
        // Predicated region
        $region57: #{tpu_custom_call.1} parent=11 // pred_check
          %p505 = pneg %p345
        $region58: #{tpu_custom_call.1} parent=11 // pred_check_branch
          %507 = sbr.rel (%p505) target = $region60
        $region59: #{tpu_custom_call.1} parent=11 // pred_region
          _
        $region60: #{tpu_custom_call.1} parent=11 // pred_fallthru
          _
        // Predicated region
        $region61: #{tpu_custom_call.1} parent=11 // pred_check
          %p508 = pneg %p366
        $region62: #{tpu_custom_call.1} parent=11 // pred_check_branch
          %510 = sbr.rel (%p508) target = $region64
        $region63: #{tpu_custom_call.1} parent=11 // pred_region
          _
        $region64: #{tpu_custom_call.1} parent=11 // pred_fallthru
          _
        // Predicated region
        $region65: #{tpu_custom_call.1} parent=11 // pred_check
          %p511 = pneg %p387
        $region66: #{tpu_custom_call.1} parent=11 // pred_check_branch
          %513 = sbr.rel (%p511) target = $region68
        $region67: #{tpu_custom_call.1} parent=11 // pred_region
          _
        $region68: #{tpu_custom_call.1} parent=11 // pred_fallthru
          _
        // Predicated region
        $region69: #{tpu_custom_call.1} parent=11 // pred_check
          %p514 = pneg %p408
        $region70: #{tpu_custom_call.1} parent=11 // pred_check_branch
          %516 = sbr.rel (%p514) target = $region72
        $region71: #{tpu_custom_call.1} parent=11 // pred_region
          _
        $region72: #{tpu_custom_call.1} parent=11 // pred_fallthru
          _
        // Predicated region
        $region73: #{tpu_custom_call.1} parent=11 // pred_check
          %p517 = pneg %p429
        $region74: #{tpu_custom_call.1} parent=11 // pred_check_branch
          %519 = sbr.rel (%p517) target = $region76
        $region75: #{tpu_custom_call.1} parent=11 // pred_region
          _
        $region76: #{tpu_custom_call.1} parent=11 // pred_fallthru
          _
      $region12: #{tpu_custom_call.1} parent=5 // pred_fallthru
        _
      %p520 = scmp.lt.s32.totalorder %s27, 2
      // Predicated region
      $region77: #{tpu_custom_call.1} parent=5 // pred_check
        %p521 = pneg %p520
      $region78: #{tpu_custom_call.1} parent=5 // pred_check_branch
        %523 = sbr.rel (%p521) target = $region80
      $region79: #{tpu_custom_call.1} parent=5 // pred_region
        // Predicated region
        $region81: #{tpu_custom_call.1} parent=79 // pred_check
          %p524 = pneg %p61
        $region82: #{tpu_custom_call.1} parent=79 // pred_check_branch
          %526 = sbr.rel (%p524) target = $region84
        $region83: #{tpu_custom_call.1} parent=79 // pred_region
          %p527 = scmp.lt.s32.totalorder %s34, 1
          %s528 = scalar_select %p527, %s34, 1
          %p529 = scmp.lt.s32.totalorder %s35, 0
          %s530 = scalar_select %p529, %s35, 0
          %s531 = sadd.s32 %s530, %s528
          %s532 = smul.addr %s531, 8
          %s533 = scalar_lea.vmem %s0, %s532
        $region84: #{tpu_custom_call.1} parent=79 // pred_fallthru
          _
        // Predicated region
        $region85: #{tpu_custom_call.1} parent=79 // pred_check
          %p534 = pneg %p87
        $region86: #{tpu_custom_call.1} parent=79 // pred_check_branch
          %536 = sbr.rel (%p534) target = $region88
        $region87: #{tpu_custom_call.1} parent=79 // pred_region
          %p537 = scmp.lt.s32.totalorder %s34, 1
          %s538 = scalar_select %p537, %s34, 1
          %s539 = smul.addr %s538, 8
          %s540 = scalar_lea.vmem %s1, %s539
        $region88: #{tpu_custom_call.1} parent=79 // pred_fallthru
          _
      $region80: #{tpu_custom_call.1} parent=5 // pred_fallthru
        _
      %p541 = scmp.le.s32.totalorder 1, %s27
      %p542 = scmp.lt.s32.totalorder %s27, 3
      %p543 = pnand %p541, %p542
      %p544 = pneg %p543
      // Predicated region
      $region89: #{tpu_custom_call.1} parent=5 // pred_check
        _
      $region90: #{tpu_custom_call.1} parent=5 // pred_check_branch
        %546 = sbr.rel (%p543) target = $region92
      $region91: #{tpu_custom_call.1} parent=5 // pred_region
        %s547 = ssub.s32 %s27, 1
        %p548 = scmp.lt.s32.totalorder %s36, 1
        %s549 = scalar_select %p548, %s36, 1
        %p550 = scmp.lt.s32.totalorder %s37, 0
        %s551 = scalar_select %p550, %s37, 0
        %s552 = sadd.s32 %s551, %s549
        %s553 = smul.addr %s552, 8
        %s554 = scalar_lea.vmem %s0, %s553
        %p555 = pneg %p67
        %p556 = pneg %p64
        %p557 = scmp.lt.s32.totalorder %s36, 1
        %s558 = scalar_select %p557, %s36, 1
        %s559 = smul.addr %s558, 8
        %s560 = scalar_lea.vmem %s1, %s559
        %p561 = pneg %p93
        %p562 = pneg %p90
        %p563 = pneg %p114
        %p564 = pneg %p111
        %p565 = pneg %p135
        %p566 = pneg %p132
        %p567 = pneg %p156
        %p568 = pneg %p153
        %p569 = pneg %p177
        %p570 = pneg %p174
        %p571 = pneg %p198
        %p572 = pneg %p195
        %p573 = pneg %p219
        %p574 = pneg %p216
        %p575 = pneg %p240
        %p576 = pneg %p237
        %p577 = pneg %p261
        %p578 = pneg %p258
        %p579 = pneg %p282
        %p580 = pneg %p279
        %p581 = pneg %p303
        %p582 = pneg %p300
        %p583 = pneg %p324
        %p584 = pneg %p321
        %p585 = pneg %p345
        %p586 = pneg %p342
        %p587 = pneg %p366
        %p588 = pneg %p363
        %p589 = pneg %p387
        %p590 = pneg %p384
        %p591 = pneg %p408
        %p592 = pneg %p405
        %p593 = pneg %p429
        %p594 = pneg %p426
        %p595 = pneg %p457
        %p596 = pneg %p454
        %s597 = sand.u32 %s444, 1
        %s598 = scalar_lea.sflag [#allocation4], %s597
        %s599 = sand.u32 %s444, 1
        %s600 = smul.addr %s599, 8
        %s601 = scalar_lea.vmem [#allocation3], %s600
        %p602 = scmp.lt.s32.totalorder %s36, 1
        %s603 = scalar_select %p602, %s36, 1
        %p604 = scmp.lt.s32.totalorder %s37, 0
        %s605 = scalar_select %p604, %s37, 0
        %s606 = sadd.s32 %s605, %s603
        %s607 = smul.addr %s606, 8
        %s608 = scalar_lea.vmem %s0, %s607
        %p609 = scmp.lt.s32.totalorder %s36, 1
        %s610 = scalar_select %p609, %s36, 1
        %s611 = smul.addr %s610, 8
        %s612 = scalar_lea.vmem %s1, %s611
        %v613 = vld [vmem:[%s608] sm:$0xff]
        %v614 = vld [vmem:[%s612] sm:$0xff]
        %vm615 = vcmask 261120
        %616 = vst.msk [vmem:[#allocation2] sm:$0xff] %vm615, 0.0
        %v617 = vld [vmem:[%s2] sm:$0xff]
        %v618 = vld [vmem:[%s2 + $0x8] sm:$0xff]
        %v619 = vld [vmem:[%s2 + $0x10] sm:$0xff]
        %v620 = vld [vmem:[%s2 + $0x18] sm:$0xff]
        %v621 = vld [vmem:[%s3] sm:$0x1]
        %v623 = vlaneseq
        %v624 = vshrl.u32 %v623, 7
        %v625 = vsub.s32 0, %v624
        %v626 = vrot.slane %v621, %v625
        %v629 = vsel %vm615, %v613, 0
        %631 = vmatprep.subr.mxu0 0.0
        %632 = vmatpush1.msra.mxu0 0.0
        %633 = vmatprep.subr.mxu0 0.0
        %634 = vmatpush1.msra.mxu0 0.0
        %635 = vmatprep.subr.mxu0 0.0
        %636 = vmatpush1.msra.mxu0 0.0
        %637 = vmatprep.subr.mxu0 0.0
        %638 = vmatpush1.msra.mxu0 0.0
        %639 = vmatprep.subr.mxu0 0.0
        %640 = vmatpush1.msra.mxu0 0.0
        %641 = vmatprep.subr.mxu0 0.0
        %642 = vmatpush1.msra.mxu0 0.0
        %643 = vmatprep.subr.mxu0 0.0
        %644 = vmatpush1.msra.mxu0 0.0
        %645 = vmatprep.subr.mxu0 0.0
        %646 = vmatpush1.msra.mxu0 0.0
        %647 = vmatprep.subr.mxu0 0.0
        %648 = vmatpush1.msra.mxu0 0.0
        %649 = vmatprep.subr.mxu0 0.0
        %650 = vmatpush1.msra.mxu0 0.0
        %651 = vmatprep.subr.mxu0 0.0
        %652 = vmatpush1.msra.mxu0 0.0
        %653 = vmatprep.subr.mxu0 0.0
        %654 = vmatpush1.msra.mxu0 0.0
        %655 = vmatprep.subr.mxu0 0.0
        %656 = vmatpush1.msra.mxu0 %v620
        %657 = vmatprep.subr.mxu0 0.0
        %658 = vmatpush1.msra.mxu0 %v619
        %659 = vmatprep.subr.mxu0 0.0
        %660 = vmatpush1.msra.mxu0 %v618
        %661 = vmatprep.subr.mxu0 0.0
        %662 = vmatpush1.msra.mxu0 %v617
        %663 = vmatprep.subr.mxu0 0.0
        %664 = vmatpush2.msra.mxu0 0.0
        %665 = vmatprep.subr.mxu0 0.0
        %666 = vmatpush2.msra.mxu0 0.0
        %667 = vmatprep.subr.mxu0 0.0
        %668 = vmatpush2.msra.mxu0 0.0
        %669 = vmatprep.subr.mxu0 0.0
        %670 = vmatpush2.msra.mxu0 0.0
        %671 = vmatprep.subr.mxu0 0.0
        %672 = vmatpush2.msra.mxu0 0.0
        %673 = vmatprep.subr.mxu0 0.0
        %674 = vmatpush2.msra.mxu0 0.0
        %675 = vmatprep.subr.mxu0 0.0
        %676 = vmatpush2.msra.mxu0 0.0
        %677 = vmatprep.subr.mxu0 0.0
        %678 = vmatpush2.msra.mxu0 0.0
        %679 = vmatprep.subr.mxu0 0.0
        %680 = vmatpush2.msra.mxu0 0.0
        %681 = vmatprep.subr.mxu0 0.0
        %682 = vmatpush2.msra.mxu0 0.0
        %683 = vmatprep.subr.mxu0 0.0
        %684 = vmatpush2.msra.mxu0 0.0
        %685 = vmatprep.subr.mxu0 0.0
        %686 = vmatpush2.msra.mxu0 0.0
        %687 = vmatprep.subr.mxu0 0.0
        %688 = vmatpush2.msra.mxu0 0.0
        %689 = vmatprep.subr.mxu0 0.0
        %690 = vmatpush2.msra.mxu0 0.0
        %691 = vmatprep.subr.mxu0 0.0
        %692 = vmatpush2.msra.mxu0 0.0
        %693 = vmatprep.subr.mxu0 0.0
        %694 = vmatpush2.msra.mxu0 0.0
        %695 = vmatprep.mubr.f32.mxu0 0.0
        %696 = vmatmul.mubr.f32.gmra.mxu0 %v629
        %v697 = vpop.f32.mrf.mxu0
        %v698 = vadd.f32 %v626, %v697
        %v699 = vpop.f32.mrf.mxu0
        %700 = vdwg.mxu0
        %v701 = vld [vmem:[%s4] sm:$0xff]
        %v702 = vld [vmem:[%s4 + $0x8] sm:$0xff]
        %v703 = vld [vmem:[%s4 + $0x10] sm:$0xff]
        %v704 = vld [vmem:[%s4 + $0x18] sm:$0xff]
        %v705 = vld [vmem:[%s5] sm:$0x1]
        %v707 = vlaneseq
        %v708 = vshrl.u32 %v707, 7
        %v709 = vsub.s32 0, %v708
        %v710 = vrot.slane %v705, %v709
        %v713 = vsel %vm615, %v614, 0
        %715 = vmatprep.subr.mxu0 0.0
        %716 = vmatpush1.msra.mxu0 0.0
        %717 = vmatprep.subr.mxu0 0.0
        %718 = vmatpush1.msra.mxu0 0.0
        %719 = vmatprep.subr.mxu0 0.0
        %720 = vmatpush1.msra.mxu0 0.0
        %721 = vmatprep.subr.mxu0 0.0
        %722 = vmatpush1.msra.mxu0 0.0
        %723 = vmatprep.subr.mxu0 0.0
        %724 = vmatpush1.msra.mxu0 0.0
        %725 = vmatprep.subr.mxu0 0.0
        %726 = vmatpush1.msra.mxu0 0.0
        %727 = vmatprep.subr.mxu0 0.0
        %728 = vmatpush1.msra.mxu0 0.0
        %729 = vmatprep.subr.mxu0 0.0
        %730 = vmatpush1.msra.mxu0 0.0
        %731 = vmatprep.subr.mxu0 0.0
        %732 = vmatpush1.msra.mxu0 0.0
        %733 = vmatprep.subr.mxu0 0.0
        %734 = vmatpush1.msra.mxu0 0.0
        %735 = vmatprep.subr.mxu0 0.0
        %736 = vmatpush1.msra.mxu0 0.0
        %737 = vmatprep.subr.mxu0 0.0
        %738 = vmatpush1.msra.mxu0 0.0
        %739 = vmatprep.subr.mxu0 0.0
        %740 = vmatpush1.msra.mxu0 %v704
        %741 = vmatprep.subr.mxu0 0.0
        %742 = vmatpush1.msra.mxu0 %v703
        %743 = vmatprep.subr.mxu0 0.0
        %744 = vmatpush1.msra.mxu0 %v702
        %745 = vmatprep.subr.mxu0 0.0
        %746 = vmatpush1.msra.mxu0 %v701
        %747 = vmatprep.subr.mxu0 0.0
        %748 = vmatpush2.msra.mxu0 0.0
        %749 = vmatprep.subr.mxu0 0.0
        %750 = vmatpush2.msra.mxu0 0.0
        %751 = vmatprep.subr.mxu0 0.0
        %752 = vmatpush2.msra.mxu0 0.0
        %753 = vmatprep.subr.mxu0 0.0
        %754 = vmatpush2.msra.mxu0 0.0
        %755 = vmatprep.subr.mxu0 0.0
        %756 = vmatpush2.msra.mxu0 0.0
        %757 = vmatprep.subr.mxu0 0.0
        %758 = vmatpush2.msra.mxu0 0.0
        %759 = vmatprep.subr.mxu0 0.0
        %760 = vmatpush2.msra.mxu0 0.0
        %761 = vmatprep.subr.mxu0 0.0
        %762 = vmatpush2.msra.mxu0 0.0
        %763 = vmatprep.subr.mxu0 0.0
        %764 = vmatpush2.msra.mxu0 0.0
        %765 = vmatprep.subr.mxu0 0.0
        %766 = vmatpush2.msra.mxu0 0.0
        %767 = vmatprep.subr.mxu0 0.0
        %768 = vmatpush2.msra.mxu0 0.0
        %769 = vmatprep.subr.mxu0 0.0
        %770 = vmatpush2.msra.mxu0 0.0
        %771 = vmatprep.subr.mxu0 0.0
        %772 = vmatpush2.msra.mxu0 0.0
        %773 = vmatprep.subr.mxu0 0.0
        %774 = vmatpush2.msra.mxu0 0.0
        %775 = vmatprep.subr.mxu0 0.0
        %776 = vmatpush2.msra.mxu0 0.0
        %777 = vmatprep.subr.mxu0 0.0
        %778 = vmatpush2.msra.mxu0 0.0
        %779 = vmatprep.mubr.f32.mxu0 0.0
        %780 = vmatmul.mubr.f32.gmra.mxu0 %v713
        %v781 = vpop.f32.mrf.mxu0
        %v782 = vadd.f32 %v710, %v781
        %v783 = vpop.f32.mrf.mxu0
        %784 = vdwg.mxu0
        %v785 = vld [vmem:[%s6] sm:$0xff]
        %v786 = vld [vmem:[%s6 + $0x8] sm:$0xff]
        %v787 = vld [vmem:[%s6 + $0x10] sm:$0xff]
        %v788 = vld [vmem:[%s6 + $0x18] sm:$0xff]
        %v789 = vld [vmem:[%s7] sm:$0x1]
        %v791 = vlaneseq
        %v792 = vshrl.u32 %v791, 7
        %v793 = vsub.s32 0, %v792
        %v794 = vrot.slane %v789, %v793
        %796 = vmatprep.subr.mxu0 0.0
        %797 = vmatpush1.msra.mxu0 0.0
        %798 = vmatprep.subr.mxu0 0.0
        %799 = vmatpush1.msra.mxu0 0.0
        %800 = vmatprep.subr.mxu0 0.0
        %801 = vmatpush1.msra.mxu0 0.0
        %802 = vmatprep.subr.mxu0 0.0
        %803 = vmatpush1.msra.mxu0 0.0
        %804 = vmatprep.subr.mxu0 0.0
        %805 = vmatpush1.msra.mxu0 0.0
        %806 = vmatprep.subr.mxu0 0.0
        %807 = vmatpush1.msra.mxu0 0.0
        %808 = vmatprep.subr.mxu0 0.0
        %809 = vmatpush1.msra.mxu0 0.0
        %810 = vmatprep.subr.mxu0 0.0
        %811 = vmatpush1.msra.mxu0 0.0
        %812 = vmatprep.subr.mxu0 0.0
        %813 = vmatpush1.msra.mxu0 0.0
        %814 = vmatprep.subr.mxu0 0.0
        %815 = vmatpush1.msra.mxu0 0.0
        %816 = vmatprep.subr.mxu0 0.0
        %817 = vmatpush1.msra.mxu0 0.0
        %818 = vmatprep.subr.mxu0 0.0
        %819 = vmatpush1.msra.mxu0 0.0
        %820 = vmatprep.subr.mxu0 0.0
        %821 = vmatpush1.msra.mxu0 %v788
        %822 = vmatprep.subr.mxu0 0.0
        %823 = vmatpush1.msra.mxu0 %v787
        %824 = vmatprep.subr.mxu0 0.0
        %825 = vmatpush1.msra.mxu0 %v786
        %826 = vmatprep.subr.mxu0 0.0
        %827 = vmatpush1.msra.mxu0 %v785
        %828 = vmatprep.subr.mxu0 0.0
        %829 = vmatpush2.msra.mxu0 0.0
        %830 = vmatprep.subr.mxu0 0.0
        %831 = vmatpush2.msra.mxu0 0.0
        %832 = vmatprep.subr.mxu0 0.0
        %833 = vmatpush2.msra.mxu0 0.0
        %834 = vmatprep.subr.mxu0 0.0
        %835 = vmatpush2.msra.mxu0 0.0
        %836 = vmatprep.subr.mxu0 0.0
        %837 = vmatpush2.msra.mxu0 0.0
        %838 = vmatprep.subr.mxu0 0.0
        %839 = vmatpush2.msra.mxu0 0.0
        %840 = vmatprep.subr.mxu0 0.0
        %841 = vmatpush2.msra.mxu0 0.0
        %842 = vmatprep.subr.mxu0 0.0
        %843 = vmatpush2.msra.mxu0 0.0
        %844 = vmatprep.subr.mxu0 0.0
        %845 = vmatpush2.msra.mxu0 0.0
        %846 = vmatprep.subr.mxu0 0.0
        %847 = vmatpush2.msra.mxu0 0.0
        %848 = vmatprep.subr.mxu0 0.0
        %849 = vmatpush2.msra.mxu0 0.0
        %850 = vmatprep.subr.mxu0 0.0
        %851 = vmatpush2.msra.mxu0 0.0
        %852 = vmatprep.subr.mxu0 0.0
        %853 = vmatpush2.msra.mxu0 0.0
        %854 = vmatprep.subr.mxu0 0.0
        %855 = vmatpush2.msra.mxu0 0.0
        %856 = vmatprep.subr.mxu0 0.0
        %857 = vmatpush2.msra.mxu0 0.0
        %858 = vmatprep.subr.mxu0 0.0
        %859 = vmatpush2.msra.mxu0 0.0
        %860 = vmatprep.mubr.f32.mxu0 0.0
        %861 = vmatmul.mubr.f32.gmra.mxu0 %v713
        %v862 = vpop.f32.mrf.mxu0
        %v863 = vadd.f32 %v794, %v862
        %v864 = vpop.f32.mrf.mxu0
        %865 = vdwg.mxu0
        %vm866 = vcmask 64512
        %v868 = vsel %vm866, %v698, 0
        %v871 = vsel %vm866, %v782, 0
        %873 = vmatprep.subr.mxu0 0.0
        %874 = vmatpush1.xpose.msra.mxu0 0.0
        %875 = vmatprep.subr.mxu0 0.0
        %876 = vmatpush1.xpose.msra.mxu0 0.0
        %877 = vmatprep.subr.mxu0 0.0
        %878 = vmatpush1.xpose.msra.mxu0 0.0
        %879 = vmatprep.subr.mxu0 0.0
        %880 = vmatpush1.xpose.msra.mxu0 0.0
        %881 = vmatprep.subr.mxu0 0.0
        %882 = vmatpush1.xpose.msra.mxu0 0.0
        %883 = vmatprep.subr.mxu0 0.0
        %884 = vmatpush1.xpose.msra.mxu0 0.0
        %885 = vmatprep.subr.mxu0 0.0
        %886 = vmatpush1.xpose.msra.mxu0 0.0
        %887 = vmatprep.subr.mxu0 0.0
        %888 = vmatpush1.xpose.msra.mxu0 0.0
        %889 = vmatprep.subr.mxu0 0.0
        %890 = vmatpush1.xpose.msra.mxu0 0.0
        %891 = vmatprep.subr.mxu0 0.0
        %892 = vmatpush1.xpose.msra.mxu0 0.0
        %893 = vmatprep.subr.mxu0 0.0
        %894 = vmatpush1.xpose.msra.mxu0 0.0
        %895 = vmatprep.subr.mxu0 0.0
        %896 = vmatpush1.xpose.msra.mxu0 0.0
        %897 = vmatprep.subr.mxu0 0.0
        %898 = vmatpush1.xpose.msra.mxu0 0.0
        %899 = vmatprep.subr.mxu0 0.0
        %900 = vmatpush1.xpose.msra.mxu0 0.0
        %901 = vmatprep.subr.mxu0 0.0
        %902 = vmatpush1.xpose.msra.mxu0 0.0
        %903 = vmatprep.subr.mxu0 0.0
        %904 = vmatpush1.xpose.msra.mxu0 %v871
        %905 = vmatprep.subr.mxu0 0.0
        %906 = vmatpush2.xpose.msra.mxu0 0.0
        %907 = vmatprep.subr.mxu0 0.0
        %908 = vmatpush2.xpose.msra.mxu0 0.0
        %909 = vmatprep.subr.mxu0 0.0
        %910 = vmatpush2.xpose.msra.mxu0 0.0
        %911 = vmatprep.subr.mxu0 0.0
        %912 = vmatpush2.xpose.msra.mxu0 0.0
        %913 = vmatprep.subr.mxu0 0.0
        %914 = vmatpush2.xpose.msra.mxu0 0.0
        %915 = vmatprep.subr.mxu0 0.0
        %916 = vmatpush2.xpose.msra.mxu0 0.0
        %917 = vmatprep.subr.mxu0 0.0
        %918 = vmatpush2.xpose.msra.mxu0 0.0
        %919 = vmatprep.subr.mxu0 0.0
        %920 = vmatpush2.xpose.msra.mxu0 0.0
        %921 = vmatprep.subr.mxu0 0.0
        %922 = vmatpush2.xpose.msra.mxu0 0.0
        %923 = vmatprep.subr.mxu0 0.0
        %924 = vmatpush2.xpose.msra.mxu0 0.0
        %925 = vmatprep.subr.mxu0 0.0
        %926 = vmatpush2.xpose.msra.mxu0 0.0
        %927 = vmatprep.subr.mxu0 0.0
        %928 = vmatpush2.xpose.msra.mxu0 0.0
        %929 = vmatprep.subr.mxu0 0.0
        %930 = vmatpush2.xpose.msra.mxu0 0.0
        %931 = vmatprep.subr.mxu0 0.0
        %932 = vmatpush2.xpose.msra.mxu0 0.0
        %933 = vmatprep.subr.mxu0 0.0
        %934 = vmatpush2.xpose.msra.mxu0 0.0
        %935 = vmatprep.subr.mxu0 0.0
        %936 = vmatpush2.xpose.msra.mxu0 0.0
        %937 = vmatprep.mubr.f32.mxu0 0.0
        %938 = vmatmul.mubr.f32.gmra.mxu0 %v868
        %v939 = vpop.f32.mrf.mxu0
        %v940 = vadd.f32 0.0, %v939
        %v941 = vpop.f32.mrf.mxu0
        %942 = vdwg.mxu0
        %v943 = vsel %vm866, %v940, -inf
        %944 = vmax.xlane.f32.xlu0 %v943
        %v945 = vpop.xlane.xlu0 %944
        %v946 = vsub.f32 %v940, %v945
        %v947 = vmul.f32 %v946, 1.442695
        %v948 = vpow.pop %v947
        %v949 = vsel %vm866, %v948, 0.0
        %950 = vadd.xlane.f32.xlu0 %v949
        %v951 = vpop.xlane.xlu0 %950
        %v952 = vrcp.pop %v951
        %v953 = vmul.f32 %v948, %v952
        %v955 = vsel %vm866, %v953, 0
        %957 = vmatprep.subr.mxu0 0.0
        %958 = vmatpush1.msra.mxu0 0.0
        %959 = vmatprep.subr.mxu0 0.0
        %960 = vmatpush1.msra.mxu0 0.0
        %961 = vmatprep.subr.mxu0 0.0
        %962 = vmatpush1.msra.mxu0 0.0
        %963 = vmatprep.subr.mxu0 0.0
        %964 = vmatpush1.msra.mxu0 0.0
        %965 = vmatprep.subr.mxu0 0.0
        %966 = vmatpush1.msra.mxu0 0.0
        %967 = vmatprep.subr.mxu0 0.0
        %968 = vmatpush1.msra.mxu0 0.0
        %969 = vmatprep.subr.mxu0 0.0
        %970 = vmatpush1.msra.mxu0 0.0
        %971 = vmatprep.subr.mxu0 0.0
        %972 = vmatpush1.msra.mxu0 0.0
        %973 = vmatprep.subr.mxu0 0.0
        %974 = vmatpush1.msra.mxu0 0.0
        %975 = vmatprep.subr.mxu0 0.0
        %976 = vmatpush1.msra.mxu0 0.0
        %977 = vmatprep.subr.mxu0 0.0
        %978 = vmatpush1.msra.mxu0 0.0
        %979 = vmatprep.subr.mxu0 0.0
        %980 = vmatpush1.msra.mxu0 0.0
        %981 = vmatprep.subr.mxu0 0.0
        %982 = vmatpush1.msra.mxu0 0.0
        %983 = vmatprep.subr.mxu0 0.0
        %984 = vmatpush1.msra.mxu0 0.0
        %985 = vmatprep.subr.mxu0 0.0
        %986 = vmatpush1.msra.mxu0 0.0
        %987 = vmatprep.subr.mxu0 0.0
        %988 = vmatpush1.msra.mxu0 %v863
        %989 = vmatprep.subr.mxu0 0.0
        %990 = vmatpush2.msra.mxu0 0.0
        %991 = vmatprep.subr.mxu0 0.0
        %992 = vmatpush2.msra.mxu0 0.0
        %993 = vmatprep.subr.mxu0 0.0
        %994 = vmatpush2.msra.mxu0 0.0
        %995 = vmatprep.subr.mxu0 0.0
        %996 = vmatpush2.msra.mxu0 0.0
        %997 = vmatprep.subr.mxu0 0.0
        %998 = vmatpush2.msra.mxu0 0.0
        %999 = vmatprep.subr.mxu0 0.0
        %1000 = vmatpush2.msra.mxu0 0.0
        %1001 = vmatprep.subr.mxu0 0.0
        %1002 = vmatpush2.msra.mxu0 0.0
        %1003 = vmatprep.subr.mxu0 0.0
        %1004 = vmatpush2.msra.mxu0 0.0
        %1005 = vmatprep.subr.mxu0 0.0
        %1006 = vmatpush2.msra.mxu0 0.0
        %1007 = vmatprep.subr.mxu0 0.0
        %1008 = vmatpush2.msra.mxu0 0.0
        %1009 = vmatprep.subr.mxu0 0.0
        %1010 = vmatpush2.msra.mxu0 0.0
        %1011 = vmatprep.subr.mxu0 0.0
        %1012 = vmatpush2.msra.mxu0 0.0
        %1013 = vmatprep.subr.mxu0 0.0
        %1014 = vmatpush2.msra.mxu0 0.0
        %1015 = vmatprep.subr.mxu0 0.0
        %1016 = vmatpush2.msra.mxu0 0.0
        %1017 = vmatprep.subr.mxu0 0.0
        %1018 = vmatpush2.msra.mxu0 0.0
        %1019 = vmatprep.subr.mxu0 0.0
        %1020 = vmatpush2.msra.mxu0 0.0
        %1021 = vmatprep.mubr.f32.mxu0 0.0
        %1022 = vmatmul.mubr.f32.gmra.mxu0 %v955
        %v1023 = vpop.f32.mrf.mxu0
        %v1024 = vadd.f32 0.0, %v1023
        %v1025 = vpop.f32.mrf.mxu0
        %1026 = vdwg.mxu0
        %v1027 = vld [vmem:[#allocation2] sm:$0xff]
        %v1028 = vld [vmem:[%s8] sm:$0xff]
        %v1030 = vsel %vm866, %v1024, 0
        %1032 = vmatprep.subr.mxu0 0.0
        %1033 = vmatpush1.msra.mxu0 0.0
        %1034 = vmatprep.subr.mxu0 0.0
        %1035 = vmatpush1.msra.mxu0 0.0
        %1036 = vmatprep.subr.mxu0 0.0
        %1037 = vmatpush1.msra.mxu0 0.0
        %1038 = vmatprep.subr.mxu0 0.0
        %1039 = vmatpush1.msra.mxu0 0.0
        %1040 = vmatprep.subr.mxu0 0.0
        %1041 = vmatpush1.msra.mxu0 0.0
        %1042 = vmatprep.subr.mxu0 0.0
        %1043 = vmatpush1.msra.mxu0 0.0
        %1044 = vmatprep.subr.mxu0 0.0
        %1045 = vmatpush1.msra.mxu0 0.0
        %1046 = vmatprep.subr.mxu0 0.0
        %1047 = vmatpush1.msra.mxu0 0.0
        %1048 = vmatprep.subr.mxu0 0.0
        %1049 = vmatpush1.msra.mxu0 0.0
        %1050 = vmatprep.subr.mxu0 0.0
        %1051 = vmatpush1.msra.mxu0 0.0
        %1052 = vmatprep.subr.mxu0 0.0
        %1053 = vmatpush1.msra.mxu0 0.0
        %1054 = vmatprep.subr.mxu0 0.0
        %1055 = vmatpush1.msra.mxu0 0.0
        %1056 = vmatprep.subr.mxu0 0.0
        %1057 = vmatpush1.msra.mxu0 0.0
        %1058 = vmatprep.subr.mxu0 0.0
        %1059 = vmatpush1.msra.mxu0 0.0
        %1060 = vmatprep.subr.mxu0 0.0
        %1061 = vmatpush1.msra.mxu0 0.0
        %1062 = vmatprep.subr.mxu0 0.0
        %1063 = vmatpush1.msra.mxu0 %v1028
        %1064 = vmatprep.subr.mxu0 0.0
        %1065 = vmatpush2.msra.mxu0 0.0
        %1066 = vmatprep.subr.mxu0 0.0
        %1067 = vmatpush2.msra.mxu0 0.0
        %1068 = vmatprep.subr.mxu0 0.0
        %1069 = vmatpush2.msra.mxu0 0.0
        %1070 = vmatprep.subr.mxu0 0.0
        %1071 = vmatpush2.msra.mxu0 0.0
        %1072 = vmatprep.subr.mxu0 0.0
        %1073 = vmatpush2.msra.mxu0 0.0
        %1074 = vmatprep.subr.mxu0 0.0
        %1075 = vmatpush2.msra.mxu0 0.0
        %1076 = vmatprep.subr.mxu0 0.0
        %1077 = vmatpush2.msra.mxu0 0.0
        %1078 = vmatprep.subr.mxu0 0.0
        %1079 = vmatpush2.msra.mxu0 0.0
        %1080 = vmatprep.subr.mxu0 0.0
        %1081 = vmatpush2.msra.mxu0 0.0
        %1082 = vmatprep.subr.mxu0 0.0
        %1083 = vmatpush2.msra.mxu0 0.0
        %1084 = vmatprep.subr.mxu0 0.0
        %1085 = vmatpush2.msra.mxu0 0.0
        %1086 = vmatprep.subr.mxu0 0.0
        %1087 = vmatpush2.msra.mxu0 0.0
        %1088 = vmatprep.subr.mxu0 0.0
        %1089 = vmatpush2.msra.mxu0 0.0
        %1090 = vmatprep.subr.mxu0 0.0
        %1091 = vmatpush2.msra.mxu0 0.0
        %1092 = vmatprep.subr.mxu0 0.0
        %1093 = vmatpush2.msra.mxu0 0.0
        %1094 = vmatprep.subr.mxu0 0.0
        %1095 = vmatpush2.msra.mxu0 0.0
        %1096 = vmatprep.mubr.f32.mxu0 0.0
        %1097 = vmatmul.mubr.f32.gmra.mxu0 %v1030
        %v1098 = vpop.f32.mrf.mxu0
        %v1099 = vadd.f32 0.0, %v1098
        %v1100 = vpop.f32.mrf.mxu0
        %1101 = vdwg.mxu0
        %v1102 = vadd.f32 %v1027, %v1099
        %1103 = vst.msk [vmem:[#allocation2] sm:$0xff] %vm615, %v1102
        %s1104 = scalar_lea.vmem %s2, 32
        %v1105 = vld [vmem:[%s1104] sm:$0xff]
        %v1106 = vld [vmem:[%s1104 + $0x8] sm:$0xff]
        %v1107 = vld [vmem:[%s1104 + $0x10] sm:$0xff]
        %v1108 = vld [vmem:[%s1104 + $0x18] sm:$0xff]
        %s1109 = scalar_lea.vmem %s3, 1
        %v1110 = vld [vmem:[%s1109] sm:$0x1]
        %v1112 = vlaneseq
        %v1113 = vshrl.u32 %v1112, 7
        %v1114 = vsub.s32 0, %v1113
        %v1115 = vrot.slane %v1110, %v1114
        %1117 = vmatprep.subr.mxu0 0.0
        %1118 = vmatpush1.msra.mxu0 0.0
        %1119 = vmatprep.subr.mxu0 0.0
        %1120 = vmatpush1.msra.mxu0 0.0
        %1121 = vmatprep.subr.mxu0 0.0
        %1122 = vmatpush1.msra.mxu0 0.0
        %1123 = vmatprep.subr.mxu0 0.0
        %1124 = vmatpush1.msra.mxu0 0.0
        %1125 = vmatprep.subr.mxu0 0.0
        %1126 = vmatpush1.msra.mxu0 0.0
        %1127 = vmatprep.subr.mxu0 0.0
        %1128 = vmatpush1.msra.mxu0 0.0
        %1129 = vmatprep.subr.mxu0 0.0
        %1130 = vmatpush1.msra.mxu0 0.0
        %1131 = vmatprep.subr.mxu0 0.0
        %1132 = vmatpush1.msra.mxu0 0.0
        %1133 = vmatprep.subr.mxu0 0.0
        %1134 = vmatpush1.msra.mxu0 0.0
        %1135 = vmatprep.subr.mxu0 0.0
        %1136 = vmatpush1.msra.mxu0 0.0
        %1137 = vmatprep.subr.mxu0 0.0
        %1138 = vmatpush1.msra.mxu0 0.0
        %1139 = vmatprep.subr.mxu0 0.0
        %1140 = vmatpush1.msra.mxu0 0.0
        %1141 = vmatprep.subr.mxu0 0.0
        %1142 = vmatpush1.msra.mxu0 %v1108
        %1143 = vmatprep.subr.mxu0 0.0
        %1144 = vmatpush1.msra.mxu0 %v1107
        %1145 = vmatprep.subr.mxu0 0.0
        %1146 = vmatpush1.msra.mxu0 %v1106
        %1147 = vmatprep.subr.mxu0 0.0
        %1148 = vmatpush1.msra.mxu0 %v1105
        %1149 = vmatprep.subr.mxu0 0.0
        %1150 = vmatpush2.msra.mxu0 0.0
        %1151 = vmatprep.subr.mxu0 0.0
        %1152 = vmatpush2.msra.mxu0 0.0
        %1153 = vmatprep.subr.mxu0 0.0
        %1154 = vmatpush2.msra.mxu0 0.0
        %1155 = vmatprep.subr.mxu0 0.0
        %1156 = vmatpush2.msra.mxu0 0.0
        %1157 = vmatprep.subr.mxu0 0.0
        %1158 = vmatpush2.msra.mxu0 0.0
        %1159 = vmatprep.subr.mxu0 0.0
        %1160 = vmatpush2.msra.mxu0 0.0
        %1161 = vmatprep.subr.mxu0 0.0
        %1162 = vmatpush2.msra.mxu0 0.0
        %1163 = vmatprep.subr.mxu0 0.0
        %1164 = vmatpush2.msra.mxu0 0.0
        %1165 = vmatprep.subr.mxu0 0.0
        %1166 = vmatpush2.msra.mxu0 0.0
        %1167 = vmatprep.subr.mxu0 0.0
        %1168 = vmatpush2.msra.mxu0 0.0
        %1169 = vmatprep.subr.mxu0 0.0
        %1170 = vmatpush2.msra.mxu0 0.0
        %1171 = vmatprep.subr.mxu0 0.0
        %1172 = vmatpush2.msra.mxu0 0.0
        %1173 = vmatprep.subr.mxu0 0.0
        %1174 = vmatpush2.msra.mxu0 0.0
        %1175 = vmatprep.subr.mxu0 0.0
        %1176 = vmatpush2.msra.mxu0 0.0
        %1177 = vmatprep.subr.mxu0 0.0
        %1178 = vmatpush2.msra.mxu0 0.0
        %1179 = vmatprep.subr.mxu0 0.0
        %1180 = vmatpush2.msra.mxu0 0.0
        %1181 = vmatprep.mubr.f32.mxu0 0.0
        %1182 = vmatmul.mubr.f32.gmra.mxu0 %v629
        %v1183 = vpop.f32.mrf.mxu0
        %v1184 = vadd.f32 %v1115, %v1183
        %v1185 = vpop.f32.mrf.mxu0
        %1186 = vdwg.mxu0
        %s1187 = scalar_lea.vmem %s4, 32
        %v1188 = vld [vmem:[%s1187] sm:$0xff]
        %v1189 = vld [vmem:[%s1187 + $0x8] sm:$0xff]
        %v1190 = vld [vmem:[%s1187 + $0x10] sm:$0xff]
        %v1191 = vld [vmem:[%s1187 + $0x18] sm:$0xff]
        %s1192 = scalar_lea.vmem %s5, 1
        %v1193 = vld [vmem:[%s1192] sm:$0x1]
        %v1195 = vlaneseq
        %v1196 = vshrl.u32 %v1195, 7
        %v1197 = vsub.s32 0, %v1196
        %v1198 = vrot.slane %v1193, %v1197
        %1200 = vmatprep.subr.mxu0 0.0
        %1201 = vmatpush1.msra.mxu0 0.0
        %1202 = vmatprep.subr.mxu0 0.0
        %1203 = vmatpush1.msra.mxu0 0.0
        %1204 = vmatprep.subr.mxu0 0.0
        %1205 = vmatpush1.msra.mxu0 0.0
        %1206 = vmatprep.subr.mxu0 0.0
        %1207 = vmatpush1.msra.mxu0 0.0
        %1208 = vmatprep.subr.mxu0 0.0
        %1209 = vmatpush1.msra.mxu0 0.0
        %1210 = vmatprep.subr.mxu0 0.0
        %1211 = vmatpush1.msra.mxu0 0.0
        %1212 = vmatprep.subr.mxu0 0.0
        %1213 = vmatpush1.msra.mxu0 0.0
        %1214 = vmatprep.subr.mxu0 0.0
        %1215 = vmatpush1.msra.mxu0 0.0
        %1216 = vmatprep.subr.mxu0 0.0
        %1217 = vmatpush1.msra.mxu0 0.0
        %1218 = vmatprep.subr.mxu0 0.0
        %1219 = vmatpush1.msra.mxu0 0.0
        %1220 = vmatprep.subr.mxu0 0.0
        %1221 = vmatpush1.msra.mxu0 0.0
        %1222 = vmatprep.subr.mxu0 0.0
        %1223 = vmatpush1.msra.mxu0 0.0
        %1224 = vmatprep.subr.mxu0 0.0
        %1225 = vmatpush1.msra.mxu0 %v1191
        %1226 = vmatprep.subr.mxu0 0.0
        %1227 = vmatpush1.msra.mxu0 %v1190
        %1228 = vmatprep.subr.mxu0 0.0
        %1229 = vmatpush1.msra.mxu0 %v1189
        %1230 = vmatprep.subr.mxu0 0.0
        %1231 = vmatpush1.msra.mxu0 %v1188
        %1232 = vmatprep.subr.mxu0 0.0
        %1233 = vmatpush2.msra.mxu0 0.0
        %1234 = vmatprep.subr.mxu0 0.0
        %1235 = vmatpush2.msra.mxu0 0.0
        %1236 = vmatprep.subr.mxu0 0.0
        %1237 = vmatpush2.msra.mxu0 0.0
        %1238 = vmatprep.subr.mxu0 0.0
        %1239 = vmatpush2.msra.mxu0 0.0
        %1240 = vmatprep.subr.mxu0 0.0
        %1241 = vmatpush2.msra.mxu0 0.0
        %1242 = vmatprep.subr.mxu0 0.0
        %1243 = vmatpush2.msra.mxu0 0.0
        %1244 = vmatprep.subr.mxu0 0.0
        %1245 = vmatpush2.msra.mxu0 0.0
        %1246 = vmatprep.subr.mxu0 0.0
        %1247 = vmatpush2.msra.mxu0 0.0
        %1248 = vmatprep.subr.mxu0 0.0
        %1249 = vmatpush2.msra.mxu0 0.0
        %1250 = vmatprep.subr.mxu0 0.0
        %1251 = vmatpush2.msra.mxu0 0.0
        %1252 = vmatprep.subr.mxu0 0.0
        %1253 = vmatpush2.msra.mxu0 0.0
        %1254 = vmatprep.subr.mxu0 0.0
        %1255 = vmatpush2.msra.mxu0 0.0
        %1256 = vmatprep.subr.mxu0 0.0
        %1257 = vmatpush2.msra.mxu0 0.0
        %1258 = vmatprep.subr.mxu0 0.0
        %1259 = vmatpush2.msra.mxu0 0.0
        %1260 = vmatprep.subr.mxu0 0.0
        %1261 = vmatpush2.msra.mxu0 0.0
        %1262 = vmatprep.subr.mxu0 0.0
        %1263 = vmatpush2.msra.mxu0 0.0
        %1264 = vmatprep.mubr.f32.mxu0 0.0
        %1265 = vmatmul.mubr.f32.gmra.mxu0 %v713
        %v1266 = vpop.f32.mrf.mxu0
        %v1267 = vadd.f32 %v1198, %v1266
        %v1268 = vpop.f32.mrf.mxu0
        %1269 = vdwg.mxu0
        %s1270 = scalar_lea.vmem %s6, 32
        %v1271 = vld [vmem:[%s1270] sm:$0xff]
        %v1272 = vld [vmem:[%s1270 + $0x8] sm:$0xff]
        %v1273 = vld [vmem:[%s1270 + $0x10] sm:$0xff]
        %v1274 = vld [vmem:[%s1270 + $0x18] sm:$0xff]
        %s1275 = scalar_lea.vmem %s7, 1
        %v1276 = vld [vmem:[%s1275] sm:$0x1]
        %v1278 = vlaneseq
        %v1279 = vshrl.u32 %v1278, 7
        %v1280 = vsub.s32 0, %v1279
        %v1281 = vrot.slane %v1276, %v1280
        %1283 = vmatprep.subr.mxu0 0.0
        %1284 = vmatpush1.msra.mxu0 0.0
        %1285 = vmatprep.subr.mxu0 0.0
        %1286 = vmatpush1.msra.mxu0 0.0
        %1287 = vmatprep.subr.mxu0 0.0
        %1288 = vmatpush1.msra.mxu0 0.0
        %1289 = vmatprep.subr.mxu0 0.0
        %1290 = vmatpush1.msra.mxu0 0.0
        %1291 = vmatprep.subr.mxu0 0.0
        %1292 = vmatpush1.msra.mxu0 0.0
        %1293 = vmatprep.subr.mxu0 0.0
        %1294 = vmatpush1.msra.mxu0 0.0
        %1295 = vmatprep.subr.mxu0 0.0
        %1296 = vmatpush1.msra.mxu0 0.0
        %1297 = vmatprep.subr.mxu0 0.0
        %1298 = vmatpush1.msra.mxu0 0.0
        %1299 = vmatprep.subr.mxu0 0.0
        %1300 = vmatpush1.msra.mxu0 0.0
        %1301 = vmatprep.subr.mxu0 0.0
        %1302 = vmatpush1.msra.mxu0 0.0
        %1303 = vmatprep.subr.mxu0 0.0
        %1304 = vmatpush1.msra.mxu0 0.0
        %1305 = vmatprep.subr.mxu0 0.0
        %1306 = vmatpush1.msra.mxu0 0.0
        %1307 = vmatprep.subr.mxu0 0.0
        %1308 = vmatpush1.msra.mxu0 %v1274
        %1309 = vmatprep.subr.mxu0 0.0
        %1310 = vmatpush1.msra.mxu0 %v1273
        %1311 = vmatprep.subr.mxu0 0.0
        %1312 = vmatpush1.msra.mxu0 %v1272
        %1313 = vmatprep.subr.mxu0 0.0
        %1314 = vmatpush1.msra.mxu0 %v1271
        %1315 = vmatprep.subr.mxu0 0.0
        %1316 = vmatpush2.msra.mxu0 0.0
        %1317 = vmatprep.subr.mxu0 0.0
        %1318 = vmatpush2.msra.mxu0 0.0
        %1319 = vmatprep.subr.mxu0 0.0
        %1320 = vmatpush2.msra.mxu0 0.0
        %1321 = vmatprep.subr.mxu0 0.0
        %1322 = vmatpush2.msra.mxu0 0.0
        %1323 = vmatprep.subr.mxu0 0.0
        %1324 = vmatpush2.msra.mxu0 0.0
        %1325 = vmatprep.subr.mxu0 0.0
        %1326 = vmatpush2.msra.mxu0 0.0
        %1327 = vmatprep.subr.mxu0 0.0
        %1328 = vmatpush2.msra.mxu0 0.0
        %1329 = vmatprep.subr.mxu0 0.0
        %1330 = vmatpush2.msra.mxu0 0.0
        %1331 = vmatprep.subr.mxu0 0.0
        %1332 = vmatpush2.msra.mxu0 0.0
        %1333 = vmatprep.subr.mxu0 0.0
        %1334 = vmatpush2.msra.mxu0 0.0
        %1335 = vmatprep.subr.mxu0 0.0
        %1336 = vmatpush2.msra.mxu0 0.0
        %1337 = vmatprep.subr.mxu0 0.0
        %1338 = vmatpush2.msra.mxu0 0.0
        %1339 = vmatprep.subr.mxu0 0.0
        %1340 = vmatpush2.msra.mxu0 0.0
        %1341 = vmatprep.subr.mxu0 0.0
        %1342 = vmatpush2.msra.mxu0 0.0
        %1343 = vmatprep.subr.mxu0 0.0
        %1344 = vmatpush2.msra.mxu0 0.0
        %1345 = vmatprep.subr.mxu0 0.0
        %1346 = vmatpush2.msra.mxu0 0.0
        %1347 = vmatprep.mubr.f32.mxu0 0.0
        %1348 = vmatmul.mubr.f32.gmra.mxu0 %v713
        %v1349 = vpop.f32.mrf.mxu0
        %v1350 = vadd.f32 %v1281, %v1349
        %v1351 = vpop.f32.mrf.mxu0
        %1352 = vdwg.mxu0
        %v1354 = vsel %vm866, %v1184, 0
        %v1357 = vsel %vm866, %v1267, 0
        %1359 = vmatprep.subr.mxu0 0.0
        %1360 = vmatpush1.xpose.msra.mxu0 0.0
        %1361 = vmatprep.subr.mxu0 0.0
        %1362 = vmatpush1.xpose.msra.mxu0 0.0
        %1363 = vmatprep.subr.mxu0 0.0
        %1364 = vmatpush1.xpose.msra.mxu0 0.0
        %1365 = vmatprep.subr.mxu0 0.0
        %1366 = vmatpush1.xpose.msra.mxu0 0.0
        %1367 = vmatprep.subr.mxu0 0.0
        %1368 = vmatpush1.xpose.msra.mxu0 0.0
        %1369 = vmatprep.subr.mxu0 0.0
        %1370 = vmatpush1.xpose.msra.mxu0 0.0
        %1371 = vmatprep.subr.mxu0 0.0
        %1372 = vmatpush1.xpose.msra.mxu0 0.0
        %1373 = vmatprep.subr.mxu0 0.0
        %1374 = vmatpush1.xpose.msra.mxu0 0.0
        %1375 = vmatprep.subr.mxu0 0.0
        %1376 = vmatpush1.xpose.msra.mxu0 0.0
        %1377 = vmatprep.subr.mxu0 0.0
        %1378 = vmatpush1.xpose.msra.mxu0 0.0
        %1379 = vmatprep.subr.mxu0 0.0
        %1380 = vmatpush1.xpose.msra.mxu0 0.0
        %1381 = vmatprep.subr.mxu0 0.0
        %1382 = vmatpush1.xpose.msra.mxu0 0.0
        %1383 = vmatprep.subr.mxu0 0.0
        %1384 = vmatpush1.xpose.msra.mxu0 0.0
        %1385 = vmatprep.subr.mxu0 0.0
        %1386 = vmatpush1.xpose.msra.mxu0 0.0
        %1387 = vmatprep.subr.mxu0 0.0
        %1388 = vmatpush1.xpose.msra.mxu0 0.0
        %1389 = vmatprep.subr.mxu0 0.0
        %1390 = vmatpush1.xpose.msra.mxu0 %v1357
        %1391 = vmatprep.subr.mxu0 0.0
        %1392 = vmatpush2.xpose.msra.mxu0 0.0
        %1393 = vmatprep.subr.mxu0 0.0
        %1394 = vmatpush2.xpose.msra.mxu0 0.0
        %1395 = vmatprep.subr.mxu0 0.0
        %1396 = vmatpush2.xpose.msra.mxu0 0.0
        %1397 = vmatprep.subr.mxu0 0.0
        %1398 = vmatpush2.xpose.msra.mxu0 0.0
        %1399 = vmatprep.subr.mxu0 0.0
        %1400 = vmatpush2.xpose.msra.mxu0 0.0
        %1401 = vmatprep.subr.mxu0 0.0
        %1402 = vmatpush2.xpose.msra.mxu0 0.0
        %1403 = vmatprep.subr.mxu0 0.0
        %1404 = vmatpush2.xpose.msra.mxu0 0.0
        %1405 = vmatprep.subr.mxu0 0.0
        %1406 = vmatpush2.xpose.msra.mxu0 0.0
        %1407 = vmatprep.subr.mxu0 0.0
        %1408 = vmatpush2.xpose.msra.mxu0 0.0
        %1409 = vmatprep.subr.mxu0 0.0
        %1410 = vmatpush2.xpose.msra.mxu0 0.0
        %1411 = vmatprep.subr.mxu0 0.0
        %1412 = vmatpush2.xpose.msra.mxu0 0.0
        %1413 = vmatprep.subr.mxu0 0.0
        %1414 = vmatpush2.xpose.msra.mxu0 0.0
        %1415 = vmatprep.subr.mxu0 0.0
        %1416 = vmatpush2.xpose.msra.mxu0 0.0
        %1417 = vmatprep.subr.mxu0 0.0
        %1418 = vmatpush2.xpose.msra.mxu0 0.0
        %1419 = vmatprep.subr.mxu0 0.0
        %1420 = vmatpush2.xpose.msra.mxu0 0.0
        %1421 = vmatprep.subr.mxu0 0.0
        %1422 = vmatpush2.xpose.msra.mxu0 0.0
        %1423 = vmatprep.mubr.f32.mxu0 0.0
        %1424 = vmatmul.mubr.f32.gmra.mxu0 %v1354
        %v1425 = vpop.f32.mrf.mxu0
        %v1426 = vadd.f32 0.0, %v1425
        %v1427 = vpop.f32.mrf.mxu0
        %1428 = vdwg.mxu0
        %v1429 = vsel %vm866, %v1426, -inf
        %1430 = vmax.xlane.f32.xlu0 %v1429
        %v1431 = vpop.xlane.xlu0 %1430
        %v1432 = vsub.f32 %v1426, %v1431
        %v1433 = vmul.f32 %v1432, 1.442695
        %v1434 = vpow.pop %v1433
        %v1435 = vsel %vm866, %v1434, 0.0
        %1436 = vadd.xlane.f32.xlu0 %v1435
        %v1437 = vpop.xlane.xlu0 %1436
        %v1438 = vrcp.pop %v1437
        %v1439 = vmul.f32 %v1434, %v1438
        %v1441 = vsel %vm866, %v1439, 0
        %1443 = vmatprep.subr.mxu0 0.0
        %1444 = vmatpush1.msra.mxu0 0.0
        %1445 = vmatprep.subr.mxu0 0.0
        %1446 = vmatpush1.msra.mxu0 0.0
        %1447 = vmatprep.subr.mxu0 0.0
        %1448 = vmatpush1.msra.mxu0 0.0
        %1449 = vmatprep.subr.mxu0 0.0
        %1450 = vmatpush1.msra.mxu0 0.0
        %1451 = vmatprep.subr.mxu0 0.0
        %1452 = vmatpush1.msra.mxu0 0.0
        %1453 = vmatprep.subr.mxu0 0.0
        %1454 = vmatpush1.msra.mxu0 0.0
        %1455 = vmatprep.subr.mxu0 0.0
        %1456 = vmatpush1.msra.mxu0 0.0
        %1457 = vmatprep.subr.mxu0 0.0
        %1458 = vmatpush1.msra.mxu0 0.0
        %1459 = vmatprep.subr.mxu0 0.0
        %1460 = vmatpush1.msra.mxu0 0.0
        %1461 = vmatprep.subr.mxu0 0.0
        %1462 = vmatpush1.msra.mxu0 0.0
        %1463 = vmatprep.subr.mxu0 0.0
        %1464 = vmatpush1.msra.mxu0 0.0
        %1465 = vmatprep.subr.mxu0 0.0
        %1466 = vmatpush1.msra.mxu0 0.0
        %1467 = vmatprep.subr.mxu0 0.0
        %1468 = vmatpush1.msra.mxu0 0.0
        %1469 = vmatprep.subr.mxu0 0.0
        %1470 = vmatpush1.msra.mxu0 0.0
        %1471 = vmatprep.subr.mxu0 0.0
        %1472 = vmatpush1.msra.mxu0 0.0
        %1473 = vmatprep.subr.mxu0 0.0
        %1474 = vmatpush1.msra.mxu0 %v1350
        %1475 = vmatprep.subr.mxu0 0.0
        %1476 = vmatpush2.msra.mxu0 0.0
        %1477 = vmatprep.subr.mxu0 0.0
        %1478 = vmatpush2.msra.mxu0 0.0
        %1479 = vmatprep.subr.mxu0 0.0
        %1480 = vmatpush2.msra.mxu0 0.0
        %1481 = vmatprep.subr.mxu0 0.0
        %1482 = vmatpush2.msra.mxu0 0.0
        %1483 = vmatprep.subr.mxu0 0.0
        %1484 = vmatpush2.msra.mxu0 0.0
        %1485 = vmatprep.subr.mxu0 0.0
        %1486 = vmatpush2.msra.mxu0 0.0
        %1487 = vmatprep.subr.mxu0 0.0
        %1488 = vmatpush2.msra.mxu0 0.0
        %1489 = vmatprep.subr.mxu0 0.0
        %1490 = vmatpush2.msra.mxu0 0.0
        %1491 = vmatprep.subr.mxu0 0.0
        %1492 = vmatpush2.msra.mxu0 0.0
        %1493 = vmatprep.subr.mxu0 0.0
        %1494 = vmatpush2.msra.mxu0 0.0
        %1495 = vmatprep.subr.mxu0 0.0
        %1496 = vmatpush2.msra.mxu0 0.0
        %1497 = vmatprep.subr.mxu0 0.0
        %1498 = vmatpush2.msra.mxu0 0.0
        %1499 = vmatprep.subr.mxu0 0.0
        %1500 = vmatpush2.msra.mxu0 0.0
        %1501 = vmatprep.subr.mxu0 0.0
        %1502 = vmatpush2.msra.mxu0 0.0
        %1503 = vmatprep.subr.mxu0 0.0
        %1504 = vmatpush2.msra.mxu0 0.0
        %1505 = vmatprep.subr.mxu0 0.0
        %1506 = vmatpush2.msra.mxu0 0.0
        %1507 = vmatprep.mubr.f32.mxu0 0.0
        %1508 = vmatmul.mubr.f32.gmra.mxu0 %v1441
        %v1509 = vpop.f32.mrf.mxu0
        %v1510 = vadd.f32 0.0, %v1509
        %v1511 = vpop.f32.mrf.mxu0
        %1512 = vdwg.mxu0
        %v1513 = vld [vmem:[#allocation2] sm:$0xff]
        %s1514 = scalar_lea.vmem %s8, 8
        %v1515 = vld [vmem:[%s1514] sm:$0xff]
        %v1517 = vsel %vm866, %v1510, 0
        %1519 = vmatprep.subr.mxu0 0.0
        %1520 = vmatpush1.msra.mxu0 0.0
        %1521 = vmatprep.subr.mxu0 0.0
        %1522 = vmatpush1.msra.mxu0 0.0
        %1523 = vmatprep.subr.mxu0 0.0
        %1524 = vmatpush1.msra.mxu0 0.0
        %1525 = vmatprep.subr.mxu0 0.0
        %1526 = vmatpush1.msra.mxu0 0.0
        %1527 = vmatprep.subr.mxu0 0.0
        %1528 = vmatpush1.msra.mxu0 0.0
        %1529 = vmatprep.subr.mxu0 0.0
        %1530 = vmatpush1.msra.mxu0 0.0
        %1531 = vmatprep.subr.mxu0 0.0
        %1532 = vmatpush1.msra.mxu0 0.0
        %1533 = vmatprep.subr.mxu0 0.0
        %1534 = vmatpush1.msra.mxu0 0.0
        %1535 = vmatprep.subr.mxu0 0.0
        %1536 = vmatpush1.msra.mxu0 0.0
        %1537 = vmatprep.subr.mxu0 0.0
        %1538 = vmatpush1.msra.mxu0 0.0
        %1539 = vmatprep.subr.mxu0 0.0
        %1540 = vmatpush1.msra.mxu0 0.0
        %1541 = vmatprep.subr.mxu0 0.0
        %1542 = vmatpush1.msra.mxu0 0.0
        %1543 = vmatprep.subr.mxu0 0.0
        %1544 = vmatpush1.msra.mxu0 0.0
        %1545 = vmatprep.subr.mxu0 0.0
        %1546 = vmatpush1.msra.mxu0 0.0
        %1547 = vmatprep.subr.mxu0 0.0
        %1548 = vmatpush1.msra.mxu0 0.0
        %1549 = vmatprep.subr.mxu0 0.0
        %1550 = vmatpush1.msra.mxu0 %v1515
        %1551 = vmatprep.subr.mxu0 0.0
        %1552 = vmatpush2.msra.mxu0 0.0
        %1553 = vmatprep.subr.mxu0 0.0
        %1554 = vmatpush2.msra.mxu0 0.0
        %1555 = vmatprep.subr.mxu0 0.0
        %1556 = vmatpush2.msra.mxu0 0.0
        %1557 = vmatprep.subr.mxu0 0.0
        %1558 = vmatpush2.msra.mxu0 0.0
        %1559 = vmatprep.subr.mxu0 0.0
        %1560 = vmatpush2.msra.mxu0 0.0
        %1561 = vmatprep.subr.mxu0 0.0
        %1562 = vmatpush2.msra.mxu0 0.0
        %1563 = vmatprep.subr.mxu0 0.0
        %1564 = vmatpush2.msra.mxu0 0.0
        %1565 = vmatprep.subr.mxu0 0.0
        %1566 = vmatpush2.msra.mxu0 0.0
        %1567 = vmatprep.subr.mxu0 0.0
        %1568 = vmatpush2.msra.mxu0 0.0
        %1569 = vmatprep.subr.mxu0 0.0
        %1570 = vmatpush2.msra.mxu0 0.0
        %1571 = vmatprep.subr.mxu0 0.0
        %1572 = vmatpush2.msra.mxu0 0.0
        %1573 = vmatprep.subr.mxu0 0.0
        %1574 = vmatpush2.msra.mxu0 0.0
        %1575 = vmatprep.subr.mxu0 0.0
        %1576 = vmatpush2.msra.mxu0 0.0
        %1577 = vmatprep.subr.mxu0 0.0
        %1578 = vmatpush2.msra.mxu0 0.0
        %1579 = vmatprep.subr.mxu0 0.0
        %1580 = vmatpush2.msra.mxu0 0.0
        %1581 = vmatprep.subr.mxu0 0.0
        %1582 = vmatpush2.msra.mxu0 0.0
        %1583 = vmatprep.mubr.f32.mxu0 0.0
        %1584 = vmatmul.mubr.f32.gmra.mxu0 %v1517
        %v1585 = vpop.f32.mrf.mxu0
        %v1586 = vadd.f32 0.0, %v1585
        %v1587 = vpop.f32.mrf.mxu0
        %1588 = vdwg.mxu0
        %v1589 = vadd.f32 %v1513, %v1586
        %1590 = vst.msk [vmem:[#allocation2] sm:$0xff] %vm615, %v1589
        %s1591 = scalar_lea.vmem %s2, 64
        %v1592 = vld [vmem:[%s1591] sm:$0xff]
        %v1593 = vld [vmem:[%s1591 + $0x8] sm:$0xff]
        %v1594 = vld [vmem:[%s1591 + $0x10] sm:$0xff]
        %v1595 = vld [vmem:[%s1591 + $0x18] sm:$0xff]
        %s1596 = scalar_lea.vmem %s3, 2
        %v1597 = vld [vmem:[%s1596] sm:$0x1]
        %v1599 = vlaneseq
        %v1600 = vshrl.u32 %v1599, 7
        %v1601 = vsub.s32 0, %v1600
        %v1602 = vrot.slane %v1597, %v1601
        %1604 = vmatprep.subr.mxu0 0.0
        %1605 = vmatpush1.msra.mxu0 0.0
        %1606 = vmatprep.subr.mxu0 0.0
        %1607 = vmatpush1.msra.mxu0 0.0
        %1608 = vmatprep.subr.mxu0 0.0
        %1609 = vmatpush1.msra.mxu0 0.0
        %1610 = vmatprep.subr.mxu0 0.0
        %1611 = vmatpush1.msra.mxu0 0.0
        %1612 = vmatprep.subr.mxu0 0.0
        %1613 = vmatpush1.msra.mxu0 0.0
        %1614 = vmatprep.subr.mxu0 0.0
        %1615 = vmatpush1.msra.mxu0 0.0
        %1616 = vmatprep.subr.mxu0 0.0
        %1617 = vmatpush1.msra.mxu0 0.0
        %1618 = vmatprep.subr.mxu0 0.0
        %1619 = vmatpush1.msra.mxu0 0.0
        %1620 = vmatprep.subr.mxu0 0.0
        %1621 = vmatpush1.msra.mxu0 0.0
        %1622 = vmatprep.subr.mxu0 0.0
        %1623 = vmatpush1.msra.mxu0 0.0
        %1624 = vmatprep.subr.mxu0 0.0
        %1625 = vmatpush1.msra.mxu0 0.0
        %1626 = vmatprep.subr.mxu0 0.0
        %1627 = vmatpush1.msra.mxu0 0.0
        %1628 = vmatprep.subr.mxu0 0.0
        %1629 = vmatpush1.msra.mxu0 %v1595
        %1630 = vmatprep.subr.mxu0 0.0
        %1631 = vmatpush1.msra.mxu0 %v1594
        %1632 = vmatprep.subr.mxu0 0.0
        %1633 = vmatpush1.msra.mxu0 %v1593
        %1634 = vmatprep.subr.mxu0 0.0
        %1635 = vmatpush1.msra.mxu0 %v1592
        %1636 = vmatprep.subr.mxu0 0.0
        %1637 = vmatpush2.msra.mxu0 0.0
        %1638 = vmatprep.subr.mxu0 0.0
        %1639 = vmatpush2.msra.mxu0 0.0
        %1640 = vmatprep.subr.mxu0 0.0
        %1641 = vmatpush2.msra.mxu0 0.0
        %1642 = vmatprep.subr.mxu0 0.0
        %1643 = vmatpush2.msra.mxu0 0.0
        %1644 = vmatprep.subr.mxu0 0.0
        %1645 = vmatpush2.msra.mxu0 0.0
        %1646 = vmatprep.subr.mxu0 0.0
        %1647 = vmatpush2.msra.mxu0 0.0
        %1648 = vmatprep.subr.mxu0 0.0
        %1649 = vmatpush2.msra.mxu0 0.0
        %1650 = vmatprep.subr.mxu0 0.0
        %1651 = vmatpush2.msra.mxu0 0.0
        %1652 = vmatprep.subr.mxu0 0.0
        %1653 = vmatpush2.msra.mxu0 0.0
        %1654 = vmatprep.subr.mxu0 0.0
        %1655 = vmatpush2.msra.mxu0 0.0
        %1656 = vmatprep.subr.mxu0 0.0
        %1657 = vmatpush2.msra.mxu0 0.0
        %1658 = vmatprep.subr.mxu0 0.0
        %1659 = vmatpush2.msra.mxu0 0.0
        %1660 = vmatprep.subr.mxu0 0.0
        %1661 = vmatpush2.msra.mxu0 0.0
        %1662 = vmatprep.subr.mxu0 0.0
        %1663 = vmatpush2.msra.mxu0 0.0
        %1664 = vmatprep.subr.mxu0 0.0
        %1665 = vmatpush2.msra.mxu0 0.0
        %1666 = vmatprep.subr.mxu0 0.0
        %1667 = vmatpush2.msra.mxu0 0.0
        %1668 = vmatprep.mubr.f32.mxu0 0.0
        %1669 = vmatmul.mubr.f32.gmra.mxu0 %v629
        %v1670 = vpop.f32.mrf.mxu0
        %v1671 = vadd.f32 %v1602, %v1670
        %v1672 = vpop.f32.mrf.mxu0
        %1673 = vdwg.mxu0
        %s1674 = scalar_lea.vmem %s4, 64
        %v1675 = vld [vmem:[%s1674] sm:$0xff]
        %v1676 = vld [vmem:[%s1674 + $0x8] sm:$0xff]
        %v1677 = vld [vmem:[%s1674 + $0x10] sm:$0xff]
        %v1678 = vld [vmem:[%s1674 + $0x18] sm:$0xff]
        %s1679 = scalar_lea.vmem %s5, 2
        %v1680 = vld [vmem:[%s1679] sm:$0x1]
        %v1682 = vlaneseq
        %v1683 = vshrl.u32 %v1682, 7
        %v1684 = vsub.s32 0, %v1683
        %v1685 = vrot.slane %v1680, %v1684
        %1687 = vmatprep.subr.mxu0 0.0
        %1688 = vmatpush1.msra.mxu0 0.0
        %1689 = vmatprep.subr.mxu0 0.0
        %1690 = vmatpush1.msra.mxu0 0.0
        %1691 = vmatprep.subr.mxu0 0.0
        %1692 = vmatpush1.msra.mxu0 0.0
        %1693 = vmatprep.subr.mxu0 0.0
        %1694 = vmatpush1.msra.mxu0 0.0
        %1695 = vmatprep.subr.mxu0 0.0
        %1696 = vmatpush1.msra.mxu0 0.0
        %1697 = vmatprep.subr.mxu0 0.0
        %1698 = vmatpush1.msra.mxu0 0.0
        %1699 = vmatprep.subr.mxu0 0.0
        %1700 = vmatpush1.msra.mxu0 0.0
        %1701 = vmatprep.subr.mxu0 0.0
        %1702 = vmatpush1.msra.mxu0 0.0
        %1703 = vmatprep.subr.mxu0 0.0
        %1704 = vmatpush1.msra.mxu0 0.0
        %1705 = vmatprep.subr.mxu0 0.0
        %1706 = vmatpush1.msra.mxu0 0.0
        %1707 = vmatprep.subr.mxu0 0.0
        %1708 = vmatpush1.msra.mxu0 0.0
        %1709 = vmatprep.subr.mxu0 0.0
        %1710 = vmatpush1.msra.mxu0 0.0
        %1711 = vmatprep.subr.mxu0 0.0
        %1712 = vmatpush1.msra.mxu0 %v1678
        %1713 = vmatprep.subr.mxu0 0.0
        %1714 = vmatpush1.msra.mxu0 %v1677
        %1715 = vmatprep.subr.mxu0 0.0
        %1716 = vmatpush1.msra.mxu0 %v1676
        %1717 = vmatprep.subr.mxu0 0.0
        %1718 = vmatpush1.msra.mxu0 %v1675
        %1719 = vmatprep.subr.mxu0 0.0
        %1720 = vmatpush2.msra.mxu0 0.0
        %1721 = vmatprep.subr.mxu0 0.0
        %1722 = vmatpush2.msra.mxu0 0.0
        %1723 = vmatprep.subr.mxu0 0.0
        %1724 = vmatpush2.msra.mxu0 0.0
        %1725 = vmatprep.subr.mxu0 0.0
        %1726 = vmatpush2.msra.mxu0 0.0
        %1727 = vmatprep.subr.mxu0 0.0
        %1728 = vmatpush2.msra.mxu0 0.0
        %1729 = vmatprep.subr.mxu0 0.0
        %1730 = vmatpush2.msra.mxu0 0.0
        %1731 = vmatprep.subr.mxu0 0.0
        %1732 = vmatpush2.msra.mxu0 0.0
        %1733 = vmatprep.subr.mxu0 0.0
        %1734 = vmatpush2.msra.mxu0 0.0
        %1735 = vmatprep.subr.mxu0 0.0
        %1736 = vmatpush2.msra.mxu0 0.0
        %1737 = vmatprep.subr.mxu0 0.0
        %1738 = vmatpush2.msra.mxu0 0.0
        %1739 = vmatprep.subr.mxu0 0.0
        %1740 = vmatpush2.msra.mxu0 0.0
        %1741 = vmatprep.subr.mxu0 0.0
        %1742 = vmatpush2.msra.mxu0 0.0
        %1743 = vmatprep.subr.mxu0 0.0
        %1744 = vmatpush2.msra.mxu0 0.0
        %1745 = vmatprep.subr.mxu0 0.0
        %1746 = vmatpush2.msra.mxu0 0.0
        %1747 = vmatprep.subr.mxu0 0.0
        %1748 = vmatpush2.msra.mxu0 0.0
        %1749 = vmatprep.subr.mxu0 0.0
        %1750 = vmatpush2.msra.mxu0 0.0
        %1751 = vmatprep.mubr.f32.mxu0 0.0
        %1752 = vmatmul.mubr.f32.gmra.mxu0 %v713
        %v1753 = vpop.f32.mrf.mxu0
        %v1754 = vadd.f32 %v1685, %v1753
        %v1755 = vpop.f32.mrf.mxu0
        %1756 = vdwg.mxu0
        %s1757 = scalar_lea.vmem %s6, 64
        %v1758 = vld [vmem:[%s1757] sm:$0xff]
        %v1759 = vld [vmem:[%s1757 + $0x8] sm:$0xff]
        %v1760 = vld [vmem:[%s1757 + $0x10] sm:$0xff]
        %v1761 = vld [vmem:[%s1757 + $0x18] sm:$0xff]
        %s1762 = scalar_lea.vmem %s7, 2
        %v1763 = vld [vmem:[%s1762] sm:$0x1]
        %v1765 = vlaneseq
        %v1766 = vshrl.u32 %v1765, 7
        %v1767 = vsub.s32 0, %v1766
        %v1768 = vrot.slane %v1763, %v1767
        %1770 = vmatprep.subr.mxu0 0.0
        %1771 = vmatpush1.msra.mxu0 0.0
        %1772 = vmatprep.subr.mxu0 0.0
        %1773 = vmatpush1.msra.mxu0 0.0
        %1774 = vmatprep.subr.mxu0 0.0
        %1775 = vmatpush1.msra.mxu0 0.0
        %1776 = vmatprep.subr.mxu0 0.0
        %1777 = vmatpush1.msra.mxu0 0.0
        %1778 = vmatprep.subr.mxu0 0.0
        %1779 = vmatpush1.msra.mxu0 0.0
        %1780 = vmatprep.subr.mxu0 0.0
        %1781 = vmatpush1.msra.mxu0 0.0
        %1782 = vmatprep.subr.mxu0 0.0
        %1783 = vmatpush1.msra.mxu0 0.0
        %1784 = vmatprep.subr.mxu0 0.0
        %1785 = vmatpush1.msra.mxu0 0.0
        %1786 = vmatprep.subr.mxu0 0.0
        %1787 = vmatpush1.msra.mxu0 0.0
        %1788 = vmatprep.subr.mxu0 0.0
        %1789 = vmatpush1.msra.mxu0 0.0
        %1790 = vmatprep.subr.mxu0 0.0
        %1791 = vmatpush1.msra.mxu0 0.0
        %1792 = vmatprep.subr.mxu0 0.0
        %1793 = vmatpush1.msra.mxu0 0.0
        %1794 = vmatprep.subr.mxu0 0.0
        %1795 = vmatpush1.msra.mxu0 %v1761
        %1796 = vmatprep.subr.mxu0 0.0
        %1797 = vmatpush1.msra.mxu0 %v1760
        %1798 = vmatprep.subr.mxu0 0.0
        %1799 = vmatpush1.msra.mxu0 %v1759
        %1800 = vmatprep.subr.mxu0 0.0
        %1801 = vmatpush1.msra.mxu0 %v1758
        %1802 = vmatprep.subr.mxu0 0.0
        %1803 = vmatpush2.msra.mxu0 0.0
        %1804 = vmatprep.subr.mxu0 0.0
        %1805 = vmatpush2.msra.mxu0 0.0
        %1806 = vmatprep.subr.mxu0 0.0
        %1807 = vmatpush2.msra.mxu0 0.0
        %1808 = vmatprep.subr.mxu0 0.0
        %1809 = vmatpush2.msra.mxu0 0.0
        %1810 = vmatprep.subr.mxu0 0.0
        %1811 = vmatpush2.msra.mxu0 0.0
        %1812 = vmatprep.subr.mxu0 0.0
        %1813 = vmatpush2.msra.mxu0 0.0
        %1814 = vmatprep.subr.mxu0 0.0
        %1815 = vmatpush2.msra.mxu0 0.0
        %1816 = vmatprep.subr.mxu0 0.0
        %1817 = vmatpush2.msra.mxu0 0.0
        %1818 = vmatprep.subr.mxu0 0.0
        %1819 = vmatpush2.msra.mxu0 0.0
        %1820 = vmatprep.subr.mxu0 0.0
        %1821 = vmatpush2.msra.mxu0 0.0
        %1822 = vmatprep.subr.mxu0 0.0
        %1823 = vmatpush2.msra.mxu0 0.0
        %1824 = vmatprep.subr.mxu0 0.0
        %1825 = vmatpush2.msra.mxu0 0.0
        %1826 = vmatprep.subr.mxu0 0.0
        %1827 = vmatpush2.msra.mxu0 0.0
        %1828 = vmatprep.subr.mxu0 0.0
        %1829 = vmatpush2.msra.mxu0 0.0
        %1830 = vmatprep.subr.mxu0 0.0
        %1831 = vmatpush2.msra.mxu0 0.0
        %1832 = vmatprep.subr.mxu0 0.0
        %1833 = vmatpush2.msra.mxu0 0.0
        %1834 = vmatprep.mubr.f32.mxu0 0.0
        %1835 = vmatmul.mubr.f32.gmra.mxu0 %v713
        %v1836 = vpop.f32.mrf.mxu0
        %v1837 = vadd.f32 %v1768, %v1836
        %v1838 = vpop.f32.mrf.mxu0
        %1839 = vdwg.mxu0
        %v1841 = vsel %vm866, %v1671, 0
        %v1844 = vsel %vm866, %v1754, 0
        %1846 = vmatprep.subr.mxu0 0.0
        %1847 = vmatpush1.xpose.msra.mxu0 0.0
        %1848 = vmatprep.subr.mxu0 0.0
        %1849 = vmatpush1.xpose.msra.mxu0 0.0
        %1850 = vmatprep.subr.mxu0 0.0
        %1851 = vmatpush1.xpose.msra.mxu0 0.0
        %1852 = vmatprep.subr.mxu0 0.0
        %1853 = vmatpush1.xpose.msra.mxu0 0.0
        %1854 = vmatprep.subr.mxu0 0.0
        %1855 = vmatpush1.xpose.msra.mxu0 0.0
        %1856 = vmatprep.subr.mxu0 0.0
        %1857 = vmatpush1.xpose.msra.mxu0 0.0
        %1858 = vmatprep.subr.mxu0 0.0
        %1859 = vmatpush1.xpose.msra.mxu0 0.0
        %1860 = vmatprep.subr.mxu0 0.0
        %1861 = vmatpush1.xpose.msra.mxu0 0.0
        %1862 = vmatprep.subr.mxu0 0.0
        %1863 = vmatpush1.xpose.msra.mxu0 0.0
        %1864 = vmatprep.subr.mxu0 0.0
        %1865 = vmatpush1.xpose.msra.mxu0 0.0
        %1866 = vmatprep.subr.mxu0 0.0
        %1867 = vmatpush1.xpose.msra.mxu0 0.0
        %1868 = vmatprep.subr.mxu0 0.0
        %1869 = vmatpush1.xpose.msra.mxu0 0.0
        %1870 = vmatprep.subr.mxu0 0.0
        %1871 = vmatpush1.xpose.msra.mxu0 0.0
        %1872 = vmatprep.subr.mxu0 0.0
        %1873 = vmatpush1.xpose.msra.mxu0 0.0
        %1874 = vmatprep.subr.mxu0 0.0
        %1875 = vmatpush1.xpose.msra.mxu0 0.0
        %1876 = vmatprep.subr.mxu0 0.0
        %1877 = vmatpush1.xpose.msra.mxu0 %v1844
        %1878 = vmatprep.subr.mxu0 0.0
        %1879 = vmatpush2.xpose.msra.mxu0 0.0
        %1880 = vmatprep.subr.mxu0 0.0
        %1881 = vmatpush2.xpose.msra.mxu0 0.0
        %1882 = vmatprep.subr.mxu0 0.0
        %1883 = vmatpush2.xpose.msra.mxu0 0.0
        %1884 = vmatprep.subr.mxu0 0.0
        %1885 = vmatpush2.xpose.msra.mxu0 0.0
        %1886 = vmatprep.subr.mxu0 0.0
        %1887 = vmatpush2.xpose.msra.mxu0 0.0
        %1888 = vmatprep.subr.mxu0 0.0
        %1889 = vmatpush2.xpose.msra.mxu0 0.0
        %1890 = vmatprep.subr.mxu0 0.0
        %1891 = vmatpush2.xpose.msra.mxu0 0.0
        %1892 = vmatprep.subr.mxu0 0.0
        %1893 = vmatpush2.xpose.msra.mxu0 0.0
        %1894 = vmatprep.subr.mxu0 0.0
        %1895 = vmatpush2.xpose.msra.mxu0 0.0
        %1896 = vmatprep.subr.mxu0 0.0
        %1897 = vmatpush2.xpose.msra.mxu0 0.0
        %1898 = vmatprep.subr.mxu0 0.0
        %1899 = vmatpush2.xpose.msra.mxu0 0.0
        %1900 = vmatprep.subr.mxu0 0.0
        %1901 = vmatpush2.xpose.msra.mxu0 0.0
        %1902 = vmatprep.subr.mxu0 0.0
        %1903 = vmatpush2.xpose.msra.mxu0 0.0
        %1904 = vmatprep.subr.mxu0 0.0
        %1905 = vmatpush2.xpose.msra.mxu0 0.0
        %1906 = vmatprep.subr.mxu0 0.0
        %1907 = vmatpush2.xpose.msra.mxu0 0.0
        %1908 = vmatprep.subr.mxu0 0.0
        %1909 = vmatpush2.xpose.msra.mxu0 0.0
        %1910 = vmatprep.mubr.f32.mxu0 0.0
        %1911 = vmatmul.mubr.f32.gmra.mxu0 %v1841
        %v1912 = vpop.f32.mrf.mxu0
        %v1913 = vadd.f32 0.0, %v1912
        %v1914 = vpop.f32.mrf.mxu0
        %1915 = vdwg.mxu0
        %v1916 = vsel %vm866, %v1913, -inf
        %1917 = vmax.xlane.f32.xlu0 %v1916
        %v1918 = vpop.xlane.xlu0 %1917
        %v1919 = vsub.f32 %v1913, %v1918
        %v1920 = vmul.f32 %v1919, 1.442695
        %v1921 = vpow.pop %v1920
        %v1922 = vsel %vm866, %v1921, 0.0
        %1923 = vadd.xlane.f32.xlu0 %v1922
        %v1924 = vpop.xlane.xlu0 %1923
        %v1925 = vrcp.pop %v1924
        %v1926 = vmul.f32 %v1921, %v1925
        %v1928 = vsel %vm866, %v1926, 0
        %1930 = vmatprep.subr.mxu0 0.0
        %1931 = vmatpush1.msra.mxu0 0.0
        %1932 = vmatprep.subr.mxu0 0.0
        %1933 = vmatpush1.msra.mxu0 0.0
        %1934 = vmatprep.subr.mxu0 0.0
        %1935 = vmatpush1.msra.mxu0 0.0
        %1936 = vmatprep.subr.mxu0 0.0
        %1937 = vmatpush1.msra.mxu0 0.0
        %1938 = vmatprep.subr.mxu0 0.0
        %1939 = vmatpush1.msra.mxu0 0.0
        %1940 = vmatprep.subr.mxu0 0.0
        %1941 = vmatpush1.msra.mxu0 0.0
        %1942 = vmatprep.subr.mxu0 0.0
        %1943 = vmatpush1.msra.mxu0 0.0
        %1944 = vmatprep.subr.mxu0 0.0
        %1945 = vmatpush1.msra.mxu0 0.0
        %1946 = vmatprep.subr.mxu0 0.0
        %1947 = vmatpush1.msra.mxu0 0.0
        %1948 = vmatprep.subr.mxu0 0.0
        %1949 = vmatpush1.msra.mxu0 0.0
        %1950 = vmatprep.subr.mxu0 0.0
        %1951 = vmatpush1.msra.mxu0 0.0
        %1952 = vmatprep.subr.mxu0 0.0
        %1953 = vmatpush1.msra.mxu0 0.0
        %1954 = vmatprep.subr.mxu0 0.0
        %1955 = vmatpush1.msra.mxu0 0.0
        %1956 = vmatprep.subr.mxu0 0.0
        %1957 = vmatpush1.msra.mxu0 0.0
        %1958 = vmatprep.subr.mxu0 0.0
        %1959 = vmatpush1.msra.mxu0 0.0
        %1960 = vmatprep.subr.mxu0 0.0
        %1961 = vmatpush1.msra.mxu0 %v1837
        %1962 = vmatprep.subr.mxu0 0.0
        %1963 = vmatpush2.msra.mxu0 0.0
        %1964 = vmatprep.subr.mxu0 0.0
        %1965 = vmatpush2.msra.mxu0 0.0
        %1966 = vmatprep.subr.mxu0 0.0
        %1967 = vmatpush2.msra.mxu0 0.0
        %1968 = vmatprep.subr.mxu0 0.0
        %1969 = vmatpush2.msra.mxu0 0.0
        %1970 = vmatprep.subr.mxu0 0.0
        %1971 = vmatpush2.msra.mxu0 0.0
        %1972 = vmatprep.subr.mxu0 0.0
        %1973 = vmatpush2.msra.mxu0 0.0
        %1974 = vmatprep.subr.mxu0 0.0
        %1975 = vmatpush2.msra.mxu0 0.0
        %1976 = vmatprep.subr.mxu0 0.0
        %1977 = vmatpush2.msra.mxu0 0.0
        %1978 = vmatprep.subr.mxu0 0.0
        %1979 = vmatpush2.msra.mxu0 0.0
        %1980 = vmatprep.subr.mxu0 0.0
        %1981 = vmatpush2.msra.mxu0 0.0
        %1982 = vmatprep.subr.mxu0 0.0
        %1983 = vmatpush2.msra.mxu0 0.0
        %1984 = vmatprep.subr.mxu0 0.0
        %1985 = vmatpush2.msra.mxu0 0.0
        %1986 = vmatprep.subr.mxu0 0.0
        %1987 = vmatpush2.msra.mxu0 0.0
        %1988 = vmatprep.subr.mxu0 0.0
        %1989 = vmatpush2.msra.mxu0 0.0
        %1990 = vmatprep.subr.mxu0 0.0
        %1991 = vmatpush2.msra.mxu0 0.0
        %1992 = vmatprep.subr.mxu0 0.0
        %1993 = vmatpush2.msra.mxu0 0.0
        %1994 = vmatprep.mubr.f32.mxu0 0.0
        %1995 = vmatmul.mubr.f32.gmra.mxu0 %v1928
        %v1996 = vpop.f32.mrf.mxu0
        %v1997 = vadd.f32 0.0, %v1996
        %v1998 = vpop.f32.mrf.mxu0
        %1999 = vdwg.mxu0
        %v2000 = vld [vmem:[#allocation2] sm:$0xff]
        %s2001 = scalar_lea.vmem %s8, 16
        %v2002 = vld [vmem:[%s2001] sm:$0xff]
        %v2004 = vsel %vm866, %v1997, 0
        %2006 = vmatprep.subr.mxu0 0.0
        %2007 = vmatpush1.msra.mxu0 0.0
        %2008 = vmatprep.subr.mxu0 0.0
        %2009 = vmatpush1.msra.mxu0 0.0
        %2010 = vmatprep.subr.mxu0 0.0
        %2011 = vmatpush1.msra.mxu0 0.0
        %2012 = vmatprep.subr.mxu0 0.0
        %2013 = vmatpush1.msra.mxu0 0.0
        %2014 = vmatprep.subr.mxu0 0.0
        %2015 = vmatpush1.msra.mxu0 0.0
        %2016 = vmatprep.subr.mxu0 0.0
        %2017 = vmatpush1.msra.mxu0 0.0
        %2018 = vmatprep.subr.mxu0 0.0
        %2019 = vmatpush1.msra.mxu0 0.0
        %2020 = vmatprep.subr.mxu0 0.0
        %2021 = vmatpush1.msra.mxu0 0.0
        %2022 = vmatprep.subr.mxu0 0.0
        %2023 = vmatpush1.msra.mxu0 0.0
        %2024 = vmatprep.subr.mxu0 0.0
        %2025 = vmatpush1.msra.mxu0 0.0
        %2026 = vmatprep.subr.mxu0 0.0
        %2027 = vmatpush1.msra.mxu0 0.0
        %2028 = vmatprep.subr.mxu0 0.0
        %2029 = vmatpush1.msra.mxu0 0.0
        %2030 = vmatprep.subr.mxu0 0.0
        %2031 = vmatpush1.msra.mxu0 0.0
        %2032 = vmatprep.subr.mxu0 0.0
        %2033 = vmatpush1.msra.mxu0 0.0
        %2034 = vmatprep.subr.mxu0 0.0
        %2035 = vmatpush1.msra.mxu0 0.0
        %2036 = vmatprep.subr.mxu0 0.0
        %2037 = vmatpush1.msra.mxu0 %v2002
        %2038 = vmatprep.subr.mxu0 0.0
        %2039 = vmatpush2.msra.mxu0 0.0
        %2040 = vmatprep.subr.mxu0 0.0
        %2041 = vmatpush2.msra.mxu0 0.0
        %2042 = vmatprep.subr.mxu0 0.0
        %2043 = vmatpush2.msra.mxu0 0.0
        %2044 = vmatprep.subr.mxu0 0.0
        %2045 = vmatpush2.msra.mxu0 0.0
        %2046 = vmatprep.subr.mxu0 0.0
        %2047 = vmatpush2.msra.mxu0 0.0
        %2048 = vmatprep.subr.mxu0 0.0
        %2049 = vmatpush2.msra.mxu0 0.0
        %2050 = vmatprep.subr.mxu0 0.0
        %2051 = vmatpush2.msra.mxu0 0.0
        %2052 = vmatprep.subr.mxu0 0.0
        %2053 = vmatpush2.msra.mxu0 0.0
        %2054 = vmatprep.subr.mxu0 0.0
        %2055 = vmatpush2.msra.mxu0 0.0
        %2056 = vmatprep.subr.mxu0 0.0
        %2057 = vmatpush2.msra.mxu0 0.0
        %2058 = vmatprep.subr.mxu0 0.0
        %2059 = vmatpush2.msra.mxu0 0.0
        %2060 = vmatprep.subr.mxu0 0.0
        %2061 = vmatpush2.msra.mxu0 0.0
        %2062 = vmatprep.subr.mxu0 0.0
        %2063 = vmatpush2.msra.mxu0 0.0
        %2064 = vmatprep.subr.mxu0 0.0
        %2065 = vmatpush2.msra.mxu0 0.0
        %2066 = vmatprep.subr.mxu0 0.0
        %2067 = vmatpush2.msra.mxu0 0.0
        %2068 = vmatprep.subr.mxu0 0.0
        %2069 = vmatpush2.msra.mxu0 0.0
        %2070 = vmatprep.mubr.f32.mxu0 0.0
        %2071 = vmatmul.mubr.f32.gmra.mxu0 %v2004
        %v2072 = vpop.f32.mrf.mxu0
        %v2073 = vadd.f32 0.0, %v2072
        %v2074 = vpop.f32.mrf.mxu0
        %2075 = vdwg.mxu0
        %v2076 = vadd.f32 %v2000, %v2073
        %2077 = vst.msk [vmem:[#allocation2] sm:$0xff] %vm615, %v2076
        %s2078 = scalar_lea.vmem %s2, 96
        %v2079 = vld [vmem:[%s2078] sm:$0xff]
        %v2080 = vld [vmem:[%s2078 + $0x8] sm:$0xff]
        %v2081 = vld [vmem:[%s2078 + $0x10] sm:$0xff]
        %v2082 = vld [vmem:[%s2078 + $0x18] sm:$0xff]
        %s2083 = scalar_lea.vmem %s3, 3
        %v2084 = vld [vmem:[%s2083] sm:$0x1]
        %v2086 = vlaneseq
        %v2087 = vshrl.u32 %v2086, 7
        %v2088 = vsub.s32 0, %v2087
        %v2089 = vrot.slane %v2084, %v2088
        %2091 = vmatprep.subr.mxu0 0.0
        %2092 = vmatpush1.msra.mxu0 0.0
        %2093 = vmatprep.subr.mxu0 0.0
        %2094 = vmatpush1.msra.mxu0 0.0
        %2095 = vmatprep.subr.mxu0 0.0
        %2096 = vmatpush1.msra.mxu0 0.0
        %2097 = vmatprep.subr.mxu0 0.0
        %2098 = vmatpush1.msra.mxu0 0.0
        %2099 = vmatprep.subr.mxu0 0.0
        %2100 = vmatpush1.msra.mxu0 0.0
        %2101 = vmatprep.subr.mxu0 0.0
        %2102 = vmatpush1.msra.mxu0 0.0
        %2103 = vmatprep.subr.mxu0 0.0
        %2104 = vmatpush1.msra.mxu0 0.0
        %2105 = vmatprep.subr.mxu0 0.0
        %2106 = vmatpush1.msra.mxu0 0.0
        %2107 = vmatprep.subr.mxu0 0.0
        %2108 = vmatpush1.msra.mxu0 0.0
        %2109 = vmatprep.subr.mxu0 0.0
        %2110 = vmatpush1.msra.mxu0 0.0
        %2111 = vmatprep.subr.mxu0 0.0
        %2112 = vmatpush1.msra.mxu0 0.0
        %2113 = vmatprep.subr.mxu0 0.0
        %2114 = vmatpush1.msra.mxu0 0.0
        %2115 = vmatprep.subr.mxu0 0.0
        %2116 = vmatpush1.msra.mxu0 %v2082
        %2117 = vmatprep.subr.mxu0 0.0
        %2118 = vmatpush1.msra.mxu0 %v2081
        %2119 = vmatprep.subr.mxu0 0.0
        %2120 = vmatpush1.msra.mxu0 %v2080
        %2121 = vmatprep.subr.mxu0 0.0
        %2122 = vmatpush1.msra.mxu0 %v2079
        %2123 = vmatprep.subr.mxu0 0.0
        %2124 = vmatpush2.msra.mxu0 0.0
        %2125 = vmatprep.subr.mxu0 0.0
        %2126 = vmatpush2.msra.mxu0 0.0
        %2127 = vmatprep.subr.mxu0 0.0
        %2128 = vmatpush2.msra.mxu0 0.0
        %2129 = vmatprep.subr.mxu0 0.0
        %2130 = vmatpush2.msra.mxu0 0.0
        %2131 = vmatprep.subr.mxu0 0.0
        %2132 = vmatpush2.msra.mxu0 0.0
        %2133 = vmatprep.subr.mxu0 0.0
        %2134 = vmatpush2.msra.mxu0 0.0
        %2135 = vmatprep.subr.mxu0 0.0
        %2136 = vmatpush2.msra.mxu0 0.0
        %2137 = vmatprep.subr.mxu0 0.0
        %2138 = vmatpush2.msra.mxu0 0.0
        %2139 = vmatprep.subr.mxu0 0.0
        %2140 = vmatpush2.msra.mxu0 0.0
        %2141 = vmatprep.subr.mxu0 0.0
        %2142 = vmatpush2.msra.mxu0 0.0
        %2143 = vmatprep.subr.mxu0 0.0
        %2144 = vmatpush2.msra.mxu0 0.0
        %2145 = vmatprep.subr.mxu0 0.0
        %2146 = vmatpush2.msra.mxu0 0.0
        %2147 = vmatprep.subr.mxu0 0.0
        %2148 = vmatpush2.msra.mxu0 0.0
        %2149 = vmatprep.subr.mxu0 0.0
        %2150 = vmatpush2.msra.mxu0 0.0
        %2151 = vmatprep.subr.mxu0 0.0
        %2152 = vmatpush2.msra.mxu0 0.0
        %2153 = vmatprep.subr.mxu0 0.0
        %2154 = vmatpush2.msra.mxu0 0.0
        %2155 = vmatprep.mubr.f32.mxu0 0.0
        %2156 = vmatmul.mubr.f32.gmra.mxu0 %v629
        %v2157 = vpop.f32.mrf.mxu0
        %v2158 = vadd.f32 %v2089, %v2157
        %v2159 = vpop.f32.mrf.mxu0
        %2160 = vdwg.mxu0
        %s2161 = scalar_lea.vmem %s4, 96
        %v2162 = vld [vmem:[%s2161] sm:$0xff]
        %v2163 = vld [vmem:[%s2161 + $0x8] sm:$0xff]
        %v2164 = vld [vmem:[%s2161 + $0x10] sm:$0xff]
        %v2165 = vld [vmem:[%s2161 + $0x18] sm:$0xff]
        %s2166 = scalar_lea.vmem %s5, 3
        %v2167 = vld [vmem:[%s2166] sm:$0x1]
        %v2169 = vlaneseq
        %v2170 = vshrl.u32 %v2169, 7
        %v2171 = vsub.s32 0, %v2170
        %v2172 = vrot.slane %v2167, %v2171
        %2174 = vmatprep.subr.mxu0 0.0
        %2175 = vmatpush1.msra.mxu0 0.0
        %2176 = vmatprep.subr.mxu0 0.0
        %2177 = vmatpush1.msra.mxu0 0.0
        %2178 = vmatprep.subr.mxu0 0.0
        %2179 = vmatpush1.msra.mxu0 0.0
        %2180 = vmatprep.subr.mxu0 0.0
        %2181 = vmatpush1.msra.mxu0 0.0
        %2182 = vmatprep.subr.mxu0 0.0
        %2183 = vmatpush1.msra.mxu0 0.0
        %2184 = vmatprep.subr.mxu0 0.0
        %2185 = vmatpush1.msra.mxu0 0.0
        %2186 = vmatprep.subr.mxu0 0.0
        %2187 = vmatpush1.msra.mxu0 0.0
        %2188 = vmatprep.subr.mxu0 0.0
        %2189 = vmatpush1.msra.mxu0 0.0
        %2190 = vmatprep.subr.mxu0 0.0
        %2191 = vmatpush1.msra.mxu0 0.0
        %2192 = vmatprep.subr.mxu0 0.0
        %2193 = vmatpush1.msra.mxu0 0.0
        %2194 = vmatprep.subr.mxu0 0.0
        %2195 = vmatpush1.msra.mxu0 0.0
        %2196 = vmatprep.subr.mxu0 0.0
        %2197 = vmatpush1.msra.mxu0 0.0
        %2198 = vmatprep.subr.mxu0 0.0
        %2199 = vmatpush1.msra.mxu0 %v2165
        %2200 = vmatprep.subr.mxu0 0.0
        %2201 = vmatpush1.msra.mxu0 %v2164
        %2202 = vmatprep.subr.mxu0 0.0
        %2203 = vmatpush1.msra.mxu0 %v2163
        %2204 = vmatprep.subr.mxu0 0.0
        %2205 = vmatpush1.msra.mxu0 %v2162
        %2206 = vmatprep.subr.mxu0 0.0
        %2207 = vmatpush2.msra.mxu0 0.0
        %2208 = vmatprep.subr.mxu0 0.0
        %2209 = vmatpush2.msra.mxu0 0.0
        %2210 = vmatprep.subr.mxu0 0.0
        %2211 = vmatpush2.msra.mxu0 0.0
        %2212 = vmatprep.subr.mxu0 0.0
        %2213 = vmatpush2.msra.mxu0 0.0
        %2214 = vmatprep.subr.mxu0 0.0
        %2215 = vmatpush2.msra.mxu0 0.0
        %2216 = vmatprep.subr.mxu0 0.0
        %2217 = vmatpush2.msra.mxu0 0.0
        %2218 = vmatprep.subr.mxu0 0.0
        %2219 = vmatpush2.msra.mxu0 0.0
        %2220 = vmatprep.subr.mxu0 0.0
        %2221 = vmatpush2.msra.mxu0 0.0
        %2222 = vmatprep.subr.mxu0 0.0
        %2223 = vmatpush2.msra.mxu0 0.0
        %2224 = vmatprep.subr.mxu0 0.0
        %2225 = vmatpush2.msra.mxu0 0.0
        %2226 = vmatprep.subr.mxu0 0.0
        %2227 = vmatpush2.msra.mxu0 0.0
        %2228 = vmatprep.subr.mxu0 0.0
        %2229 = vmatpush2.msra.mxu0 0.0
        %2230 = vmatprep.subr.mxu0 0.0
        %2231 = vmatpush2.msra.mxu0 0.0
        %2232 = vmatprep.subr.mxu0 0.0
        %2233 = vmatpush2.msra.mxu0 0.0
        %2234 = vmatprep.subr.mxu0 0.0
        %2235 = vmatpush2.msra.mxu0 0.0
        %2236 = vmatprep.subr.mxu0 0.0
        %2237 = vmatpush2.msra.mxu0 0.0
        %2238 = vmatprep.mubr.f32.mxu0 0.0
        %2239 = vmatmul.mubr.f32.gmra.mxu0 %v713
        %v2240 = vpop.f32.mrf.mxu0
        %v2241 = vadd.f32 %v2172, %v2240
        %v2242 = vpop.f32.mrf.mxu0
        %2243 = vdwg.mxu0
        %s2244 = scalar_lea.vmem %s6, 96
        %v2245 = vld [vmem:[%s2244] sm:$0xff]
        %v2246 = vld [vmem:[%s2244 + $0x8] sm:$0xff]
        %v2247 = vld [vmem:[%s2244 + $0x10] sm:$0xff]
        %v2248 = vld [vmem:[%s2244 + $0x18] sm:$0xff]
        %s2249 = scalar_lea.vmem %s7, 3
        %v2250 = vld [vmem:[%s2249] sm:$0x1]
        %v2252 = vlaneseq
        %v2253 = vshrl.u32 %v2252, 7
        %v2254 = vsub.s32 0, %v2253
        %v2255 = vrot.slane %v2250, %v2254
        %2257 = vmatprep.subr.mxu0 0.0
        %2258 = vmatpush1.msra.mxu0 0.0
        %2259 = vmatprep.subr.mxu0 0.0
        %2260 = vmatpush1.msra.mxu0 0.0
        %2261 = vmatprep.subr.mxu0 0.0
        %2262 = vmatpush1.msra.mxu0 0.0
        %2263 = vmatprep.subr.mxu0 0.0
        %2264 = vmatpush1.msra.mxu0 0.0
        %2265 = vmatprep.subr.mxu0 0.0
        %2266 = vmatpush1.msra.mxu0 0.0
        %2267 = vmatprep.subr.mxu0 0.0
        %2268 = vmatpush1.msra.mxu0 0.0
        %2269 = vmatprep.subr.mxu0 0.0
        %2270 = vmatpush1.msra.mxu0 0.0
        %2271 = vmatprep.subr.mxu0 0.0
        %2272 = vmatpush1.msra.mxu0 0.0
        %2273 = vmatprep.subr.mxu0 0.0
        %2274 = vmatpush1.msra.mxu0 0.0
        %2275 = vmatprep.subr.mxu0 0.0
        %2276 = vmatpush1.msra.mxu0 0.0
        %2277 = vmatprep.subr.mxu0 0.0
        %2278 = vmatpush1.msra.mxu0 0.0
        %2279 = vmatprep.subr.mxu0 0.0
        %2280 = vmatpush1.msra.mxu0 0.0
        %2281 = vmatprep.subr.mxu0 0.0
        %2282 = vmatpush1.msra.mxu0 %v2248
        %2283 = vmatprep.subr.mxu0 0.0
        %2284 = vmatpush1.msra.mxu0 %v2247
        %2285 = vmatprep.subr.mxu0 0.0
        %2286 = vmatpush1.msra.mxu0 %v2246
        %2287 = vmatprep.subr.mxu0 0.0
        %2288 = vmatpush1.msra.mxu0 %v2245
        %2289 = vmatprep.subr.mxu0 0.0
        %2290 = vmatpush2.msra.mxu0 0.0
        %2291 = vmatprep.subr.mxu0 0.0
        %2292 = vmatpush2.msra.mxu0 0.0
        %2293 = vmatprep.subr.mxu0 0.0
        %2294 = vmatpush2.msra.mxu0 0.0
        %2295 = vmatprep.subr.mxu0 0.0
        %2296 = vmatpush2.msra.mxu0 0.0
        %2297 = vmatprep.subr.mxu0 0.0
        %2298 = vmatpush2.msra.mxu0 0.0
        %2299 = vmatprep.subr.mxu0 0.0
        %2300 = vmatpush2.msra.mxu0 0.0
        %2301 = vmatprep.subr.mxu0 0.0
        %2302 = vmatpush2.msra.mxu0 0.0
        %2303 = vmatprep.subr.mxu0 0.0
        %2304 = vmatpush2.msra.mxu0 0.0
        %2305 = vmatprep.subr.mxu0 0.0
        %2306 = vmatpush2.msra.mxu0 0.0
        %2307 = vmatprep.subr.mxu0 0.0
        %2308 = vmatpush2.msra.mxu0 0.0
        %2309 = vmatprep.subr.mxu0 0.0
        %2310 = vmatpush2.msra.mxu0 0.0
        %2311 = vmatprep.subr.mxu0 0.0
        %2312 = vmatpush2.msra.mxu0 0.0
        %2313 = vmatprep.subr.mxu0 0.0
        %2314 = vmatpush2.msra.mxu0 0.0
        %2315 = vmatprep.subr.mxu0 0.0
        %2316 = vmatpush2.msra.mxu0 0.0
        %2317 = vmatprep.subr.mxu0 0.0
        %2318 = vmatpush2.msra.mxu0 0.0
        %2319 = vmatprep.subr.mxu0 0.0
        %2320 = vmatpush2.msra.mxu0 0.0
        %2321 = vmatprep.mubr.f32.mxu0 0.0
        %2322 = vmatmul.mubr.f32.gmra.mxu0 %v713
        %v2323 = vpop.f32.mrf.mxu0
        %v2324 = vadd.f32 %v2255, %v2323
        %v2325 = vpop.f32.mrf.mxu0
        %2326 = vdwg.mxu0
        %v2328 = vsel %vm866, %v2158, 0
        %v2331 = vsel %vm866, %v2241, 0
        %2333 = vmatprep.subr.mxu0 0.0
        %2334 = vmatpush1.xpose.msra.mxu0 0.0
        %2335 = vmatprep.subr.mxu0 0.0
        %2336 = vmatpush1.xpose.msra.mxu0 0.0
        %2337 = vmatprep.subr.mxu0 0.0
        %2338 = vmatpush1.xpose.msra.mxu0 0.0
        %2339 = vmatprep.subr.mxu0 0.0
        %2340 = vmatpush1.xpose.msra.mxu0 0.0
        %2341 = vmatprep.subr.mxu0 0.0
        %2342 = vmatpush1.xpose.msra.mxu0 0.0
        %2343 = vmatprep.subr.mxu0 0.0
        %2344 = vmatpush1.xpose.msra.mxu0 0.0
        %2345 = vmatprep.subr.mxu0 0.0
        %2346 = vmatpush1.xpose.msra.mxu0 0.0
        %2347 = vmatprep.subr.mxu0 0.0
        %2348 = vmatpush1.xpose.msra.mxu0 0.0
        %2349 = vmatprep.subr.mxu0 0.0
        %2350 = vmatpush1.xpose.msra.mxu0 0.0
        %2351 = vmatprep.subr.mxu0 0.0
        %2352 = vmatpush1.xpose.msra.mxu0 0.0
        %2353 = vmatprep.subr.mxu0 0.0
        %2354 = vmatpush1.xpose.msra.mxu0 0.0
        %2355 = vmatprep.subr.mxu0 0.0
        %2356 = vmatpush1.xpose.msra.mxu0 0.0
        %2357 = vmatprep.subr.mxu0 0.0
        %2358 = vmatpush1.xpose.msra.mxu0 0.0
        %2359 = vmatprep.subr.mxu0 0.0
        %2360 = vmatpush1.xpose.msra.mxu0 0.0
        %2361 = vmatprep.subr.mxu0 0.0
        %2362 = vmatpush1.xpose.msra.mxu0 0.0
        %2363 = vmatprep.subr.mxu0 0.0
        %2364 = vmatpush1.xpose.msra.mxu0 %v2331
        %2365 = vmatprep.subr.mxu0 0.0
        %2366 = vmatpush2.xpose.msra.mxu0 0.0
        %2367 = vmatprep.subr.mxu0 0.0
        %2368 = vmatpush2.xpose.msra.mxu0 0.0
        %2369 = vmatprep.subr.mxu0 0.0
        %2370 = vmatpush2.xpose.msra.mxu0 0.0
        %2371 = vmatprep.subr.mxu0 0.0
        %2372 = vmatpush2.xpose.msra.mxu0 0.0
        %2373 = vmatprep.subr.mxu0 0.0
        %2374 = vmatpush2.xpose.msra.mxu0 0.0
        %2375 = vmatprep.subr.mxu0 0.0
        %2376 = vmatpush2.xpose.msra.mxu0 0.0
        %2377 = vmatprep.subr.mxu0 0.0
        %2378 = vmatpush2.xpose.msra.mxu0 0.0
        %2379 = vmatprep.subr.mxu0 0.0
        %2380 = vmatpush2.xpose.msra.mxu0 0.0
        %2381 = vmatprep.subr.mxu0 0.0
        %2382 = vmatpush2.xpose.msra.mxu0 0.0
        %2383 = vmatprep.subr.mxu0 0.0
        %2384 = vmatpush2.xpose.msra.mxu0 0.0
        %2385 = vmatprep.subr.mxu0 0.0
        %2386 = vmatpush2.xpose.msra.mxu0 0.0
        %2387 = vmatprep.subr.mxu0 0.0
        %2388 = vmatpush2.xpose.msra.mxu0 0.0
        %2389 = vmatprep.subr.mxu0 0.0
        %2390 = vmatpush2.xpose.msra.mxu0 0.0
        %2391 = vmatprep.subr.mxu0 0.0
        %2392 = vmatpush2.xpose.msra.mxu0 0.0
        %2393 = vmatprep.subr.mxu0 0.0
        %2394 = vmatpush2.xpose.msra.mxu0 0.0
        %2395 = vmatprep.subr.mxu0 0.0
        %2396 = vmatpush2.xpose.msra.mxu0 0.0
        %2397 = vmatprep.mubr.f32.mxu0 0.0
        %2398 = vmatmul.mubr.f32.gmra.mxu0 %v2328
        %v2399 = vpop.f32.mrf.mxu0
        %v2400 = vadd.f32 0.0, %v2399
        %v2401 = vpop.f32.mrf.mxu0
        %2402 = vdwg.mxu0
        %v2403 = vsel %vm866, %v2400, -inf
        %2404 = vmax.xlane.f32.xlu0 %v2403
        %v2405 = vpop.xlane.xlu0 %2404
        %v2406 = vsub.f32 %v2400, %v2405
        %v2407 = vmul.f32 %v2406, 1.442695
        %v2408 = vpow.pop %v2407
        %v2409 = vsel %vm866, %v2408, 0.0
        %2410 = vadd.xlane.f32.xlu0 %v2409
        %v2411 = vpop.xlane.xlu0 %2410
        %v2412 = vrcp.pop %v2411
        %v2413 = vmul.f32 %v2408, %v2412
        %v2415 = vsel %vm866, %v2413, 0
        %2417 = vmatprep.subr.mxu0 0.0
        %2418 = vmatpush1.msra.mxu0 0.0
        %2419 = vmatprep.subr.mxu0 0.0
        %2420 = vmatpush1.msra.mxu0 0.0
        %2421 = vmatprep.subr.mxu0 0.0
        %2422 = vmatpush1.msra.mxu0 0.0
        %2423 = vmatprep.subr.mxu0 0.0
        %2424 = vmatpush1.msra.mxu0 0.0
        %2425 = vmatprep.subr.mxu0 0.0
        %2426 = vmatpush1.msra.mxu0 0.0
        %2427 = vmatprep.subr.mxu0 0.0
        %2428 = vmatpush1.msra.mxu0 0.0
        %2429 = vmatprep.subr.mxu0 0.0
        %2430 = vmatpush1.msra.mxu0 0.0
        %2431 = vmatprep.subr.mxu0 0.0
        %2432 = vmatpush1.msra.mxu0 0.0
        %2433 = vmatprep.subr.mxu0 0.0
        %2434 = vmatpush1.msra.mxu0 0.0
        %2435 = vmatprep.subr.mxu0 0.0
        %2436 = vmatpush1.msra.mxu0 0.0
        %2437 = vmatprep.subr.mxu0 0.0
        %2438 = vmatpush1.msra.mxu0 0.0
        %2439 = vmatprep.subr.mxu0 0.0
        %2440 = vmatpush1.msra.mxu0 0.0
        %2441 = vmatprep.subr.mxu0 0.0
        %2442 = vmatpush1.msra.mxu0 0.0
        %2443 = vmatprep.subr.mxu0 0.0
        %2444 = vmatpush1.msra.mxu0 0.0
        %2445 = vmatprep.subr.mxu0 0.0
        %2446 = vmatpush1.msra.mxu0 0.0
        %2447 = vmatprep.subr.mxu0 0.0
        %2448 = vmatpush1.msra.mxu0 %v2324
        %2449 = vmatprep.subr.mxu0 0.0
        %2450 = vmatpush2.msra.mxu0 0.0
        %2451 = vmatprep.subr.mxu0 0.0
        %2452 = vmatpush2.msra.mxu0 0.0
        %2453 = vmatprep.subr.mxu0 0.0
        %2454 = vmatpush2.msra.mxu0 0.0
        %2455 = vmatprep.subr.mxu0 0.0
        %2456 = vmatpush2.msra.mxu0 0.0
        %2457 = vmatprep.subr.mxu0 0.0
        %2458 = vmatpush2.msra.mxu0 0.0
        %2459 = vmatprep.subr.mxu0 0.0
        %2460 = vmatpush2.msra.mxu0 0.0
        %2461 = vmatprep.subr.mxu0 0.0
        %2462 = vmatpush2.msra.mxu0 0.0
        %2463 = vmatprep.subr.mxu0 0.0
        %2464 = vmatpush2.msra.mxu0 0.0
        %2465 = vmatprep.subr.mxu0 0.0
        %2466 = vmatpush2.msra.mxu0 0.0
        %2467 = vmatprep.subr.mxu0 0.0
        %2468 = vmatpush2.msra.mxu0 0.0
        %2469 = vmatprep.subr.mxu0 0.0
        %2470 = vmatpush2.msra.mxu0 0.0
        %2471 = vmatprep.subr.mxu0 0.0
        %2472 = vmatpush2.msra.mxu0 0.0
        %2473 = vmatprep.subr.mxu0 0.0
        %2474 = vmatpush2.msra.mxu0 0.0
        %2475 = vmatprep.subr.mxu0 0.0
        %2476 = vmatpush2.msra.mxu0 0.0
        %2477 = vmatprep.subr.mxu0 0.0
        %2478 = vmatpush2.msra.mxu0 0.0
        %2479 = vmatprep.subr.mxu0 0.0
        %2480 = vmatpush2.msra.mxu0 0.0
        %2481 = vmatprep.mubr.f32.mxu0 0.0
        %2482 = vmatmul.mubr.f32.gmra.mxu0 %v2415
        %v2483 = vpop.f32.mrf.mxu0
        %v2484 = vadd.f32 0.0, %v2483
        %v2485 = vpop.f32.mrf.mxu0
        %2486 = vdwg.mxu0
        %v2487 = vld [vmem:[#allocation2] sm:$0xff]
        %s2488 = scalar_lea.vmem %s8, 24
        %v2489 = vld [vmem:[%s2488] sm:$0xff]
        %v2491 = vsel %vm866, %v2484, 0
        %2493 = vmatprep.subr.mxu0 0.0
        %2494 = vmatpush1.msra.mxu0 0.0
        %2495 = vmatprep.subr.mxu0 0.0
        %2496 = vmatpush1.msra.mxu0 0.0
        %2497 = vmatprep.subr.mxu0 0.0
        %2498 = vmatpush1.msra.mxu0 0.0
        %2499 = vmatprep.subr.mxu0 0.0
        %2500 = vmatpush1.msra.mxu0 0.0
        %2501 = vmatprep.subr.mxu0 0.0
        %2502 = vmatpush1.msra.mxu0 0.0
        %2503 = vmatprep.subr.mxu0 0.0
        %2504 = vmatpush1.msra.mxu0 0.0
        %2505 = vmatprep.subr.mxu0 0.0
        %2506 = vmatpush1.msra.mxu0 0.0
        %2507 = vmatprep.subr.mxu0 0.0
        %2508 = vmatpush1.msra.mxu0 0.0
        %2509 = vmatprep.subr.mxu0 0.0
        %2510 = vmatpush1.msra.mxu0 0.0
        %2511 = vmatprep.subr.mxu0 0.0
        %2512 = vmatpush1.msra.mxu0 0.0
        %2513 = vmatprep.subr.mxu0 0.0
        %2514 = vmatpush1.msra.mxu0 0.0
        %2515 = vmatprep.subr.mxu0 0.0
        %2516 = vmatpush1.msra.mxu0 0.0
        %2517 = vmatprep.subr.mxu0 0.0
        %2518 = vmatpush1.msra.mxu0 0.0
        %2519 = vmatprep.subr.mxu0 0.0
        %2520 = vmatpush1.msra.mxu0 0.0
        %2521 = vmatprep.subr.mxu0 0.0
        %2522 = vmatpush1.msra.mxu0 0.0
        %2523 = vmatprep.subr.mxu0 0.0
        %2524 = vmatpush1.msra.mxu0 %v2489
        %2525 = vmatprep.subr.mxu0 0.0
        %2526 = vmatpush2.msra.mxu0 0.0
        %2527 = vmatprep.subr.mxu0 0.0
        %2528 = vmatpush2.msra.mxu0 0.0
        %2529 = vmatprep.subr.mxu0 0.0
        %2530 = vmatpush2.msra.mxu0 0.0
        %2531 = vmatprep.subr.mxu0 0.0
        %2532 = vmatpush2.msra.mxu0 0.0
        %2533 = vmatprep.subr.mxu0 0.0
        %2534 = vmatpush2.msra.mxu0 0.0
        %2535 = vmatprep.subr.mxu0 0.0
        %2536 = vmatpush2.msra.mxu0 0.0
        %2537 = vmatprep.subr.mxu0 0.0
        %2538 = vmatpush2.msra.mxu0 0.0
        %2539 = vmatprep.subr.mxu0 0.0
        %2540 = vmatpush2.msra.mxu0 0.0
        %2541 = vmatprep.subr.mxu0 0.0
        %2542 = vmatpush2.msra.mxu0 0.0
        %2543 = vmatprep.subr.mxu0 0.0
        %2544 = vmatpush2.msra.mxu0 0.0
        %2545 = vmatprep.subr.mxu0 0.0
        %2546 = vmatpush2.msra.mxu0 0.0
        %2547 = vmatprep.subr.mxu0 0.0
        %2548 = vmatpush2.msra.mxu0 0.0
        %2549 = vmatprep.subr.mxu0 0.0
        %2550 = vmatpush2.msra.mxu0 0.0
        %2551 = vmatprep.subr.mxu0 0.0
        %2552 = vmatpush2.msra.mxu0 0.0
        %2553 = vmatprep.subr.mxu0 0.0
        %2554 = vmatpush2.msra.mxu0 0.0
        %2555 = vmatprep.subr.mxu0 0.0
        %2556 = vmatpush2.msra.mxu0 0.0
        %2557 = vmatprep.mubr.f32.mxu0 0.0
        %2558 = vmatmul.mubr.f32.gmra.mxu0 %v2491
        %v2559 = vpop.f32.mrf.mxu0
        %v2560 = vadd.f32 0.0, %v2559
        %v2561 = vpop.f32.mrf.mxu0
        %2562 = vdwg.mxu0
        %v2563 = vadd.f32 %v2487, %v2560
        %2564 = vst.msk [vmem:[#allocation2] sm:$0xff] %vm615, %v2563
        %v2565 = vld [vmem:[#allocation2] sm:$0xff]
        %v2566 = vld [vmem:[%s9] sm:$0x1]
        %v2568 = vlaneseq
        %v2569 = vshrl.u32 %v2568, 7
        %v2570 = vsub.s32 0, %v2569
        %v2571 = vrot.slane %v2566, %v2570
        %v2573 = vadd.f32 %v2565, %v2571
        %v2574 = vadd.f32 %v613, %v2573
        %v2575 = vld [vmem:[%s10] sm:$0x1]
        %v2576 = vld [vmem:[%s11] sm:$0x1]
        %v2577 = vsel %vm615, %v2574, 0.0
        %2578 = vadd.xlane.f32.xlu0 %v2577
        %v2579 = vpop.xlane.xlu0 %2578
        %v2580 = vrcp.pop 32.0
        %v2581 = vmul.f32 %v2579, %v2580
        %v2582 = vsub.f32 %v2574, %v2581
        %v2583 = vmul.f32 %v2582, %v2582
        %v2584 = vsel %vm615, %v2583, 0.0
        %2585 = vadd.xlane.f32.xlu0 %v2584
        %v2586 = vpop.xlane.xlu0 %2585
        %v2587 = vmul.f32 %v2586, %v2580
        %v2588 = vadd.f32 %v2587, 1e-05
        %v2589 = vrsqrt.pop %v2588
        %v2590 = vmul.f32 %v2582, %v2589
        %v2592 = vlaneseq
        %v2593 = vshrl.u32 %v2592, 7
        %v2594 = vsub.s32 0, %v2593
        %v2595 = vrot.slane %v2575, %v2594
        %v2597 = vmul.f32 %v2590, %v2595
        %v2599 = vlaneseq
        %v2600 = vshrl.u32 %v2599, 7
        %v2601 = vsub.s32 0, %v2600
        %v2602 = vrot.slane %v2576, %v2601
        %v2604 = vadd.f32 %v2597, %v2602
        %v2605 = vld [vmem:[%s12] sm:$0xff]
        %v2606 = vld [vmem:[%s12 + $0x8] sm:$0xff]
        %v2607 = vld [vmem:[%s12 + $0x10] sm:$0xff]
        %v2608 = vld [vmem:[%s12 + $0x18] sm:$0xff]
        %v2609 = vld [vmem:[%s13] sm:$0x1]
        %v2611 = vlaneseq
        %v2612 = vshrl.u32 %v2611, 7
        %v2613 = vsub.s32 0, %v2612
        %v2614 = vrot.slane %v2609, %v2613
        %v2617 = vsel %vm615, %v2604, 0
        %2619 = vmatprep.subr.mxu0 0.0
        %2620 = vmatpush1.msra.mxu0 0.0
        %2621 = vmatprep.subr.mxu0 0.0
        %2622 = vmatpush1.msra.mxu0 0.0
        %2623 = vmatprep.subr.mxu0 0.0
        %2624 = vmatpush1.msra.mxu0 0.0
        %2625 = vmatprep.subr.mxu0 0.0
        %2626 = vmatpush1.msra.mxu0 0.0
        %2627 = vmatprep.subr.mxu0 0.0
        %2628 = vmatpush1.msra.mxu0 0.0
        %2629 = vmatprep.subr.mxu0 0.0
        %2630 = vmatpush1.msra.mxu0 0.0
        %2631 = vmatprep.subr.mxu0 0.0
        %2632 = vmatpush1.msra.mxu0 0.0
        %2633 = vmatprep.subr.mxu0 0.0
        %2634 = vmatpush1.msra.mxu0 0.0
        %2635 = vmatprep.subr.mxu0 0.0
        %2636 = vmatpush1.msra.mxu0 0.0
        %2637 = vmatprep.subr.mxu0 0.0
        %2638 = vmatpush1.msra.mxu0 0.0
        %2639 = vmatprep.subr.mxu0 0.0
        %2640 = vmatpush1.msra.mxu0 0.0
        %2641 = vmatprep.subr.mxu0 0.0
        %2642 = vmatpush1.msra.mxu0 0.0
        %2643 = vmatprep.subr.mxu0 0.0
        %2644 = vmatpush1.msra.mxu0 %v2608
        %2645 = vmatprep.subr.mxu0 0.0
        %2646 = vmatpush1.msra.mxu0 %v2607
        %2647 = vmatprep.subr.mxu0 0.0
        %2648 = vmatpush1.msra.mxu0 %v2606
        %2649 = vmatprep.subr.mxu0 0.0
        %2650 = vmatpush1.msra.mxu0 %v2605
        %2651 = vmatprep.subr.mxu0 0.0
        %2652 = vmatpush2.msra.mxu0 0.0
        %2653 = vmatprep.subr.mxu0 0.0
        %2654 = vmatpush2.msra.mxu0 0.0
        %2655 = vmatprep.subr.mxu0 0.0
        %2656 = vmatpush2.msra.mxu0 0.0
        %2657 = vmatprep.subr.mxu0 0.0
        %2658 = vmatpush2.msra.mxu0 0.0
        %2659 = vmatprep.subr.mxu0 0.0
        %2660 = vmatpush2.msra.mxu0 0.0
        %2661 = vmatprep.subr.mxu0 0.0
        %2662 = vmatpush2.msra.mxu0 0.0
        %2663 = vmatprep.subr.mxu0 0.0
        %2664 = vmatpush2.msra.mxu0 0.0
        %2665 = vmatprep.subr.mxu0 0.0
        %2666 = vmatpush2.msra.mxu0 0.0
        %2667 = vmatprep.subr.mxu0 0.0
        %2668 = vmatpush2.msra.mxu0 0.0
        %2669 = vmatprep.subr.mxu0 0.0
        %2670 = vmatpush2.msra.mxu0 0.0
        %2671 = vmatprep.subr.mxu0 0.0
        %2672 = vmatpush2.msra.mxu0 0.0
        %2673 = vmatprep.subr.mxu0 0.0
        %2674 = vmatpush2.msra.mxu0 0.0
        %2675 = vmatprep.subr.mxu0 0.0
        %2676 = vmatpush2.msra.mxu0 0.0
        %2677 = vmatprep.subr.mxu0 0.0
        %2678 = vmatpush2.msra.mxu0 0.0
        %2679 = vmatprep.subr.mxu0 0.0
        %2680 = vmatpush2.msra.mxu0 0.0
        %2681 = vmatprep.subr.mxu0 0.0
        %2682 = vmatpush2.msra.mxu0 0.0
        %2683 = vmatprep.mubr.f32.mxu0 0.0
        %2684 = vmatmul.mubr.f32.gmra.mxu0 %v2617
        %v2685 = vpop.f32.mrf.mxu0
        %v2686 = vadd.f32 %v2614, %v2685
        %v2687 = vpop.f32.mrf.mxu0
        %2688 = vdwg.mxu0
        %v2689 = vmax.f32 %v2686, 0.0
        %v2690 = vld [vmem:[%s14] sm:$0xff]
        %v2691 = vld [vmem:[%s14 + $0x8] sm:$0xff]
        %v2692 = vld [vmem:[%s14 + $0x10] sm:$0xff]
        %v2693 = vld [vmem:[%s14 + $0x18] sm:$0xff]
        %v2694 = vld [vmem:[%s14 + $0x20] sm:$0xff]
        %v2695 = vld [vmem:[%s14 + $0x28] sm:$0xff]
        %v2696 = vld [vmem:[%s14 + $0x30] sm:$0xff]
        %v2697 = vld [vmem:[%s14 + $0x38] sm:$0xff]
        %v2698 = vld [vmem:[%s15] sm:$0x1]
        %v2700 = vlaneseq
        %v2701 = vshrl.u32 %v2700, 7
        %v2702 = vsub.s32 0, %v2701
        %v2703 = vrot.slane %v2698, %v2702
        %vm2705 = vcmask 523264
        %v2707 = vsel %vm2705, %v2689, 0
        %2709 = vmatprep.subr.mxu0 0.0
        %2710 = vmatpush1.msra.mxu0 0.0
        %2711 = vmatprep.subr.mxu0 0.0
        %2712 = vmatpush1.msra.mxu0 0.0
        %2713 = vmatprep.subr.mxu0 0.0
        %2714 = vmatpush1.msra.mxu0 0.0
        %2715 = vmatprep.subr.mxu0 0.0
        %2716 = vmatpush1.msra.mxu0 0.0
        %2717 = vmatprep.subr.mxu0 0.0
        %2718 = vmatpush1.msra.mxu0 0.0
        %2719 = vmatprep.subr.mxu0 0.0
        %2720 = vmatpush1.msra.mxu0 0.0
        %2721 = vmatprep.subr.mxu0 0.0
        %2722 = vmatpush1.msra.mxu0 0.0
        %2723 = vmatprep.subr.mxu0 0.0
        %2724 = vmatpush1.msra.mxu0 0.0
        %2725 = vmatprep.subr.mxu0 0.0
        %2726 = vmatpush1.msra.mxu0 %v2697
        %2727 = vmatprep.subr.mxu0 0.0
        %2728 = vmatpush1.msra.mxu0 %v2696
        %2729 = vmatprep.subr.mxu0 0.0
        %2730 = vmatpush1.msra.mxu0 %v2695
        %2731 = vmatprep.subr.mxu0 0.0
        %2732 = vmatpush1.msra.mxu0 %v2694
        %2733 = vmatprep.subr.mxu0 0.0
        %2734 = vmatpush1.msra.mxu0 %v2693
        %2735 = vmatprep.subr.mxu0 0.0
        %2736 = vmatpush1.msra.mxu0 %v2692
        %2737 = vmatprep.subr.mxu0 0.0
        %2738 = vmatpush1.msra.mxu0 %v2691
        %2739 = vmatprep.subr.mxu0 0.0
        %2740 = vmatpush1.msra.mxu0 %v2690
        %2741 = vmatprep.subr.mxu0 0.0
        %2742 = vmatpush2.msra.mxu0 0.0
        %2743 = vmatprep.subr.mxu0 0.0
        %2744 = vmatpush2.msra.mxu0 0.0
        %2745 = vmatprep.subr.mxu0 0.0
        %2746 = vmatpush2.msra.mxu0 0.0
        %2747 = vmatprep.subr.mxu0 0.0
        %2748 = vmatpush2.msra.mxu0 0.0
        %2749 = vmatprep.subr.mxu0 0.0
        %2750 = vmatpush2.msra.mxu0 0.0
        %2751 = vmatprep.subr.mxu0 0.0
        %2752 = vmatpush2.msra.mxu0 0.0
        %2753 = vmatprep.subr.mxu0 0.0
        %2754 = vmatpush2.msra.mxu0 0.0
        %2755 = vmatprep.subr.mxu0 0.0
        %2756 = vmatpush2.msra.mxu0 0.0
        %2757 = vmatprep.subr.mxu0 0.0
        %2758 = vmatpush2.msra.mxu0 0.0
        %2759 = vmatprep.subr.mxu0 0.0
        %2760 = vmatpush2.msra.mxu0 0.0
        %2761 = vmatprep.subr.mxu0 0.0
        %2762 = vmatpush2.msra.mxu0 0.0
        %2763 = vmatprep.subr.mxu0 0.0
        %2764 = vmatpush2.msra.mxu0 0.0
        %2765 = vmatprep.subr.mxu0 0.0
        %2766 = vmatpush2.msra.mxu0 0.0
        %2767 = vmatprep.subr.mxu0 0.0
        %2768 = vmatpush2.msra.mxu0 0.0
        %2769 = vmatprep.subr.mxu0 0.0
        %2770 = vmatpush2.msra.mxu0 0.0
        %2771 = vmatprep.subr.mxu0 0.0
        %2772 = vmatpush2.msra.mxu0 0.0
        %2773 = vmatprep.mubr.f32.mxu0 0.0
        %2774 = vmatmul.mubr.f32.gmra.mxu0 %v2707
        %v2775 = vpop.f32.mrf.mxu0
        %v2776 = vadd.f32 %v2703, %v2775
        %v2777 = vpop.f32.mrf.mxu0
        %2778 = vdwg.mxu0
        %v2779 = vadd.f32 %v2604, %v2776
        %v2780 = vld [vmem:[%s16] sm:$0x1]
        %v2781 = vld [vmem:[%s17] sm:$0x1]
        %v2782 = vsel %vm615, %v2779, 0.0
        %2783 = vadd.xlane.f32.xlu0 %v2782
        %v2784 = vpop.xlane.xlu0 %2783
        %v2785 = vmul.f32 %v2784, %v2580
        %v2786 = vsub.f32 %v2779, %v2785
        %v2787 = vmul.f32 %v2786, %v2786
        %v2788 = vsel %vm615, %v2787, 0.0
        %2789 = vadd.xlane.f32.xlu0 %v2788
        %v2790 = vpop.xlane.xlu0 %2789
        %v2791 = vmul.f32 %v2790, %v2580
        %v2792 = vadd.f32 %v2791, 1e-05
        %v2793 = vrsqrt.pop %v2792
        %v2794 = vmul.f32 %v2786, %v2793
        %v2796 = vlaneseq
        %v2797 = vshrl.u32 %v2796, 7
        %v2798 = vsub.s32 0, %v2797
        %v2799 = vrot.slane %v2780, %v2798
        %v2801 = vmul.f32 %v2794, %v2799
        %v2803 = vlaneseq
        %v2804 = vshrl.u32 %v2803, 7
        %v2805 = vsub.s32 0, %v2804
        %v2806 = vrot.slane %v2781, %v2805
        %v2808 = vadd.f32 %v2801, %v2806
        %2809 = vst.msk [vmem:[%s601] sm:$0xff] %vm615, %v2808
        %s2810 = sand.u32 %s444, 1
        %s2811 = scalar_lea.sflag [#allocation4], %s2810
        %s2812 = sand.u32 %s444, 1
        %s2813 = smul.addr %s2812, 8
        %s2814 = scalar_lea.vmem [#allocation3], %s2813
        // Predicated region
        $region93: #{tpu_custom_call.1} parent=91 // pred_check
          %p2815 = pneg %p454
        $region94: #{tpu_custom_call.1} parent=91 // pred_check_branch
          %2817 = sbr.rel (%p2815) target = $region96
        $region95: #{tpu_custom_call.1} parent=91 // pred_region
          %s2819 = ssub.s32 128, 128
          %2820 = vsyncadd %s2811, %s2819
          %s2821 = sadd.s32 %s37, %s36
          %s2822 = smul.addr %s2821, 128
          %s2823 = scalar_lea.hbm %s18, %s2822
          %s2825 = sshll.u32 %s2814, 4
          %s2826 = int_to_ptr.vmem [resolvable:$true] %s2825
          %2828 = dma.vmem_to_hbm [thread:$0]  %s2826, 128, %s2823, %s2811
        $region96: #{tpu_custom_call.1} parent=91 // pred_fallthru
          _
      $region92: #{tpu_custom_call.1} parent=5 // pred_fallthru
        _
      %p2829 = scmp.le.s32.totalorder 2, %s27
      // Predicated region
      $region97: #{tpu_custom_call.1} parent=5 // pred_check
        %p2830 = pneg %p2829
      $region98: #{tpu_custom_call.1} parent=5 // pred_check_branch
        %2832 = sbr.rel (%p2830) target = $region100
      $region99: #{tpu_custom_call.1} parent=5 // pred_region
        %s2833 = ssub.s32 %s27, 2
        // Predicated region
        $region101: #{tpu_custom_call.1} parent=99 // pred_check
          %p2834 = pneg %p460
        $region102: #{tpu_custom_call.1} parent=99 // pred_check_branch
          %2836 = sbr.rel (%p2834) target = $region104
        $region103: #{tpu_custom_call.1} parent=99 // pred_region
          %s2837 = sand.u32 %s445, 1
          %s2838 = scalar_lea.sflag [#allocation4], %s2837
          %s2839 = sand.u32 %s445, 1
          %s2840 = smul.addr %s2839, 8
          %s2841 = scalar_lea.vmem [#allocation3], %s2840
          %2842 = dma.done %s2838, 128
        $region104: #{tpu_custom_call.1} parent=99 // pred_fallthru
          _
      $region100: #{tpu_custom_call.1} parent=5 // pred_fallthru
        _
    $region6: #{tpu_custom_call.1} parent=1 // loop_footer
      %s31 = sadd.s32 1, %s27
    $region7: #{tpu_custom_call.1} parent=1 // loop_footer_branch
      %26 = sbr.rel target = $region3
    $region8: #{tpu_custom_call.1} parent=1 // loop_exit
      _
    %2843 = vsyncpa [#allocation4], 1
    %s2844 = scalar_lea.sflag [#allocation4], 1
    %2845 = vsyncpa %s2844, 1

</llo_original>
